<compile_context>
chip_gen: v6e
topology: v6e:2x2x1
jax: 0.10.0
libtpu: 0.0.40
codegen_flags: <defaults>
</compile_context>

<pallas_src>
import jax
import jax.numpy as jnp
from jax import lax
from jax.experimental import pallas as pl
from jax.experimental.pallas import tpu as pltpu


LANE = 128  # TPU lane width


# ----------------------------------------------------------------------------
# Pallas kernel: one image (batch element) per grid step.
# Each 3x3 conv = 3 MXU matmuls (one per kh) with the kw taps folded into the
# contraction dim (K = 3*Cp), bf16 operands, f32 accumulation.
# ----------------------------------------------------------------------------
def basic_block_kernel(x_ref, w1_ref, s1_ref, b1_ref,
                       w2_ref, s2_ref, b2_ref, out_ref):
    _, H, W, C = out_ref.shape          # C == Cp (padded, multiple of 128)

    def pad_hw(img):
        # zero-pad (H, W, C) -> (H+2, W+2, C) as a value (no scratch round-trip)
        zrow = jnp.zeros((1, W, C), img.dtype)
        zcol = jnp.zeros((H + 2, 1, C), img.dtype)
        t = jnp.concatenate([zrow, img, zrow], axis=0)         # (H+2, W,   C)
        return jnp.concatenate([zcol, t, zcol], axis=1)        # (H+2, W+2, C)

    def conv3x3(xp, w_ref):
        # xp: (H+2, W+2, C) bf16 (zero-padded); w_ref: (3, 3*C, C) bf16
        acc = jnp.zeros((H * W, C), jnp.float32)
        for kh in range(3):                                    # static unroll
            rows = xp[kh:kh + H]                               # (H, W+2, C)
            patch = jnp.concatenate(
                [rows[:, 0:W], rows[:, 1:W + 1], rows[:, 2:W + 2]],
                axis=-1).reshape(H * W, 3 * C)                 # (H*W, 3C) bf16
            acc = acc + jnp.dot(patch, w_ref[kh],
                                preferred_element_type=jnp.float32)
        return acc                                             # (H*W, C) f32

    x = x_ref[0]                                               # (H, W, C) f32

    # ---- conv1 + BN1 + ReLU (BN/ReLU in f32) ----
    out1 = conv3x3(pad_hw(x.astype(jnp.bfloat16)), w1_ref)
    out1 = jnp.maximum(out1 * s1_ref[...] + b1_ref[...], 0.0)
    out1 = out1.reshape(H, W, C).astype(jnp.bfloat16)

    # ---- conv2 + BN2 ----
    out2 = conv3x3(pad_hw(out1), w2_ref) * s2_ref[...] + b2_ref[...]

    # ---- residual add (exact f32, aligned unpadded block) + final ReLU ----
    out = jnp.maximum(out2 + x.reshape(H * W, C), 0.0)
    out_ref[0] = out.reshape(H, W, C).astype(out_ref.dtype)


# ----------------------------------------------------------------------------
# Wrapper: NCHW in / NCHW out.  Conv weights in HWIO (3, 3, Cin, Cout).
# ----------------------------------------------------------------------------
@jax.jit
def basic_block_forward(x_nchw, w1, scale1, bias1, w2, scale2, bias2):
    N, C, H, W = x_nchw.shape
    Cout = w1.shape[-1]
    assert Cout == C, "identity residual requires inplanes == planes"
    Cp = ((C + LANE - 1) // LANE) * LANE                        # lane-dense pad

    # NCHW -> NHWC, channel-pad to Cp.  No spatial pad here (done in-kernel).
    x = jnp.transpose(x_nchw, (0, 2, 3, 1)).astype(jnp.float32)
    x = jnp.pad(x, ((0, 0), (0, 0), (0, 0), (0, Cp - C)))       # (N, H, W, Cp)

    def fold_w(w):
        # (3, 3, Cin, Cout) -> (3, 3*Cp, Cp) bf16, kw folded into contraction,
        # padded channels contribute / produce exact zeros.
        wp = jnp.zeros((3, 3, Cp, Cp), jnp.float32)
        wp = wp.at[:, :, :C, :Cout].set(w.astype(jnp.float32))
        wf = jnp.concatenate([wp[:, 0], wp[:, 1], wp[:, 2]], axis=1)
        return wf.astype(jnp.bfloat16)

    def pad_vec(v):
        return jnp.pad(v.astype(jnp.float32), (0, Cp - Cout)).reshape(1, Cp)

    w1f, w2f = fold_w(w1), fold_w(w2)
    s1, b1 = pad_vec(scale1), pad_vec(bias1)
    s2, b2 = pad_vec(scale2), pad_vec(bias2)

    const = lambda shape: pl.BlockSpec(shape, lambda n: (0,) * len(shape))

    out_nhwc = pl.pallas_call(
        basic_block_kernel,
        out_shape=jax.ShapeDtypeStruct((N, H, W, Cp), jnp.float32),
        grid=(N,),
        in_specs=[
            pl.BlockSpec((1, H, W, Cp), lambda n: (n, 0, 0, 0)),  # x (f32, unpadded)
            const((3, 3 * Cp, Cp)),   # conv1 weight (kw-folded, bf16)
            const((1, Cp)),           # bn1 scale
            const((1, Cp)),           # bn1 bias
            const((3, 3 * Cp, Cp)),   # conv2 weight (kw-folded, bf16)
            const((1, Cp)),           # bn2 scale
            const((1, Cp)),           # bn2 bias
        ],
        out_specs=pl.BlockSpec((1, H, W, Cp), lambda n: (n, 0, 0, 0)),
        compiler_params=pltpu.CompilerParams(
            dimension_semantics=("parallel",)),                 # 2 TCs on v7x
    )(x, w1f, s1, b1, w2f, s2, b2)

    out_nhwc = out_nhwc[..., :Cout]                             # strip channel pad
    return jnp.transpose(out_nhwc, (0, 3, 1, 2))                # back to NCHW


# ----------------------------------------------------------------------------
# Pure-JAX reference (lax conv, f32) for correctness checking.
# ----------------------------------------------------------------------------
def basic_block_reference(x_nchw, w1, s1, b1, w2, s2, b2):
    dn = ("NHWC", "HWIO", "NHWC")
    x = jnp.transpose(x_nchw, (0, 2, 3, 1)).astype(jnp.float32)
    y = lax.conv_general_dilated(x, w1, (1, 1), ((1, 1), (1, 1)),
                                 dimension_numbers=dn)
    y = jnp.maximum(y * s1 + b1, 0.0)
    y2 = lax.conv_general_dilated(y, w2, (1, 1), ((1, 1), (1, 1)),
                                  dimension_numbers=dn)
    y2 = y2 * s2 + b2
    out = jnp.maximum(y2 + x, 0.0)
    return jnp.transpose(out, (0, 3, 1, 2))


def fold_bn(gamma, beta, mean, var, eps=1e-5):
    scale = gamma / jnp.sqrt(var + eps)
    bias = beta - mean * scale
    return scale, bias


if __name__ == "__main__":
    key = jax.random.PRNGKey(0)
    ks = jax.random.split(key, 12)

    N, C, H, W = 2, 4, 16, 16          # inplanes = planes = 4, stride = 1
    x = jax.random.normal(ks[0], (N, C, H, W), jnp.float32)

    # conv weights in HWIO = (3, 3, Cin, Cout)
    w1 = jax.random.normal(ks[1], (3, 3, C, C), jnp.float32) * 0.1
    w2 = jax.random.normal(ks[2], (3, 3, C, C), jnp.float32) * 0.1

    # BatchNorm parameters / running stats (eval mode), folded to scale/bias.
    g1 = 1.0 + 0.1 * jax.random.normal(ks[3], (C,), jnp.float32)
    be1 = 0.1 * jax.random.normal(ks[4], (C,), jnp.float32)
    m1 = 0.1 * jax.random.normal(ks[5], (C,), jnp.float32)
    v1 = 0.5 + jax.random.uniform(ks[6], (C,), jnp.float32)
    g2 = 1.0 + 0.1 * jax.random.normal(ks[7], (C,), jnp.float32)
    be2 = 0.1 * jax.random.normal(ks[8], (C,), jnp.float32)
    m2 = 0.1 * jax.random.normal(ks[9], (C,), jnp.float32)
    v2 = 0.5 + jax.random.uniform(ks[10], (C,), jnp.float32)

    s1, b1 = fold_bn(g1, be1, m1, v1)
    s2, b2 = fold_bn(g2, be2, m2, v2)

    out = basic_block_forward(x, w1, s1, b1, w2, s2, b2)
    out = jax.block_until_ready(out)

    ref = basic_block_reference(x, w1, s1, b1, w2, s2, b2)
    assert out.shape == (N, C, H, W)
    # bf16 MXU operands (f32 accumulation) -> loosened tolerance vs f32 ref.
    max_err = float(jnp.max(jnp.abs(out - ref)))
    assert jnp.allclose(out, ref, atol=5e-2, rtol=5e-2), (
        "mismatch: max abs err = %f" % max_err)

    print("KERNEL_OK")
</pallas_src>

<mosaic_0001>
module attributes {stable_mosaic.version = 11 : i64} {
  func.func @basic_block_kernel(%arg0: i32, %arg1: memref<1x16x16x128xf32, #tpu.memory_space<vmem>>, %arg2: memref<3x384x128xbf16, #tpu.memory_space<vmem>>, %arg3: memref<1x128xf32, #tpu.memory_space<vmem>>, %arg4: memref<1x128xf32, #tpu.memory_space<vmem>>, %arg5: memref<3x384x128xbf16, #tpu.memory_space<vmem>>, %arg6: memref<1x128xf32, #tpu.memory_space<vmem>>, %arg7: memref<1x128xf32, #tpu.memory_space<vmem>>, %arg8: memref<1x16x16x128xf32, #tpu.memory_space<vmem>>) attributes {dimension_semantics = [#tpu.dimension_semantics<parallel>], iteration_bounds = array<i64: 2>, scalar_prefetch = 0 : i64, scratch_operands = 0 : i64, tpu.core_type = #tpu.core_type<tc>, window_params = [{transform_indices = @transform_0, window_bounds = array<i64: 1, 16, 16, 128>}, {pipeline_mode = #tpu.pipeline_mode<synchronous>, transform_indices = @transform_1, window_bounds = array<i64: 3, 384, 128>}, {pipeline_mode = #tpu.pipeline_mode<synchronous>, transform_indices = @transform_2, window_bounds = array<i64: 1, 128>}, {pipeline_mode = #tpu.pipeline_mode<synchronous>, transform_indices = @transform_3, window_bounds = array<i64: 1, 128>}, {pipeline_mode = #tpu.pipeline_mode<synchronous>, transform_indices = @transform_4, window_bounds = array<i64: 3, 384, 128>}, {pipeline_mode = #tpu.pipeline_mode<synchronous>, transform_indices = @transform_5, window_bounds = array<i64: 1, 128>}, {pipeline_mode = #tpu.pipeline_mode<synchronous>, transform_indices = @transform_6, window_bounds = array<i64: 1, 128>}, {transform_indices = @transform_7, window_bounds = array<i64: 1, 16, 16, 128>}]} {
    %c0 = arith.constant 0 : index
    %c0_0 = arith.constant 0 : index
    %c0_1 = arith.constant 0 : index
    %c0_2 = arith.constant 0 : index
    %0 = vector.load %arg1[%c0, %c0_0, %c0_1, %c0_2] : memref<1x16x16x128xf32, #tpu.memory_space<vmem>>, vector<1x16x16x128xf32>
    %1 = vector.shape_cast %0 : vector<1x16x16x128xf32> to vector<16x16x128xf32>
    %2 = arith.truncf %1 : vector<16x16x128xf32> to vector<16x16x128xbf16>
    %cst = arith.constant 0.000000e+00 : bf16
    %3 = vector.broadcast %cst : bf16 to vector<1x16x128xbf16>
    %cst_3 = arith.constant 0.000000e+00 : bf16
    %4 = vector.broadcast %cst_3 : bf16 to vector<18x1x128xbf16>
    %5 = tpu.concatenate %3, %2, %3 in 0 : vector<1x16x128xbf16>, vector<16x16x128xbf16>, vector<1x16x128xbf16> -> vector<18x16x128xbf16>
    %6 = tpu.concatenate %4, %5, %4 in 1 : vector<18x1x128xbf16>, vector<18x16x128xbf16>, vector<18x1x128xbf16> -> vector<18x18x128xbf16>
    %cst_4 = arith.constant 0.000000e+00 : f32
    %7 = vector.broadcast %cst_4 : f32 to vector<256x128xf32>
    %8 = vector.extract_strided_slice %6 {offsets = [0, 0, 0], sizes = [16, 18, 128], strides = [1, 1, 1]} : vector<18x18x128xbf16> to vector<16x18x128xbf16>
    %9 = vector.extract_strided_slice %8 {offsets = [0, 0, 0], sizes = [16, 16, 128], strides = [1, 1, 1]} : vector<16x18x128xbf16> to vector<16x16x128xbf16>
    %10 = vector.extract_strided_slice %8 {offsets = [0, 1, 0], sizes = [16, 16, 128], strides = [1, 1, 1]} : vector<16x18x128xbf16> to vector<16x16x128xbf16>
    %11 = vector.extract_strided_slice %8 {offsets = [0, 2, 0], sizes = [16, 16, 128], strides = [1, 1, 1]} : vector<16x18x128xbf16> to vector<16x16x128xbf16>
    %12 = tpu.concatenate %9, %10, %11 in 2 : vector<16x16x128xbf16>, vector<16x16x128xbf16>, vector<16x16x128xbf16> -> vector<16x16x384xbf16>
    %13 = vector.shape_cast %12 : vector<16x16x384xbf16> to vector<256x384xbf16>
    %c0_5 = arith.constant 0 : index
    %c0_6 = arith.constant 0 : index
    %c0_7 = arith.constant 0 : index
    %14 = vector.load %arg2[%c0_5, %c0_6, %c0_7] : memref<3x384x128xbf16, #tpu.memory_space<vmem>>, vector<1x384x128xbf16>
    %15 = vector.shape_cast %14 : vector<1x384x128xbf16> to vector<384x128xbf16>
    %cst_8 = arith.constant dense<0.000000e+00> : vector<256x128xf32>
    %16 = tpu.matmul %13, %15, %cst_8 {dimension_numbers = #tpu.dot_dimension_numbers<[1], [0], [0], [1], [0, 0, 1, 1], [], []>} : vector<256x384xbf16>, vector<384x128xbf16>, vector<256x128xf32> -> vector<256x128xf32>
    %17 = arith.addf %7, %16 : vector<256x128xf32>
    %18 = vector.extract_strided_slice %6 {offsets = [1, 0, 0], sizes = [16, 18, 128], strides = [1, 1, 1]} : vector<18x18x128xbf16> to vector<16x18x128xbf16>
    %19 = vector.extract_strided_slice %18 {offsets = [0, 0, 0], sizes = [16, 16, 128], strides = [1, 1, 1]} : vector<16x18x128xbf16> to vector<16x16x128xbf16>
    %20 = vector.extract_strided_slice %18 {offsets = [0, 1, 0], sizes = [16, 16, 128], strides = [1, 1, 1]} : vector<16x18x128xbf16> to vector<16x16x128xbf16>
    %21 = vector.extract_strided_slice %18 {offsets = [0, 2, 0], sizes = [16, 16, 128], strides = [1, 1, 1]} : vector<16x18x128xbf16> to vector<16x16x128xbf16>
    %22 = tpu.concatenate %19, %20, %21 in 2 : vector<16x16x128xbf16>, vector<16x16x128xbf16>, vector<16x16x128xbf16> -> vector<16x16x384xbf16>
    %23 = vector.shape_cast %22 : vector<16x16x384xbf16> to vector<256x384xbf16>
    %c1 = arith.constant 1 : index
    %c0_9 = arith.constant 0 : index
    %c0_10 = arith.constant 0 : index
    %24 = vector.load %arg2[%c1, %c0_9, %c0_10] : memref<3x384x128xbf16, #tpu.memory_space<vmem>>, vector<1x384x128xbf16>
    %25 = vector.shape_cast %24 : vector<1x384x128xbf16> to vector<384x128xbf16>
    %cst_11 = arith.constant dense<0.000000e+00> : vector<256x128xf32>
    %26 = tpu.matmul %23, %25, %cst_11 {dimension_numbers = #tpu.dot_dimension_numbers<[1], [0], [0], [1], [0, 0, 1, 1], [], []>} : vector<256x384xbf16>, vector<384x128xbf16>, vector<256x128xf32> -> vector<256x128xf32>
    %27 = arith.addf %17, %26 : vector<256x128xf32>
    %28 = vector.extract_strided_slice %6 {offsets = [2, 0, 0], sizes = [16, 18, 128], strides = [1, 1, 1]} : vector<18x18x128xbf16> to vector<16x18x128xbf16>
    %29 = vector.extract_strided_slice %28 {offsets = [0, 0, 0], sizes = [16, 16, 128], strides = [1, 1, 1]} : vector<16x18x128xbf16> to vector<16x16x128xbf16>
    %30 = vector.extract_strided_slice %28 {offsets = [0, 1, 0], sizes = [16, 16, 128], strides = [1, 1, 1]} : vector<16x18x128xbf16> to vector<16x16x128xbf16>
    %31 = vector.extract_strided_slice %28 {offsets = [0, 2, 0], sizes = [16, 16, 128], strides = [1, 1, 1]} : vector<16x18x128xbf16> to vector<16x16x128xbf16>
    %32 = tpu.concatenate %29, %30, %31 in 2 : vector<16x16x128xbf16>, vector<16x16x128xbf16>, vector<16x16x128xbf16> -> vector<16x16x384xbf16>
    %33 = vector.shape_cast %32 : vector<16x16x384xbf16> to vector<256x384xbf16>
    %c2 = arith.constant 2 : index
    %c0_12 = arith.constant 0 : index
    %c0_13 = arith.constant 0 : index
    %34 = vector.load %arg2[%c2, %c0_12, %c0_13] : memref<3x384x128xbf16, #tpu.memory_space<vmem>>, vector<1x384x128xbf16>
    %35 = vector.shape_cast %34 : vector<1x384x128xbf16> to vector<384x128xbf16>
    %cst_14 = arith.constant dense<0.000000e+00> : vector<256x128xf32>
    %36 = tpu.matmul %33, %35, %cst_14 {dimension_numbers = #tpu.dot_dimension_numbers<[1], [0], [0], [1], [0, 0, 1, 1], [], []>} : vector<256x384xbf16>, vector<384x128xbf16>, vector<256x128xf32> -> vector<256x128xf32>
    %37 = arith.addf %27, %36 : vector<256x128xf32>
    %c0_15 = arith.constant 0 : index
    %c0_16 = arith.constant 0 : index
    %38 = vector.load %arg3[%c0_15, %c0_16] : memref<1x128xf32, #tpu.memory_space<vmem>>, vector<1x128xf32>
    %39 = vector.broadcast %38 : vector<1x128xf32> to vector<256x128xf32>
    %40 = arith.mulf %37, %39 : vector<256x128xf32>
    %c0_17 = arith.constant 0 : index
    %c0_18 = arith.constant 0 : index
    %41 = vector.load %arg4[%c0_17, %c0_18] : memref<1x128xf32, #tpu.memory_space<vmem>>, vector<1x128xf32>
    %42 = vector.broadcast %41 : vector<1x128xf32> to vector<256x128xf32>
    %43 = arith.addf %40, %42 : vector<256x128xf32>
    %cst_19 = arith.constant 0.000000e+00 : f32
    %44 = vector.broadcast %cst_19 : f32 to vector<256x128xf32>
    %45 = arith.maximumf %43, %44 : vector<256x128xf32>
    %46 = vector.shape_cast %45 : vector<256x128xf32> to vector<16x16x128xf32>
    %47 = arith.truncf %46 : vector<16x16x128xf32> to vector<16x16x128xbf16>
    %cst_20 = arith.constant 0.000000e+00 : bf16
    %48 = vector.broadcast %cst_20 : bf16 to vector<1x16x128xbf16>
    %cst_21 = arith.constant 0.000000e+00 : bf16
    %49 = vector.broadcast %cst_21 : bf16 to vector<18x1x128xbf16>
    %50 = tpu.concatenate %48, %47, %48 in 0 : vector<1x16x128xbf16>, vector<16x16x128xbf16>, vector<1x16x128xbf16> -> vector<18x16x128xbf16>
    %51 = tpu.concatenate %49, %50, %49 in 1 : vector<18x1x128xbf16>, vector<18x16x128xbf16>, vector<18x1x128xbf16> -> vector<18x18x128xbf16>
    %cst_22 = arith.constant 0.000000e+00 : f32
    %52 = vector.broadcast %cst_22 : f32 to vector<256x128xf32>
    %53 = vector.extract_strided_slice %51 {offsets = [0, 0, 0], sizes = [16, 18, 128], strides = [1, 1, 1]} : vector<18x18x128xbf16> to vector<16x18x128xbf16>
    %54 = vector.extract_strided_slice %53 {offsets = [0, 0, 0], sizes = [16, 16, 128], strides = [1, 1, 1]} : vector<16x18x128xbf16> to vector<16x16x128xbf16>
    %55 = vector.extract_strided_slice %53 {offsets = [0, 1, 0], sizes = [16, 16, 128], strides = [1, 1, 1]} : vector<16x18x128xbf16> to vector<16x16x128xbf16>
    %56 = vector.extract_strided_slice %53 {offsets = [0, 2, 0], sizes = [16, 16, 128], strides = [1, 1, 1]} : vector<16x18x128xbf16> to vector<16x16x128xbf16>
    %57 = tpu.concatenate %54, %55, %56 in 2 : vector<16x16x128xbf16>, vector<16x16x128xbf16>, vector<16x16x128xbf16> -> vector<16x16x384xbf16>
    %58 = vector.shape_cast %57 : vector<16x16x384xbf16> to vector<256x384xbf16>
    %c0_23 = arith.constant 0 : index
    %c0_24 = arith.constant 0 : index
    %c0_25 = arith.constant 0 : index
    %59 = vector.load %arg5[%c0_23, %c0_24, %c0_25] : memref<3x384x128xbf16, #tpu.memory_space<vmem>>, vector<1x384x128xbf16>
    %60 = vector.shape_cast %59 : vector<1x384x128xbf16> to vector<384x128xbf16>
    %cst_26 = arith.constant dense<0.000000e+00> : vector<256x128xf32>
    %61 = tpu.matmul %58, %60, %cst_26 {dimension_numbers = #tpu.dot_dimension_numbers<[1], [0], [0], [1], [0, 0, 1, 1], [], []>} : vector<256x384xbf16>, vector<384x128xbf16>, vector<256x128xf32> -> vector<256x128xf32>
    %62 = arith.addf %52, %61 : vector<256x128xf32>
    %63 = vector.extract_strided_slice %51 {offsets = [1, 0, 0], sizes = [16, 18, 128], strides = [1, 1, 1]} : vector<18x18x128xbf16> to vector<16x18x128xbf16>
    %64 = vector.extract_strided_slice %63 {offsets = [0, 0, 0], sizes = [16, 16, 128], strides = [1, 1, 1]} : vector<16x18x128xbf16> to vector<16x16x128xbf16>
    %65 = vector.extract_strided_slice %63 {offsets = [0, 1, 0], sizes = [16, 16, 128], strides = [1, 1, 1]} : vector<16x18x128xbf16> to vector<16x16x128xbf16>
    %66 = vector.extract_strided_slice %63 {offsets = [0, 2, 0], sizes = [16, 16, 128], strides = [1, 1, 1]} : vector<16x18x128xbf16> to vector<16x16x128xbf16>
    %67 = tpu.concatenate %64, %65, %66 in 2 : vector<16x16x128xbf16>, vector<16x16x128xbf16>, vector<16x16x128xbf16> -> vector<16x16x384xbf16>
    %68 = vector.shape_cast %67 : vector<16x16x384xbf16> to vector<256x384xbf16>
    %c1_27 = arith.constant 1 : index
    %c0_28 = arith.constant 0 : index
    %c0_29 = arith.constant 0 : index
    %69 = vector.load %arg5[%c1_27, %c0_28, %c0_29] : memref<3x384x128xbf16, #tpu.memory_space<vmem>>, vector<1x384x128xbf16>
    %70 = vector.shape_cast %69 : vector<1x384x128xbf16> to vector<384x128xbf16>
    %cst_30 = arith.constant dense<0.000000e+00> : vector<256x128xf32>
    %71 = tpu.matmul %68, %70, %cst_30 {dimension_numbers = #tpu.dot_dimension_numbers<[1], [0], [0], [1], [0, 0, 1, 1], [], []>} : vector<256x384xbf16>, vector<384x128xbf16>, vector<256x128xf32> -> vector<256x128xf32>
    %72 = arith.addf %62, %71 : vector<256x128xf32>
    %73 = vector.extract_strided_slice %51 {offsets = [2, 0, 0], sizes = [16, 18, 128], strides = [1, 1, 1]} : vector<18x18x128xbf16> to vector<16x18x128xbf16>
    %74 = vector.extract_strided_slice %73 {offsets = [0, 0, 0], sizes = [16, 16, 128], strides = [1, 1, 1]} : vector<16x18x128xbf16> to vector<16x16x128xbf16>
    %75 = vector.extract_strided_slice %73 {offsets = [0, 1, 0], sizes = [16, 16, 128], strides = [1, 1, 1]} : vector<16x18x128xbf16> to vector<16x16x128xbf16>
    %76 = vector.extract_strided_slice %73 {offsets = [0, 2, 0], sizes = [16, 16, 128], strides = [1, 1, 1]} : vector<16x18x128xbf16> to vector<16x16x128xbf16>
    %77 = tpu.concatenate %74, %75, %76 in 2 : vector<16x16x128xbf16>, vector<16x16x128xbf16>, vector<16x16x128xbf16> -> vector<16x16x384xbf16>
    %78 = vector.shape_cast %77 : vector<16x16x384xbf16> to vector<256x384xbf16>
    %c2_31 = arith.constant 2 : index
    %c0_32 = arith.constant 0 : index
    %c0_33 = arith.constant 0 : index
    %79 = vector.load %arg5[%c2_31, %c0_32, %c0_33] : memref<3x384x128xbf16, #tpu.memory_space<vmem>>, vector<1x384x128xbf16>
    %80 = vector.shape_cast %79 : vector<1x384x128xbf16> to vector<384x128xbf16>
    %cst_34 = arith.constant dense<0.000000e+00> : vector<256x128xf32>
    %81 = tpu.matmul %78, %80, %cst_34 {dimension_numbers = #tpu.dot_dimension_numbers<[1], [0], [0], [1], [0, 0, 1, 1], [], []>} : vector<256x384xbf16>, vector<384x128xbf16>, vector<256x128xf32> -> vector<256x128xf32>
    %82 = arith.addf %72, %81 : vector<256x128xf32>
    %c0_35 = arith.constant 0 : index
    %c0_36 = arith.constant 0 : index
    %83 = vector.load %arg6[%c0_35, %c0_36] : memref<1x128xf32, #tpu.memory_space<vmem>>, vector<1x128xf32>
    %84 = vector.broadcast %83 : vector<1x128xf32> to vector<256x128xf32>
    %85 = arith.mulf %82, %84 : vector<256x128xf32>
    %c0_37 = arith.constant 0 : index
    %c0_38 = arith.constant 0 : index
    %86 = vector.load %arg7[%c0_37, %c0_38] : memref<1x128xf32, #tpu.memory_space<vmem>>, vector<1x128xf32>
    %87 = vector.broadcast %86 : vector<1x128xf32> to vector<256x128xf32>
    %88 = arith.addf %85, %87 : vector<256x128xf32>
    %89 = vector.shape_cast %1 : vector<16x16x128xf32> to vector<256x128xf32>
    %90 = arith.addf %88, %89 : vector<256x128xf32>
    %cst_39 = arith.constant 0.000000e+00 : f32
    %91 = vector.broadcast %cst_39 : f32 to vector<256x128xf32>
    %92 = arith.maximumf %90, %91 : vector<256x128xf32>
    %93 = vector.shape_cast %92 : vector<256x128xf32> to vector<16x16x128xf32>
    %c0_40 = arith.constant 0 : index
    %c0_41 = arith.constant 0 : index
    %c0_42 = arith.constant 0 : index
    %c0_43 = arith.constant 0 : index
    %94 = vector.load %arg8[%c0_40, %c0_41, %c0_42, %c0_43] : memref<1x16x16x128xf32, #tpu.memory_space<vmem>>, vector<1x16x16x128xf32>
    %95 = vector.shape_cast %94 : vector<1x16x16x128xf32> to vector<16x16x128xf32>
    %96 = vector.shape_cast %93 : vector<16x16x128xf32> to vector<1x16x16x128xf32>
    tpu.vector_store %arg8[%c0_40, %c0_41, %c0_42, %c0_43], %96 {strides = array<i32>} : memref<1x16x16x128xf32, #tpu.memory_space<vmem>>, vector<1x16x16x128xf32>,
    return
  }
  func.func @transform_0(%arg0: i32) -> (i32, i32, i32, i32) {
    %c0_i32 = arith.constant 0 : i32
    %c0_i32_0 = arith.constant 0 : i32
    %c0_i32_1 = arith.constant 0 : i32
    %c0_i32_2 = arith.constant 0 : i32
    return %arg0, %c0_i32, %c0_i32_0, %c0_i32_1 : i32, i32, i32, i32
  }
  func.func @transform_1(%arg0: i32) -> (i32, i32, i32) {
    %c0_i32 = arith.constant 0 : i32
    %c0_i32_0 = arith.constant 0 : i32
    %c0_i32_1 = arith.constant 0 : i32
    %c0_i32_2 = arith.constant 0 : i32
    return %c0_i32, %c0_i32_0, %c0_i32_1 : i32, i32, i32
  }
  func.func @transform_2(%arg0: i32) -> (i32, i32) {
    %c0_i32 = arith.constant 0 : i32
    %c0_i32_0 = arith.constant 0 : i32
    %c0_i32_1 = arith.constant 0 : i32
    return %c0_i32, %c0_i32_0 : i32, i32
  }
  func.func @transform_3(%arg0: i32) -> (i32, i32) {
    %c0_i32 = arith.constant 0 : i32
    %c0_i32_0 = arith.constant 0 : i32
    %c0_i32_1 = arith.constant 0 : i32
    return %c0_i32, %c0_i32_0 : i32, i32
  }
  func.func @transform_4(%arg0: i32) -> (i32, i32, i32) {
    %c0_i32 = arith.constant 0 : i32
    %c0_i32_0 = arith.constant 0 : i32
    %c0_i32_1 = arith.constant 0 : i32
    %c0_i32_2 = arith.constant 0 : i32
    return %c0_i32, %c0_i32_0, %c0_i32_1 : i32, i32, i32
  }
  func.func @transform_5(%arg0: i32) -> (i32, i32) {
    %c0_i32 = arith.constant 0 : i32
    %c0_i32_0 = arith.constant 0 : i32
    %c0_i32_1 = arith.constant 0 : i32
    return %c0_i32, %c0_i32_0 : i32, i32
  }
  func.func @transform_6(%arg0: i32) -> (i32, i32) {
    %c0_i32 = arith.constant 0 : i32
    %c0_i32_0 = arith.constant 0 : i32
    %c0_i32_1 = arith.constant 0 : i32
    return %c0_i32, %c0_i32_0 : i32, i32
  }
  func.func @transform_7(%arg0: i32) -> (i32, i32, i32, i32) {
    %c0_i32 = arith.constant 0 : i32
    %c0_i32_0 = arith.constant 0 : i32
    %c0_i32_1 = arith.constant 0 : i32
    %c0_i32_2 = arith.constant 0 : i32
    return %arg0, %c0_i32, %c0_i32_0, %c0_i32_1 : i32, i32, i32, i32
  }
}

</mosaic_0001>

<llo_original>
// kernel: basic_block_forward.1
$region0: #{basic_block_forward.1}
  #allocation0 [shape = 'u32[]', space=smem, size = 0x4, offset = 0x4, fixed_abs, tag = 'smem constant byte address 0x4 - core index']
  #allocation1 [shape = 'u32[144,128]{1,0:T(1,128)}', space=vmem, size = 0x12000, scoped, tag = 'internal scratch']
  %s0 = inlined_call_operand.vmem [shape: f32[2,16,16,128], index: 0, kind: input, shape index: {}]
  %s1 = inlined_call_operand.vmem [shape: bf16[3,384,128], index: 1, kind: input, shape index: {}]
  %s2 = inlined_call_operand.vmem [shape: f32[1,128], index: 2, kind: input, shape index: {}]
  %s3 = inlined_call_operand.vmem [shape: f32[1,128], index: 3, kind: input, shape index: {}]
  %s4 = inlined_call_operand.vmem [shape: bf16[3,384,128], index: 4, kind: input, shape index: {}]
  %s5 = inlined_call_operand.vmem [shape: f32[1,128], index: 5, kind: input, shape index: {}]
  %s6 = inlined_call_operand.vmem [shape: f32[1,128], index: 6, kind: input, shape index: {}]
  %s7 = inlined_call_operand.vmem [shape: f32[2,16,16,128], index: 7, kind: output, shape index: {}]
  %s8 = sld [smem:[#allocation0]]
  $region61: #{basic_block_forward.1} parent=0
    _
  %s10 = ssub.s32 1, %s8
  %s11 = scalar_select 0, %s10, %s8
  loop: start=0, step=1, limit=4
  $region2: #{basic_block_forward.1} parent=0 // loop_pre_header
    _
  $region3: #{basic_block_forward.1} parent=0 // loop_header
    %s13 = sphi 0, %s17
    %p14 = scmp.ge.s32.totalorder %s13, 4
    %s23 = sphi 0, %s25
    %s26 = sphi 0, %s23
    %s27 = sphi 0, %s26
    %s43 = sphi 0, %s27
    %s47 = sphi 0, %s47
    %s49 = sphi 0, %s47
    %s50 = sphi 0, %s49
    %s64 = sphi 0, %s50
    %s68 = sphi 0, %s68
    %s70 = sphi 0, %s68
    %s71 = sphi 0, %s70
    %s85 = sphi 0, %s71
    %s89 = sphi 0, %s89
    %s91 = sphi 0, %s89
    %s92 = sphi 0, %s91
    %s106 = sphi 0, %s92
    %s110 = sphi 0, %s110
    %s112 = sphi 0, %s110
    %s113 = sphi 0, %s112
    %s127 = sphi 0, %s113
    %s131 = sphi 0, %s131
    %s133 = sphi 0, %s131
    %s134 = sphi 0, %s133
    %s148 = sphi 0, %s134
    %s152 = sphi 0, %s152
    %s154 = sphi 0, %s152
    %s155 = sphi 0, %s154
    %s169 = sphi 0, %s155
    %s175 = sphi 0, %s177
    %s178 = sphi 0, %s175
    %s179 = sphi 0, %s178
    %s195 = sphi 0, %s179
  $region4: #{basic_block_forward.1} parent=0 // loop_header_branch
    %16 = sbr.rel (%p14) target = $region8
  $region5: #{basic_block_forward.1} parent=0 // loop_body
    %s18 = ssub.s32 %s13, 1
    %s19 = ssub.s32 %s13, 2
    %s20 = sadd.s32 %s13, 1
    %s21 = ssub.s32 %s13, %s20
    %p22 = scmp.eq.s32.totalorder %s21, 0
    %s24 = sadd.s32 %s23, 1
    %s25 = scalar_select %p22, %s23, %s24
    %p28 = pneg %p22
    %p29 = scmp.eq.s32.totalorder %s13, 1
    %p30 = por %p28, %p29
    %p31 = scmp.ne.s32.totalorder %s23, %s26
    %p32 = scmp.eq.s32.totalorder %s13, 0
    %p33 = por %p31, %p32
    %p34 = scmp.ne.s32.totalorder %s23, %s26
    %p35 = scmp.eq.s32.totalorder %s18, 1
    %p36 = por %p34, %p35
    %p37 = scmp.ne.s32.totalorder %s26, %s27
    %p38 = scmp.eq.s32.totalorder %s18, 0
    %p39 = por %p37, %p38
    %p40 = scmp.ne.s32.totalorder %s26, %s27
    %p41 = scmp.eq.s32.totalorder %s19, 1
    %p42 = por %p40, %p41
    %p44 = scmp.ne.s32.totalorder %s27, %s43
    %p45 = scmp.eq.s32.totalorder %s19, 0
    %p46 = por %p44, %p45
    %s48 = sadd.s32 %s47, 1
    %p51 = scmp.eq.s32.totalorder %s13, 1
    %p52 = scmp.ne.s32.totalorder %s47, %s49
    %p53 = scmp.eq.s32.totalorder %s13, 0
    %p54 = por %p52, %p53
    %p55 = scmp.ne.s32.totalorder %s47, %s49
    %p56 = scmp.eq.s32.totalorder %s18, 1
    %p57 = por %p55, %p56
    %p58 = scmp.ne.s32.totalorder %s49, %s50
    %p59 = scmp.eq.s32.totalorder %s18, 0
    %p60 = por %p58, %p59
    %p61 = scmp.ne.s32.totalorder %s49, %s50
    %p62 = scmp.eq.s32.totalorder %s19, 1
    %p63 = por %p61, %p62
    %p65 = scmp.ne.s32.totalorder %s50, %s64
    %p66 = scmp.eq.s32.totalorder %s19, 0
    %p67 = por %p65, %p66
    %s69 = sadd.s32 %s68, 1
    %p72 = scmp.eq.s32.totalorder %s13, 1
    %p73 = scmp.ne.s32.totalorder %s68, %s70
    %p74 = scmp.eq.s32.totalorder %s13, 0
    %p75 = por %p73, %p74
    %p76 = scmp.ne.s32.totalorder %s68, %s70
    %p77 = scmp.eq.s32.totalorder %s18, 1
    %p78 = por %p76, %p77
    %p79 = scmp.ne.s32.totalorder %s70, %s71
    %p80 = scmp.eq.s32.totalorder %s18, 0
    %p81 = por %p79, %p80
    %p82 = scmp.ne.s32.totalorder %s70, %s71
    %p83 = scmp.eq.s32.totalorder %s19, 1
    %p84 = por %p82, %p83
    %p86 = scmp.ne.s32.totalorder %s71, %s85
    %p87 = scmp.eq.s32.totalorder %s19, 0
    %p88 = por %p86, %p87
    %s90 = sadd.s32 %s89, 1
    %p93 = scmp.eq.s32.totalorder %s13, 1
    %p94 = scmp.ne.s32.totalorder %s89, %s91
    %p95 = scmp.eq.s32.totalorder %s13, 0
    %p96 = por %p94, %p95
    %p97 = scmp.ne.s32.totalorder %s89, %s91
    %p98 = scmp.eq.s32.totalorder %s18, 1
    %p99 = por %p97, %p98
    %p100 = scmp.ne.s32.totalorder %s91, %s92
    %p101 = scmp.eq.s32.totalorder %s18, 0
    %p102 = por %p100, %p101
    %p103 = scmp.ne.s32.totalorder %s91, %s92
    %p104 = scmp.eq.s32.totalorder %s19, 1
    %p105 = por %p103, %p104
    %p107 = scmp.ne.s32.totalorder %s92, %s106
    %p108 = scmp.eq.s32.totalorder %s19, 0
    %p109 = por %p107, %p108
    %s111 = sadd.s32 %s110, 1
    %p114 = scmp.eq.s32.totalorder %s13, 1
    %p115 = scmp.ne.s32.totalorder %s110, %s112
    %p116 = scmp.eq.s32.totalorder %s13, 0
    %p117 = por %p115, %p116
    %p118 = scmp.ne.s32.totalorder %s110, %s112
    %p119 = scmp.eq.s32.totalorder %s18, 1
    %p120 = por %p118, %p119
    %p121 = scmp.ne.s32.totalorder %s112, %s113
    %p122 = scmp.eq.s32.totalorder %s18, 0
    %p123 = por %p121, %p122
    %p124 = scmp.ne.s32.totalorder %s112, %s113
    %p125 = scmp.eq.s32.totalorder %s19, 1
    %p126 = por %p124, %p125
    %p128 = scmp.ne.s32.totalorder %s113, %s127
    %p129 = scmp.eq.s32.totalorder %s19, 0
    %p130 = por %p128, %p129
    %s132 = sadd.s32 %s131, 1
    %p135 = scmp.eq.s32.totalorder %s13, 1
    %p136 = scmp.ne.s32.totalorder %s131, %s133
    %p137 = scmp.eq.s32.totalorder %s13, 0
    %p138 = por %p136, %p137
    %p139 = scmp.ne.s32.totalorder %s131, %s133
    %p140 = scmp.eq.s32.totalorder %s18, 1
    %p141 = por %p139, %p140
    %p142 = scmp.ne.s32.totalorder %s133, %s134
    %p143 = scmp.eq.s32.totalorder %s18, 0
    %p144 = por %p142, %p143
    %p145 = scmp.ne.s32.totalorder %s133, %s134
    %p146 = scmp.eq.s32.totalorder %s19, 1
    %p147 = por %p145, %p146
    %p149 = scmp.ne.s32.totalorder %s134, %s148
    %p150 = scmp.eq.s32.totalorder %s19, 0
    %p151 = por %p149, %p150
    %s153 = sadd.s32 %s152, 1
    %p156 = scmp.eq.s32.totalorder %s13, 1
    %p157 = scmp.ne.s32.totalorder %s152, %s154
    %p158 = scmp.eq.s32.totalorder %s13, 0
    %p159 = por %p157, %p158
    %p160 = scmp.ne.s32.totalorder %s152, %s154
    %p161 = scmp.eq.s32.totalorder %s18, 1
    %p162 = por %p160, %p161
    %p163 = scmp.ne.s32.totalorder %s154, %s155
    %p164 = scmp.eq.s32.totalorder %s18, 0
    %p165 = por %p163, %p164
    %p166 = scmp.ne.s32.totalorder %s154, %s155
    %p167 = scmp.eq.s32.totalorder %s19, 1
    %p168 = por %p166, %p167
    %p170 = scmp.ne.s32.totalorder %s155, %s169
    %p171 = scmp.eq.s32.totalorder %s19, 0
    %p172 = por %p170, %p171
    %s173 = ssub.s32 %s13, %s20
    %p174 = scmp.eq.s32.totalorder %s173, 0
    %s176 = sadd.s32 %s175, 1
    %s177 = scalar_select %p174, %s175, %s176
    %p180 = pneg %p174
    %p181 = scmp.eq.s32.totalorder %s13, 1
    %p182 = por %p180, %p181
    %p183 = scmp.ne.s32.totalorder %s175, %s178
    %p184 = scmp.eq.s32.totalorder %s13, 0
    %p185 = por %p183, %p184
    %p186 = scmp.ne.s32.totalorder %s175, %s178
    %p187 = scmp.eq.s32.totalorder %s18, 1
    %p188 = por %p186, %p187
    %p189 = scmp.ne.s32.totalorder %s178, %s179
    %p190 = scmp.eq.s32.totalorder %s18, 0
    %p191 = por %p189, %p190
    %p192 = scmp.ne.s32.totalorder %s178, %s179
    %p193 = scmp.eq.s32.totalorder %s19, 1
    %p194 = por %p192, %p193
    %p196 = scmp.ne.s32.totalorder %s179, %s195
    %p197 = scmp.eq.s32.totalorder %s19, 0
    %p198 = por %p196, %p197
    %p199 = scmp.le.s32.totalorder 1, %s13
    %p200 = scmp.lt.s32.totalorder %s13, 3
    %p201 = pnand %p199, %p200
    %p202 = pneg %p201
    // Predicated region
    $region9: #{basic_block_forward.1} parent=5 // pred_check
      _
    $region10: #{basic_block_forward.1} parent=5 // pred_check_branch
      %204 = sbr.rel (%p201) target = $region12
    $region11: #{basic_block_forward.1} parent=5 // pred_region
      %s205 = ssub.s32 %s13, 1
      // Predicated region
      $region13: #{basic_block_forward.1} parent=11 // pred_check
        %p206 = pneg %p60
      $region14: #{basic_block_forward.1} parent=11 // pred_check_branch
        %208 = sbr.rel (%p206) target = $region16
      $region15: #{basic_block_forward.1} parent=11 // pred_region
        _
      $region16: #{basic_block_forward.1} parent=11 // pred_fallthru
        _
      // Predicated region
      $region17: #{basic_block_forward.1} parent=11 // pred_check
        %p209 = pneg %p81
      $region18: #{basic_block_forward.1} parent=11 // pred_check_branch
        %211 = sbr.rel (%p209) target = $region20
      $region19: #{basic_block_forward.1} parent=11 // pred_region
        _
      $region20: #{basic_block_forward.1} parent=11 // pred_fallthru
        _
      // Predicated region
      $region21: #{basic_block_forward.1} parent=11 // pred_check
        %p212 = pneg %p102
      $region22: #{basic_block_forward.1} parent=11 // pred_check_branch
        %214 = sbr.rel (%p212) target = $region24
      $region23: #{basic_block_forward.1} parent=11 // pred_region
        _
      $region24: #{basic_block_forward.1} parent=11 // pred_fallthru
        _
      // Predicated region
      $region25: #{basic_block_forward.1} parent=11 // pred_check
        %p215 = pneg %p123
      $region26: #{basic_block_forward.1} parent=11 // pred_check_branch
        %217 = sbr.rel (%p215) target = $region28
      $region27: #{basic_block_forward.1} parent=11 // pred_region
        _
      $region28: #{basic_block_forward.1} parent=11 // pred_fallthru
        _
      // Predicated region
      $region29: #{basic_block_forward.1} parent=11 // pred_check
        %p218 = pneg %p144
      $region30: #{basic_block_forward.1} parent=11 // pred_check_branch
        %220 = sbr.rel (%p218) target = $region32
      $region31: #{basic_block_forward.1} parent=11 // pred_region
        _
      $region32: #{basic_block_forward.1} parent=11 // pred_fallthru
        _
      // Predicated region
      $region33: #{basic_block_forward.1} parent=11 // pred_check
        %p221 = pneg %p165
      $region34: #{basic_block_forward.1} parent=11 // pred_check_branch
        %223 = sbr.rel (%p221) target = $region36
      $region35: #{basic_block_forward.1} parent=11 // pred_region
        _
      $region36: #{basic_block_forward.1} parent=11 // pred_fallthru
        _
    $region12: #{basic_block_forward.1} parent=5 // pred_fallthru
      _
    %p224 = scmp.lt.s32.totalorder %s13, 2
    // Predicated region
    $region37: #{basic_block_forward.1} parent=5 // pred_check
      %p225 = pneg %p224
    $region38: #{basic_block_forward.1} parent=5 // pred_check_branch
      %227 = sbr.rel (%p225) target = $region40
    $region39: #{basic_block_forward.1} parent=5 // pred_region
      // Predicated region
      $region41: #{basic_block_forward.1} parent=39 // pred_check
        %p228 = pneg %p33
      $region42: #{basic_block_forward.1} parent=39 // pred_check_branch
        %230 = sbr.rel (%p228) target = $region44
      $region43: #{basic_block_forward.1} parent=39 // pred_region
        %p231 = scmp.lt.s32.totalorder %s13, 1
        %s232 = scalar_select %p231, %s13, 1
        %s233 = smul.addr %s232, 32
        %s234 = smul.addr %s233, 8
        %s235 = scalar_lea.vmem %s0, %s234
      $region44: #{basic_block_forward.1} parent=39 // pred_fallthru
        _
    $region40: #{basic_block_forward.1} parent=5 // pred_fallthru
      _
    %p236 = scmp.le.s32.totalorder 1, %s13
    %p237 = scmp.lt.s32.totalorder %s13, 3
    %p238 = pnand %p236, %p237
    %p239 = pneg %p238
    // Predicated region
    $region45: #{basic_block_forward.1} parent=5 // pred_check
      _
    $region46: #{basic_block_forward.1} parent=5 // pred_check_branch
      %241 = sbr.rel (%p238) target = $region48
    $region47: #{basic_block_forward.1} parent=5 // pred_region
      %s242 = ssub.s32 %s13, 1
      %p243 = scmp.lt.s32.totalorder %s18, 1
      %s244 = scalar_select %p243, %s18, 1
      %s245 = smul.addr %s244, 32
      %s246 = smul.addr %s245, 8
      %s247 = scalar_lea.vmem %s0, %s246
      %p248 = pneg %p39
      %p249 = pneg %p36
      %p250 = pneg %p60
      %p251 = pneg %p57
      %p252 = pneg %p81
      %p253 = pneg %p78
      %p254 = pneg %p102
      %p255 = pneg %p99
      %p256 = pneg %p123
      %p257 = pneg %p120
      %p258 = pneg %p144
      %p259 = pneg %p141
      %p260 = pneg %p165
      %p261 = pneg %p162
      %p262 = pneg %p191
      %p263 = pneg %p188
      %p264 = scmp.lt.s32.totalorder %s18, 1
      %s265 = scalar_select %p264, %s18, 1
      %s266 = smul.addr %s265, 32
      %s267 = smul.addr %s266, 8
      %s268 = scalar_lea.vmem %s7, %s267
      %p269 = scmp.lt.s32.totalorder %s18, 1
      %s270 = scalar_select %p269, %s18, 1
      %s271 = smul.addr %s270, 32
      %s272 = smul.addr %s271, 8
      %s273 = scalar_lea.vmem %s0, %s272
      %p274 = scmp.lt.s32.totalorder %s18, 1
      %s275 = scalar_select %p274, %s18, 1
      %s276 = smul.addr %s275, 32
      %s277 = smul.addr %s276, 8
      %s278 = scalar_lea.vmem %s7, %s277
      %v280 = vld [vmem:[%s273] sm:$0xff]
      %v281 = vld [vmem:[%s273 + $0x8] sm:$0xff]
      %v282 = vld [vmem:[%s273 + $0x10] sm:$0xff]
      %v283 = vld [vmem:[%s273 + $0x18] sm:$0xff]
      %v284 = vld [vmem:[%s273 + $0x20] sm:$0xff]
      %v285 = vld [vmem:[%s273 + $0x28] sm:$0xff]
      %v286 = vld [vmem:[%s273 + $0x30] sm:$0xff]
      %v287 = vld [vmem:[%s273 + $0x38] sm:$0xff]
      %v288 = vld [vmem:[%s273 + $0x40] sm:$0xff]
      %v289 = vld [vmem:[%s273 + $0x48] sm:$0xff]
      %v290 = vld [vmem:[%s273 + $0x50] sm:$0xff]
      %v291 = vld [vmem:[%s273 + $0x58] sm:$0xff]
      %v292 = vld [vmem:[%s273 + $0x60] sm:$0xff]
      %v293 = vld [vmem:[%s273 + $0x68] sm:$0xff]
      %v294 = vld [vmem:[%s273 + $0x70] sm:$0xff]
      %v295 = vld [vmem:[%s273 + $0x78] sm:$0xff]
      %v296 = vld [vmem:[%s273 + $0x80] sm:$0xff]
      %v297 = vld [vmem:[%s273 + $0x88] sm:$0xff]
      %v298 = vld [vmem:[%s273 + $0x90] sm:$0xff]
      %v299 = vld [vmem:[%s273 + $0x98] sm:$0xff]
      %v300 = vld [vmem:[%s273 + $0xa0] sm:$0xff]
      %v301 = vld [vmem:[%s273 + $0xa8] sm:$0xff]
      %v302 = vld [vmem:[%s273 + $0xb0] sm:$0xff]
      %v303 = vld [vmem:[%s273 + $0xb8] sm:$0xff]
      %v304 = vld [vmem:[%s273 + $0xc0] sm:$0xff]
      %v305 = vld [vmem:[%s273 + $0xc8] sm:$0xff]
      %v306 = vld [vmem:[%s273 + $0xd0] sm:$0xff]
      %v307 = vld [vmem:[%s273 + $0xd8] sm:$0xff]
      %v308 = vld [vmem:[%s273 + $0xe0] sm:$0xff]
      %v309 = vld [vmem:[%s273 + $0xe8] sm:$0xff]
      %v310 = vld [vmem:[%s273 + $0xf0] sm:$0xff]
      %v311 = vld [vmem:[%s273 + $0xf8] sm:$0xff]
      %v312 = vpack.c.bf16 %v281, %v280
      %v313 = vpack.c.bf16 %v283, %v282
      %v314 = vpack.c.bf16 %v285, %v284
      %v315 = vpack.c.bf16 %v287, %v286
      %v316 = vpack.c.bf16 %v289, %v288
      %v317 = vpack.c.bf16 %v291, %v290
      %v318 = vpack.c.bf16 %v293, %v292
      %v319 = vpack.c.bf16 %v295, %v294
      %v320 = vpack.c.bf16 %v297, %v296
      %v321 = vpack.c.bf16 %v299, %v298
      %v322 = vpack.c.bf16 %v301, %v300
      %v323 = vpack.c.bf16 %v303, %v302
      %v324 = vpack.c.bf16 %v305, %v304
      %v325 = vpack.c.bf16 %v307, %v306
      %v326 = vpack.c.bf16 %v309, %v308
      %v327 = vpack.c.bf16 %v311, %v310
      %v329 = vshrl.u32 0, 16
      %v331 = vrot.slane %v329, 7
      %v332 = vshll.u32 0, 16
      %v334 = vor.u32 %v331, %v332
      %v336 = vshrl.u32 %v312, 16
      %v338 = vrot.slane %v336, 7
      %v339 = vshll.u32 %v312, 16
      %v341 = vor.u32 %v338, %v339
      %v343 = vshrl.u32 %v313, 16
      %v345 = vrot.slane %v343, 7
      %v346 = vshll.u32 %v313, 16
      %v348 = vor.u32 %v345, %v346
      %v350 = vshrl.u32 %v314, 16
      %v352 = vrot.slane %v350, 7
      %v353 = vshll.u32 %v314, 16
      %v355 = vor.u32 %v352, %v353
      %v357 = vshrl.u32 %v315, 16
      %v359 = vrot.slane %v357, 7
      %v360 = vshll.u32 %v315, 16
      %v362 = vor.u32 %v359, %v360
      %v364 = vshrl.u32 %v316, 16
      %v366 = vrot.slane %v364, 7
      %v367 = vshll.u32 %v316, 16
      %v369 = vor.u32 %v366, %v367
      %v371 = vshrl.u32 %v317, 16
      %v373 = vrot.slane %v371, 7
      %v374 = vshll.u32 %v317, 16
      %v376 = vor.u32 %v373, %v374
      %v378 = vshrl.u32 %v318, 16
      %v380 = vrot.slane %v378, 7
      %v381 = vshll.u32 %v318, 16
      %v383 = vor.u32 %v380, %v381
      %v385 = vshrl.u32 %v319, 16
      %v387 = vrot.slane %v385, 7
      %v388 = vshll.u32 %v319, 16
      %v390 = vor.u32 %v387, %v388
      %v392 = vshrl.u32 %v320, 16
      %v394 = vrot.slane %v392, 7
      %v395 = vshll.u32 %v320, 16
      %v397 = vor.u32 %v394, %v395
      %v399 = vshrl.u32 %v321, 16
      %v401 = vrot.slane %v399, 7
      %v402 = vshll.u32 %v321, 16
      %v404 = vor.u32 %v401, %v402
      %v406 = vshrl.u32 %v322, 16
      %v408 = vrot.slane %v406, 7
      %v409 = vshll.u32 %v322, 16
      %v411 = vor.u32 %v408, %v409
      %v413 = vshrl.u32 %v323, 16
      %v415 = vrot.slane %v413, 7
      %v416 = vshll.u32 %v323, 16
      %v418 = vor.u32 %v415, %v416
      %v420 = vshrl.u32 %v324, 16
      %v422 = vrot.slane %v420, 7
      %v423 = vshll.u32 %v324, 16
      %v425 = vor.u32 %v422, %v423
      %v427 = vshrl.u32 %v325, 16
      %v429 = vrot.slane %v427, 7
      %v430 = vshll.u32 %v325, 16
      %v432 = vor.u32 %v429, %v430
      %v434 = vshrl.u32 %v326, 16
      %v436 = vrot.slane %v434, 7
      %v437 = vshll.u32 %v326, 16
      %v439 = vor.u32 %v436, %v437
      %v441 = vshrl.u32 %v327, 16
      %v443 = vrot.slane %v441, 7
      %v444 = vshll.u32 %v327, 16
      %v446 = vor.u32 %v443, %v444
      %vm481 = vcmask 1040384
      %vm482 = vsmask.f32 256
      %vm483 = vmand %vm481, %vm482
      %v484 = vsel %vm483, 0, %v334
      %v485 = vsel %vm483, 0, %v341
      %v486 = vsel %vm483, 0, %v348
      %v487 = vsel %vm483, 0, %v355
      %v488 = vsel %vm483, 0, %v362
      %v489 = vsel %vm483, 0, %v369
      %v490 = vsel %vm483, 0, %v376
      %v491 = vsel %vm483, 0, %v383
      %v492 = vsel %vm483, 0, %v390
      %v493 = vsel %vm483, 0, %v397
      %v494 = vsel %vm483, 0, %v404
      %v495 = vsel %vm483, 0, %v411
      %v496 = vsel %vm483, 0, %v418
      %v497 = vsel %vm483, 0, %v425
      %v498 = vsel %vm483, 0, %v432
      %v499 = vsel %vm483, 0, %v439
      %v500 = vsel %vm483, 0, %v446
      %v501 = vsel %vm483, %v331, 0
      %v502 = vsel %vm483, %v338, 0
      %v503 = vsel %vm483, %v345, 0
      %v504 = vsel %vm483, %v352, 0
      %v505 = vsel %vm483, %v359, 0
      %v506 = vsel %vm483, %v366, 0
      %v507 = vsel %vm483, %v373, 0
      %v508 = vsel %vm483, %v380, 0
      %v509 = vsel %vm483, %v387, 0
      %v510 = vsel %vm483, %v394, 0
      %v511 = vsel %vm483, %v401, 0
      %v512 = vsel %vm483, %v408, 0
      %v513 = vsel %vm483, %v415, 0
      %v514 = vsel %vm483, %v422, 0
      %v515 = vsel %vm483, %v429, 0
      %v516 = vsel %vm483, %v436, 0
      %v517 = vsel %vm483, %v443, 0
      %vm518 = vsmask.f32 7424
      %v520 = vshrl.u32 %v484, 16
      %v522 = vshll.u32 %v484, 16
      %v524 = vrot.slane %v522, 1
      %v525 = vor.u32 %v520, %v524
      %v527 = vshll.u32 %v501, 16
      %v529 = vrot.slane %v527, 1
      %v530 = vsel %vm518, %v525, %v529
      %v532 = vshrl.u32 %v485, 16
      %v534 = vshll.u32 %v485, 16
      %v536 = vrot.slane %v534, 1
      %v537 = vor.u32 %v532, %v536
      %v539 = vshll.u32 %v502, 16
      %v541 = vrot.slane %v539, 1
      %v542 = vsel %vm518, %v537, %v541
      %v544 = vshrl.u32 %v486, 16
      %v546 = vshll.u32 %v486, 16
      %v548 = vrot.slane %v546, 1
      %v549 = vor.u32 %v544, %v548
      %v551 = vshll.u32 %v503, 16
      %v553 = vrot.slane %v551, 1
      %v554 = vsel %vm518, %v549, %v553
      %v556 = vshrl.u32 %v487, 16
      %v558 = vshll.u32 %v487, 16
      %v560 = vrot.slane %v558, 1
      %v561 = vor.u32 %v556, %v560
      %v563 = vshll.u32 %v504, 16
      %v565 = vrot.slane %v563, 1
      %v566 = vsel %vm518, %v561, %v565
      %v568 = vshrl.u32 %v488, 16
      %v570 = vshll.u32 %v488, 16
      %v572 = vrot.slane %v570, 1
      %v573 = vor.u32 %v568, %v572
      %v575 = vshll.u32 %v505, 16
      %v577 = vrot.slane %v575, 1
      %v578 = vsel %vm518, %v573, %v577
      %v580 = vshrl.u32 %v489, 16
      %v582 = vshll.u32 %v489, 16
      %v584 = vrot.slane %v582, 1
      %v585 = vor.u32 %v580, %v584
      %v587 = vshll.u32 %v506, 16
      %v589 = vrot.slane %v587, 1
      %v590 = vsel %vm518, %v585, %v589
      %v592 = vshrl.u32 %v490, 16
      %v594 = vshll.u32 %v490, 16
      %v596 = vrot.slane %v594, 1
      %v597 = vor.u32 %v592, %v596
      %v599 = vshll.u32 %v507, 16
      %v601 = vrot.slane %v599, 1
      %v602 = vsel %vm518, %v597, %v601
      %v604 = vshrl.u32 %v491, 16
      %v606 = vshll.u32 %v491, 16
      %v608 = vrot.slane %v606, 1
      %v609 = vor.u32 %v604, %v608
      %v611 = vshll.u32 %v508, 16
      %v613 = vrot.slane %v611, 1
      %v614 = vsel %vm518, %v609, %v613
      %v616 = vshrl.u32 %v492, 16
      %v618 = vshll.u32 %v492, 16
      %v620 = vrot.slane %v618, 1
      %v621 = vor.u32 %v616, %v620
      %v623 = vshll.u32 %v509, 16
      %v625 = vrot.slane %v623, 1
      %v626 = vsel %vm518, %v621, %v625
      %v628 = vshrl.u32 %v493, 16
      %v630 = vshll.u32 %v493, 16
      %v632 = vrot.slane %v630, 1
      %v633 = vor.u32 %v628, %v632
      %v635 = vshll.u32 %v510, 16
      %v637 = vrot.slane %v635, 1
      %v638 = vsel %vm518, %v633, %v637
      %v640 = vshrl.u32 %v494, 16
      %v642 = vshll.u32 %v494, 16
      %v644 = vrot.slane %v642, 1
      %v645 = vor.u32 %v640, %v644
      %v647 = vshll.u32 %v511, 16
      %v649 = vrot.slane %v647, 1
      %v650 = vsel %vm518, %v645, %v649
      %v652 = vshrl.u32 %v495, 16
      %v654 = vshll.u32 %v495, 16
      %v656 = vrot.slane %v654, 1
      %v657 = vor.u32 %v652, %v656
      %v659 = vshll.u32 %v512, 16
      %v661 = vrot.slane %v659, 1
      %v662 = vsel %vm518, %v657, %v661
      %v664 = vshrl.u32 %v496, 16
      %v666 = vshll.u32 %v496, 16
      %v668 = vrot.slane %v666, 1
      %v669 = vor.u32 %v664, %v668
      %v671 = vshll.u32 %v513, 16
      %v673 = vrot.slane %v671, 1
      %v674 = vsel %vm518, %v669, %v673
      %v676 = vshrl.u32 %v497, 16
      %v678 = vshll.u32 %v497, 16
      %v680 = vrot.slane %v678, 1
      %v681 = vor.u32 %v676, %v680
      %v683 = vshll.u32 %v514, 16
      %v685 = vrot.slane %v683, 1
      %v686 = vsel %vm518, %v681, %v685
      %v688 = vshrl.u32 %v498, 16
      %v690 = vshll.u32 %v498, 16
      %v692 = vrot.slane %v690, 1
      %v693 = vor.u32 %v688, %v692
      %v695 = vshll.u32 %v515, 16
      %v697 = vrot.slane %v695, 1
      %v698 = vsel %vm518, %v693, %v697
      %v700 = vshrl.u32 %v499, 16
      %v702 = vshll.u32 %v499, 16
      %v704 = vrot.slane %v702, 1
      %v705 = vor.u32 %v700, %v704
      %v707 = vshll.u32 %v516, 16
      %v709 = vrot.slane %v707, 1
      %v710 = vsel %vm518, %v705, %v709
      %vm759 = vcmask 1046528
      %v760 = vrot.slane %v484, 1
      %v761 = vrot.slane %v501, 1
      %v762 = vsel %vm759, %v760, %v761
      %v763 = vrot.slane %v485, 1
      %v764 = vrot.slane %v502, 1
      %v765 = vsel %vm759, %v763, %v764
      %v766 = vrot.slane %v486, 1
      %v767 = vrot.slane %v503, 1
      %v768 = vsel %vm759, %v766, %v767
      %v769 = vrot.slane %v487, 1
      %v770 = vrot.slane %v504, 1
      %v771 = vsel %vm759, %v769, %v770
      %v772 = vrot.slane %v488, 1
      %v773 = vrot.slane %v505, 1
      %v774 = vsel %vm759, %v772, %v773
      %v775 = vrot.slane %v489, 1
      %v776 = vrot.slane %v506, 1
      %v777 = vsel %vm759, %v775, %v776
      %v778 = vrot.slane %v490, 1
      %v779 = vrot.slane %v507, 1
      %v780 = vsel %vm759, %v778, %v779
      %v781 = vrot.slane %v491, 1
      %v782 = vrot.slane %v508, 1
      %v783 = vsel %vm759, %v781, %v782
      %v784 = vrot.slane %v492, 1
      %v785 = vrot.slane %v509, 1
      %v786 = vsel %vm759, %v784, %v785
      %v787 = vrot.slane %v493, 1
      %v788 = vrot.slane %v510, 1
      %v789 = vsel %vm759, %v787, %v788
      %v790 = vrot.slane %v494, 1
      %v791 = vrot.slane %v511, 1
      %v792 = vsel %vm759, %v790, %v791
      %v793 = vrot.slane %v495, 1
      %v794 = vrot.slane %v512, 1
      %v795 = vsel %vm759, %v793, %v794
      %v796 = vrot.slane %v496, 1
      %v797 = vrot.slane %v513, 1
      %v798 = vsel %vm759, %v796, %v797
      %v799 = vrot.slane %v497, 1
      %v800 = vrot.slane %v514, 1
      %v801 = vsel %vm759, %v799, %v800
      %v802 = vrot.slane %v498, 1
      %v803 = vrot.slane %v515, 1
      %v804 = vsel %vm759, %v802, %v803
      %v805 = vrot.slane %v499, 1
      %v806 = vrot.slane %v516, 1
      %v807 = vsel %vm759, %v805, %v806
      %v824 = vld [vmem:[%s1] sm:$0xf]
      %v825 = vld [vmem:[%s1 + $0x4] sm:$0xf]
      %v826 = vld [vmem:[%s1 + $0x8] sm:$0xf]
      %v827 = vld [vmem:[%s1 + $0xc] sm:$0xf]
      %v828 = vld [vmem:[%s1 + $0x10] sm:$0xf]
      %v829 = vld [vmem:[%s1 + $0x14] sm:$0xf]
      %v830 = vld [vmem:[%s1 + $0x18] sm:$0xf]
      %v831 = vld [vmem:[%s1 + $0x1c] sm:$0xf]
      %v832 = vld [vmem:[%s1 + $0x20] sm:$0xf]
      %v833 = vld [vmem:[%s1 + $0x24] sm:$0xf]
      %v834 = vld [vmem:[%s1 + $0x28] sm:$0xf]
      %v835 = vld [vmem:[%s1 + $0x2c] sm:$0xf]
      %v836 = vld [vmem:[%s1 + $0x30] sm:$0xf]
      %v837 = vld [vmem:[%s1 + $0x34] sm:$0xf]
      %v838 = vld [vmem:[%s1 + $0x38] sm:$0xf]
      %v839 = vld [vmem:[%s1 + $0x3c] sm:$0xf]
      %v840 = vld [vmem:[%s1 + $0x40] sm:$0xf]
      %v841 = vld [vmem:[%s1 + $0x44] sm:$0xf]
      %v842 = vld [vmem:[%s1 + $0x48] sm:$0xf]
      %v843 = vld [vmem:[%s1 + $0x4c] sm:$0xf]
      %v844 = vld [vmem:[%s1 + $0x50] sm:$0xf]
      %v845 = vld [vmem:[%s1 + $0x54] sm:$0xf]
      %v846 = vld [vmem:[%s1 + $0x58] sm:$0xf]
      %v847 = vld [vmem:[%s1 + $0x5c] sm:$0xf]
      %v848 = vld [vmem:[%s1 + $0x60] sm:$0xf]
      %v849 = vld [vmem:[%s1 + $0x64] sm:$0xf]
      %v850 = vld [vmem:[%s1 + $0x68] sm:$0xf]
      %v851 = vld [vmem:[%s1 + $0x6c] sm:$0xf]
      %v852 = vld [vmem:[%s1 + $0x70] sm:$0xf]
      %v853 = vld [vmem:[%s1 + $0x74] sm:$0xf]
      %v854 = vld [vmem:[%s1 + $0x78] sm:$0xf]
      %v855 = vld [vmem:[%s1 + $0x7c] sm:$0xf]
      %v856 = vld [vmem:[%s1 + $0x80] sm:$0xf]
      %v857 = vld [vmem:[%s1 + $0x84] sm:$0xf]
      %v858 = vld [vmem:[%s1 + $0x88] sm:$0xf]
      %v859 = vld [vmem:[%s1 + $0x8c] sm:$0xf]
      %v860 = vld [vmem:[%s1 + $0x90] sm:$0xf]
      %v861 = vld [vmem:[%s1 + $0x94] sm:$0xf]
      %v862 = vld [vmem:[%s1 + $0x98] sm:$0xf]
      %v863 = vld [vmem:[%s1 + $0x9c] sm:$0xf]
      %v864 = vld [vmem:[%s1 + $0xa0] sm:$0xf]
      %v865 = vld [vmem:[%s1 + $0xa4] sm:$0xf]
      %v866 = vld [vmem:[%s1 + $0xa8] sm:$0xf]
      %v867 = vld [vmem:[%s1 + $0xac] sm:$0xf]
      %v868 = vld [vmem:[%s1 + $0xb0] sm:$0xf]
      %v869 = vld [vmem:[%s1 + $0xb4] sm:$0xf]
      %v870 = vld [vmem:[%s1 + $0xb8] sm:$0xf]
      %v871 = vld [vmem:[%s1 + $0xbc] sm:$0xf]
      %v873 = vshrl.u32 %v500, 16
      %v875 = vshll.u32 %v500, 16
      %v877 = vrot.slane %v875, 1
      %v878 = vor.u32 %v873, %v877
      %v880 = vshll.u32 %v517, 16
      %v882 = vrot.slane %v880, 1
      %v883 = vsel %vm518, %v878, %v882
      %v887 = vrot.slane %v500, 1
      %v888 = vrot.slane %v517, 1
      %v889 = vsel %vm759, %v887, %v888
      %s891 = scalar_lea.vmem %s1, 192
      %v892 = vld [vmem:[%s891] sm:$0xf]
      %v893 = vld [vmem:[%s891 + $0x4] sm:$0xf]
      %v894 = vld [vmem:[%s891 + $0x8] sm:$0xf]
      %v895 = vld [vmem:[%s891 + $0xc] sm:$0xf]
      %v896 = vld [vmem:[%s891 + $0x10] sm:$0xf]
      %v897 = vld [vmem:[%s891 + $0x14] sm:$0xf]
      %v898 = vld [vmem:[%s891 + $0x18] sm:$0xf]
      %v899 = vld [vmem:[%s891 + $0x1c] sm:$0xf]
      %v900 = vld [vmem:[%s891 + $0x20] sm:$0xf]
      %v901 = vld [vmem:[%s891 + $0x24] sm:$0xf]
      %v902 = vld [vmem:[%s891 + $0x28] sm:$0xf]
      %v903 = vld [vmem:[%s891 + $0x2c] sm:$0xf]
      %v904 = vld [vmem:[%s891 + $0x30] sm:$0xf]
      %v905 = vld [vmem:[%s891 + $0x34] sm:$0xf]
      %v906 = vld [vmem:[%s891 + $0x38] sm:$0xf]
      %v907 = vld [vmem:[%s891 + $0x3c] sm:$0xf]
      %v908 = vld [vmem:[%s891 + $0x40] sm:$0xf]
      %v909 = vld [vmem:[%s891 + $0x44] sm:$0xf]
      %v910 = vld [vmem:[%s891 + $0x48] sm:$0xf]
      %v911 = vld [vmem:[%s891 + $0x4c] sm:$0xf]
      %v912 = vld [vmem:[%s891 + $0x50] sm:$0xf]
      %v913 = vld [vmem:[%s891 + $0x54] sm:$0xf]
      %v914 = vld [vmem:[%s891 + $0x58] sm:$0xf]
      %v915 = vld [vmem:[%s891 + $0x5c] sm:$0xf]
      %v916 = vld [vmem:[%s891 + $0x60] sm:$0xf]
      %v917 = vld [vmem:[%s891 + $0x64] sm:$0xf]
      %v918 = vld [vmem:[%s891 + $0x68] sm:$0xf]
      %v919 = vld [vmem:[%s891 + $0x6c] sm:$0xf]
      %v920 = vld [vmem:[%s891 + $0x70] sm:$0xf]
      %v921 = vld [vmem:[%s891 + $0x74] sm:$0xf]
      %v922 = vld [vmem:[%s891 + $0x78] sm:$0xf]
      %v923 = vld [vmem:[%s891 + $0x7c] sm:$0xf]
      %v924 = vld [vmem:[%s891 + $0x80] sm:$0xf]
      %v925 = vld [vmem:[%s891 + $0x84] sm:$0xf]
      %v926 = vld [vmem:[%s891 + $0x88] sm:$0xf]
      %v927 = vld [vmem:[%s891 + $0x8c] sm:$0xf]
      %v928 = vld [vmem:[%s891 + $0x90] sm:$0xf]
      %v929 = vld [vmem:[%s891 + $0x94] sm:$0xf]
      %v930 = vld [vmem:[%s891 + $0x98] sm:$0xf]
      %v931 = vld [vmem:[%s891 + $0x9c] sm:$0xf]
      %v932 = vld [vmem:[%s891 + $0xa0] sm:$0xf]
      %v933 = vld [vmem:[%s891 + $0xa4] sm:$0xf]
      %v934 = vld [vmem:[%s891 + $0xa8] sm:$0xf]
      %v935 = vld [vmem:[%s891 + $0xac] sm:$0xf]
      %v936 = vld [vmem:[%s891 + $0xb0] sm:$0xf]
      %v937 = vld [vmem:[%s891 + $0xb4] sm:$0xf]
      %v938 = vld [vmem:[%s891 + $0xb8] sm:$0xf]
      %v939 = vld [vmem:[%s891 + $0xbc] sm:$0xf]
      %v988 = vunpack.c.l.b16 %v892
      %v989 = vunpack.c.l.b16 %v893
      %v990 = vunpack.c.l.b16 %v894
      %v991 = vunpack.c.l.b16 %v895
      %v992 = vunpack.c.l.b16 %v896
      %v993 = vunpack.c.l.b16 %v897
      %v994 = vunpack.c.l.b16 %v898
      %v995 = vunpack.c.l.b16 %v899
      %v996 = vunpack.c.l.b16 %v900
      %v997 = vunpack.c.l.b16 %v901
      %v998 = vunpack.c.l.b16 %v902
      %v999 = vunpack.c.l.b16 %v903
      %v1000 = vunpack.c.l.b16 %v904
      %v1001 = vunpack.c.l.b16 %v905
      %v1002 = vunpack.c.l.b16 %v906
      %v1003 = vunpack.c.l.b16 %v907
      %v1004 = vunpack.c.l.b16 %v908
      %v1005 = vunpack.c.l.b16 %v909
      %v1006 = vunpack.c.l.b16 %v910
      %v1007 = vunpack.c.l.b16 %v911
      %v1008 = vunpack.c.l.b16 %v912
      %v1009 = vunpack.c.l.b16 %v913
      %v1010 = vunpack.c.l.b16 %v914
      %v1011 = vunpack.c.l.b16 %v915
      %v1012 = vunpack.c.l.b16 %v916
      %v1013 = vunpack.c.l.b16 %v917
      %v1014 = vunpack.c.l.b16 %v918
      %v1015 = vunpack.c.l.b16 %v919
      %v1016 = vunpack.c.l.b16 %v920
      %v1017 = vunpack.c.l.b16 %v921
      %v1018 = vunpack.c.l.b16 %v922
      %v1019 = vunpack.c.l.b16 %v923
      %v1020 = vunpack.c.l.b16 %v924
      %v1021 = vunpack.c.l.b16 %v925
      %v1022 = vunpack.c.l.b16 %v926
      %v1023 = vunpack.c.l.b16 %v927
      %v1024 = vunpack.c.l.b16 %v928
      %v1025 = vunpack.c.l.b16 %v929
      %v1026 = vunpack.c.l.b16 %v930
      %v1027 = vunpack.c.l.b16 %v931
      %v1028 = vunpack.c.l.b16 %v932
      %v1029 = vunpack.c.l.b16 %v933
      %v1030 = vunpack.c.l.b16 %v934
      %v1031 = vunpack.c.l.b16 %v935
      %v1032 = vunpack.c.l.b16 %v936
      %v1033 = vunpack.c.l.b16 %v937
      %v1034 = vunpack.c.l.b16 %v938
      %v1035 = vunpack.c.l.b16 %v939
      %v1036 = vpack.c.b16 %v989, %v988
      %v1037 = vpack.c.b16 %v991, %v990
      %v1038 = vpack.c.b16 %v993, %v992
      %v1039 = vpack.c.b16 %v995, %v994
      %v1040 = vpack.c.b16 %v997, %v996
      %v1041 = vpack.c.b16 %v999, %v998
      %v1042 = vpack.c.b16 %v1001, %v1000
      %v1043 = vpack.c.b16 %v1003, %v1002
      %v1044 = vpack.c.b16 %v1005, %v1004
      %v1045 = vpack.c.b16 %v1007, %v1006
      %v1046 = vpack.c.b16 %v1009, %v1008
      %v1047 = vpack.c.b16 %v1011, %v1010
      %v1048 = vpack.c.b16 %v1013, %v1012
      %v1049 = vpack.c.b16 %v1015, %v1014
      %v1050 = vpack.c.b16 %v1017, %v1016
      %v1051 = vpack.c.b16 %v1019, %v1018
      %v1052 = vpack.c.b16 %v1021, %v1020
      %v1053 = vpack.c.b16 %v1023, %v1022
      %v1054 = vpack.c.b16 %v1025, %v1024
      %v1055 = vpack.c.b16 %v1027, %v1026
      %v1056 = vpack.c.b16 %v1029, %v1028
      %v1057 = vpack.c.b16 %v1031, %v1030
      %v1058 = vpack.c.b16 %v1033, %v1032
      %v1059 = vpack.c.b16 %v1035, %v1034
      %1084 = vmatprep.subr.bf16.mxu0 0
      %1085 = vmatpush1.bf16.msra.mxu0 %v1043
      %1086 = vmatprep.subr.bf16.mxu0 0
      %1087 = vmatpush1.bf16.msra.mxu0 %v1042
      %1088 = vmatprep.subr.bf16.mxu0 0
      %1089 = vmatpush1.bf16.msra.mxu0 %v1041
      %1090 = vmatprep.subr.bf16.mxu0 0
      %1091 = vmatpush1.bf16.msra.mxu0 %v1040
      %1092 = vmatprep.subr.bf16.mxu0 0
      %1093 = vmatpush1.bf16.msra.mxu0 %v1039
      %1094 = vmatprep.subr.bf16.mxu0 0
      %1095 = vmatpush1.bf16.msra.mxu0 %v1038
      %1096 = vmatprep.subr.bf16.mxu0 0
      %1097 = vmatpush1.bf16.msra.mxu0 %v1037
      %1098 = vmatprep.subr.bf16.mxu0 0
      %1099 = vmatpush1.bf16.msra.mxu0 %v1036
      %1100 = vmatprep.subr.bf16.mxu0 0
      %1101 = vmatpush2.bf16.msra.mxu0 %v1051
      %1102 = vmatprep.subr.bf16.mxu0 0
      %1103 = vmatpush2.bf16.msra.mxu0 %v1050
      %1104 = vmatprep.subr.bf16.mxu0 0
      %1105 = vmatpush2.bf16.msra.mxu0 %v1049
      %1106 = vmatprep.subr.bf16.mxu0 0
      %1107 = vmatpush2.bf16.msra.mxu0 %v1048
      %1108 = vmatprep.subr.bf16.mxu0 0
      %1109 = vmatpush2.bf16.msra.mxu0 %v1047
      %1110 = vmatprep.subr.bf16.mxu0 0
      %1111 = vmatpush2.bf16.msra.mxu0 %v1046
      %1112 = vmatprep.subr.bf16.mxu0 0
      %1113 = vmatpush2.bf16.msra.mxu0 %v1045
      %1114 = vmatprep.subr.bf16.mxu0 0
      %1115 = vmatpush2.bf16.msra.mxu0 %v1044
      %1116 = vmatprep.mubr.bf16.mxu0 %v542
      %1117 = vmatmul.mubr.bf16.gmra.mxu0 %v485
      %v1118 = vpop.f32.mrf.mxu0
      %v1119 = vadd.f32 0.0, %v1118
      %v1120 = vpop.f32.mrf.mxu0
      %v1121 = vpop.f32.mrf.mxu0
      %v1122 = vadd.f32 0.0, %v1121
      %v1123 = vpop.f32.mrf.mxu0
      %1124 = vmatprep.mubr.bf16.mxu0 %v554
      %1125 = vmatmul.mubr.bf16.gmra.mxu0 %v486
      %v1126 = vpop.f32.mrf.mxu0
      %v1127 = vadd.f32 0.0, %v1126
      %v1128 = vpop.f32.mrf.mxu0
      %v1129 = vpop.f32.mrf.mxu0
      %v1130 = vadd.f32 0.0, %v1129
      %v1131 = vpop.f32.mrf.mxu0
      %1132 = vmatprep.mubr.bf16.mxu0 %v566
      %1133 = vmatmul.mubr.bf16.gmra.mxu0 %v487
      %v1134 = vpop.f32.mrf.mxu0
      %v1135 = vadd.f32 0.0, %v1134
      %v1136 = vpop.f32.mrf.mxu0
      %v1137 = vpop.f32.mrf.mxu0
      %v1138 = vadd.f32 0.0, %v1137
      %v1139 = vpop.f32.mrf.mxu0
      %1140 = vmatprep.mubr.bf16.mxu0 %v578
      %1141 = vmatmul.mubr.bf16.gmra.mxu0 %v488
      %v1142 = vpop.f32.mrf.mxu0
      %v1143 = vadd.f32 0.0, %v1142
      %v1144 = vpop.f32.mrf.mxu0
      %v1145 = vpop.f32.mrf.mxu0
      %v1146 = vadd.f32 0.0, %v1145
      %v1147 = vpop.f32.mrf.mxu0
      %1148 = vmatprep.mubr.bf16.mxu0 %v590
      %1149 = vmatmul.mubr.bf16.gmra.mxu0 %v489
      %v1150 = vpop.f32.mrf.mxu0
      %v1151 = vadd.f32 0.0, %v1150
      %v1152 = vpop.f32.mrf.mxu0
      %v1153 = vpop.f32.mrf.mxu0
      %v1154 = vadd.f32 0.0, %v1153
      %v1155 = vpop.f32.mrf.mxu0
      %1156 = vmatprep.mubr.bf16.mxu0 %v602
      %1157 = vmatmul.mubr.bf16.gmra.mxu0 %v490
      %v1158 = vpop.f32.mrf.mxu0
      %v1159 = vadd.f32 0.0, %v1158
      %v1160 = vpop.f32.mrf.mxu0
      %v1161 = vpop.f32.mrf.mxu0
      %v1162 = vadd.f32 0.0, %v1161
      %v1163 = vpop.f32.mrf.mxu0
      %1164 = vmatprep.mubr.bf16.mxu0 %v614
      %1165 = vmatmul.mubr.bf16.gmra.mxu0 %v491
      %v1166 = vpop.f32.mrf.mxu0
      %v1167 = vadd.f32 0.0, %v1166
      %v1168 = vpop.f32.mrf.mxu0
      %v1169 = vpop.f32.mrf.mxu0
      %v1170 = vadd.f32 0.0, %v1169
      %v1171 = vpop.f32.mrf.mxu0
      %1172 = vmatprep.mubr.bf16.mxu0 %v626
      %1173 = vmatmul.mubr.bf16.gmra.mxu0 %v492
      %v1174 = vpop.f32.mrf.mxu0
      %v1175 = vadd.f32 0.0, %v1174
      %v1176 = vpop.f32.mrf.mxu0
      %v1177 = vpop.f32.mrf.mxu0
      %v1178 = vadd.f32 0.0, %v1177
      %v1179 = vpop.f32.mrf.mxu0
      %1180 = vmatprep.mubr.bf16.mxu0 %v638
      %1181 = vmatmul.mubr.bf16.gmra.mxu0 %v493
      %v1182 = vpop.f32.mrf.mxu0
      %v1183 = vadd.f32 0.0, %v1182
      %v1184 = vpop.f32.mrf.mxu0
      %v1185 = vpop.f32.mrf.mxu0
      %v1186 = vadd.f32 0.0, %v1185
      %v1187 = vpop.f32.mrf.mxu0
      %1188 = vmatprep.mubr.bf16.mxu0 %v650
      %1189 = vmatmul.mubr.bf16.gmra.mxu0 %v494
      %v1190 = vpop.f32.mrf.mxu0
      %v1191 = vadd.f32 0.0, %v1190
      %v1192 = vpop.f32.mrf.mxu0
      %v1193 = vpop.f32.mrf.mxu0
      %v1194 = vadd.f32 0.0, %v1193
      %v1195 = vpop.f32.mrf.mxu0
      %1196 = vmatprep.mubr.bf16.mxu0 %v662
      %1197 = vmatmul.mubr.bf16.gmra.mxu0 %v495
      %v1198 = vpop.f32.mrf.mxu0
      %v1199 = vadd.f32 0.0, %v1198
      %v1200 = vpop.f32.mrf.mxu0
      %v1201 = vpop.f32.mrf.mxu0
      %v1202 = vadd.f32 0.0, %v1201
      %v1203 = vpop.f32.mrf.mxu0
      %1204 = vmatprep.mubr.bf16.mxu0 %v674
      %1205 = vmatmul.mubr.bf16.gmra.mxu0 %v496
      %v1206 = vpop.f32.mrf.mxu0
      %v1207 = vadd.f32 0.0, %v1206
      %v1208 = vpop.f32.mrf.mxu0
      %v1209 = vpop.f32.mrf.mxu0
      %v1210 = vadd.f32 0.0, %v1209
      %v1211 = vpop.f32.mrf.mxu0
      %1212 = vmatprep.mubr.bf16.mxu0 %v686
      %1213 = vmatmul.mubr.bf16.gmra.mxu0 %v497
      %v1214 = vpop.f32.mrf.mxu0
      %v1215 = vadd.f32 0.0, %v1214
      %v1216 = vpop.f32.mrf.mxu0
      %v1217 = vpop.f32.mrf.mxu0
      %v1218 = vadd.f32 0.0, %v1217
      %v1219 = vpop.f32.mrf.mxu0
      %1220 = vmatprep.mubr.bf16.mxu0 %v698
      %1221 = vmatmul.mubr.bf16.gmra.mxu0 %v498
      %v1222 = vpop.f32.mrf.mxu0
      %v1223 = vadd.f32 0.0, %v1222
      %v1224 = vpop.f32.mrf.mxu0
      %v1225 = vpop.f32.mrf.mxu0
      %v1226 = vadd.f32 0.0, %v1225
      %v1227 = vpop.f32.mrf.mxu0
      %1228 = vmatprep.mubr.bf16.mxu0 %v710
      %1229 = vmatmul.mubr.bf16.gmra.mxu0 %v499
      %v1230 = vpop.f32.mrf.mxu0
      %v1231 = vadd.f32 0.0, %v1230
      %v1232 = vpop.f32.mrf.mxu0
      %v1233 = vpop.f32.mrf.mxu0
      %v1234 = vadd.f32 0.0, %v1233
      %v1235 = vpop.f32.mrf.mxu0
      %1236 = vmatprep.mubr.bf16.mxu0 %v883
      %1237 = vmatmul.mubr.bf16.gmra.mxu0 %v500
      %v1238 = vpop.f32.mrf.mxu0
      %v1239 = vadd.f32 0.0, %v1238
      %v1240 = vpop.f32.mrf.mxu0
      %v1241 = vpop.f32.mrf.mxu0
      %v1242 = vadd.f32 0.0, %v1241
      %v1243 = vpop.f32.mrf.mxu0
      %1244 = vdwg.mxu0
      %1245 = vmatprep.subr.bf16.mxu0 0
      %1246 = vmatpush1.bf16.msra.mxu0 %v1059
      %1247 = vmatprep.subr.bf16.mxu0 0
      %1248 = vmatpush1.bf16.msra.mxu0 %v1058
      %1249 = vmatprep.subr.bf16.mxu0 0
      %1250 = vmatpush1.bf16.msra.mxu0 %v1057
      %1251 = vmatprep.subr.bf16.mxu0 0
      %1252 = vmatpush1.bf16.msra.mxu0 %v1056
      %1253 = vmatprep.subr.bf16.mxu0 0
      %1254 = vmatpush1.bf16.msra.mxu0 %v1055
      %1255 = vmatprep.subr.bf16.mxu0 0
      %1256 = vmatpush1.bf16.msra.mxu0 %v1054
      %1257 = vmatprep.subr.bf16.mxu0 0
      %1258 = vmatpush1.bf16.msra.mxu0 %v1053
      %1259 = vmatprep.subr.bf16.mxu0 0
      %1260 = vmatpush1.bf16.msra.mxu0 %v1052
      %1261 = vmatprep.subr.bf16.mxu0 0
      %1262 = vmatpush2.bf16.msra.mxu0 0
      %1263 = vmatprep.subr.bf16.mxu0 0
      %1264 = vmatpush2.bf16.msra.mxu0 0
      %1265 = vmatprep.subr.bf16.mxu0 0
      %1266 = vmatpush2.bf16.msra.mxu0 0
      %1267 = vmatprep.subr.bf16.mxu0 0
      %1268 = vmatpush2.bf16.msra.mxu0 0
      %1269 = vmatprep.subr.bf16.mxu0 0
      %1270 = vmatpush2.bf16.msra.mxu0 0
      %1271 = vmatprep.subr.bf16.mxu0 0
      %1272 = vmatpush2.bf16.msra.mxu0 0
      %1273 = vmatprep.subr.bf16.mxu0 0
      %1274 = vmatpush2.bf16.msra.mxu0 0
      %1275 = vmatprep.subr.bf16.mxu0 0
      %1276 = vmatpush2.bf16.msra.mxu0 0
      %1277 = vmatprep.mubr.bf16.mxu0 0
      %1278 = vmatmul.mubr.bf16.gmra.mxu0 %v765
      %v1279 = vpop.f32.mrf.mxu0
      %v1280 = vadd.f32 %v1119, %v1279
      %v1281 = vpop.f32.mrf.mxu0
      %v1282 = vpop.f32.mrf.mxu0
      %v1283 = vadd.f32 %v1122, %v1282
      %v1284 = vpop.f32.mrf.mxu0
      %1285 = vmatprep.mubr.bf16.mxu0 0
      %1286 = vmatmul.mubr.bf16.gmra.mxu0 %v768
      %v1287 = vpop.f32.mrf.mxu0
      %v1288 = vadd.f32 %v1127, %v1287
      %v1289 = vpop.f32.mrf.mxu0
      %v1290 = vpop.f32.mrf.mxu0
      %v1291 = vadd.f32 %v1130, %v1290
      %v1292 = vpop.f32.mrf.mxu0
      %1293 = vmatprep.mubr.bf16.mxu0 0
      %1294 = vmatmul.mubr.bf16.gmra.mxu0 %v771
      %v1295 = vpop.f32.mrf.mxu0
      %v1296 = vadd.f32 %v1135, %v1295
      %v1297 = vpop.f32.mrf.mxu0
      %v1298 = vpop.f32.mrf.mxu0
      %v1299 = vadd.f32 %v1138, %v1298
      %v1300 = vpop.f32.mrf.mxu0
      %1301 = vmatprep.mubr.bf16.mxu0 0
      %1302 = vmatmul.mubr.bf16.gmra.mxu0 %v774
      %v1303 = vpop.f32.mrf.mxu0
      %v1304 = vadd.f32 %v1143, %v1303
      %v1305 = vpop.f32.mrf.mxu0
      %v1306 = vpop.f32.mrf.mxu0
      %v1307 = vadd.f32 %v1146, %v1306
      %v1308 = vpop.f32.mrf.mxu0
      %1309 = vmatprep.mubr.bf16.mxu0 0
      %1310 = vmatmul.mubr.bf16.gmra.mxu0 %v777
      %v1311 = vpop.f32.mrf.mxu0
      %v1312 = vadd.f32 %v1151, %v1311
      %v1313 = vpop.f32.mrf.mxu0
      %v1314 = vpop.f32.mrf.mxu0
      %v1315 = vadd.f32 %v1154, %v1314
      %v1316 = vpop.f32.mrf.mxu0
      %1317 = vmatprep.mubr.bf16.mxu0 0
      %1318 = vmatmul.mubr.bf16.gmra.mxu0 %v780
      %v1319 = vpop.f32.mrf.mxu0
      %v1320 = vadd.f32 %v1159, %v1319
      %v1321 = vpop.f32.mrf.mxu0
      %v1322 = vpop.f32.mrf.mxu0
      %v1323 = vadd.f32 %v1162, %v1322
      %v1324 = vpop.f32.mrf.mxu0
      %1325 = vmatprep.mubr.bf16.mxu0 0
      %1326 = vmatmul.mubr.bf16.gmra.mxu0 %v783
      %v1327 = vpop.f32.mrf.mxu0
      %v1328 = vadd.f32 %v1167, %v1327
      %v1329 = vpop.f32.mrf.mxu0
      %v1330 = vpop.f32.mrf.mxu0
      %v1331 = vadd.f32 %v1170, %v1330
      %v1332 = vpop.f32.mrf.mxu0
      %1333 = vmatprep.mubr.bf16.mxu0 0
      %1334 = vmatmul.mubr.bf16.gmra.mxu0 %v786
      %v1335 = vpop.f32.mrf.mxu0
      %v1336 = vadd.f32 %v1175, %v1335
      %v1337 = vpop.f32.mrf.mxu0
      %v1338 = vpop.f32.mrf.mxu0
      %v1339 = vadd.f32 %v1178, %v1338
      %v1340 = vpop.f32.mrf.mxu0
      %1341 = vmatprep.mubr.bf16.mxu0 0
      %1342 = vmatmul.mubr.bf16.gmra.mxu0 %v789
      %v1343 = vpop.f32.mrf.mxu0
      %v1344 = vadd.f32 %v1183, %v1343
      %v1345 = vpop.f32.mrf.mxu0
      %v1346 = vpop.f32.mrf.mxu0
      %v1347 = vadd.f32 %v1186, %v1346
      %v1348 = vpop.f32.mrf.mxu0
      %1349 = vmatprep.mubr.bf16.mxu0 0
      %1350 = vmatmul.mubr.bf16.gmra.mxu0 %v792
      %v1351 = vpop.f32.mrf.mxu0
      %v1352 = vadd.f32 %v1191, %v1351
      %v1353 = vpop.f32.mrf.mxu0
      %v1354 = vpop.f32.mrf.mxu0
      %v1355 = vadd.f32 %v1194, %v1354
      %v1356 = vpop.f32.mrf.mxu0
      %1357 = vmatprep.mubr.bf16.mxu0 0
      %1358 = vmatmul.mubr.bf16.gmra.mxu0 %v795
      %v1359 = vpop.f32.mrf.mxu0
      %v1360 = vadd.f32 %v1199, %v1359
      %v1361 = vpop.f32.mrf.mxu0
      %v1362 = vpop.f32.mrf.mxu0
      %v1363 = vadd.f32 %v1202, %v1362
      %v1364 = vpop.f32.mrf.mxu0
      %1365 = vmatprep.mubr.bf16.mxu0 0
      %1366 = vmatmul.mubr.bf16.gmra.mxu0 %v798
      %v1367 = vpop.f32.mrf.mxu0
      %v1368 = vadd.f32 %v1207, %v1367
      %v1369 = vpop.f32.mrf.mxu0
      %v1370 = vpop.f32.mrf.mxu0
      %v1371 = vadd.f32 %v1210, %v1370
      %v1372 = vpop.f32.mrf.mxu0
      %1373 = vmatprep.mubr.bf16.mxu0 0
      %1374 = vmatmul.mubr.bf16.gmra.mxu0 %v801
      %v1375 = vpop.f32.mrf.mxu0
      %v1376 = vadd.f32 %v1215, %v1375
      %v1377 = vpop.f32.mrf.mxu0
      %v1378 = vpop.f32.mrf.mxu0
      %v1379 = vadd.f32 %v1218, %v1378
      %v1380 = vpop.f32.mrf.mxu0
      %1381 = vmatprep.mubr.bf16.mxu0 0
      %1382 = vmatmul.mubr.bf16.gmra.mxu0 %v804
      %v1383 = vpop.f32.mrf.mxu0
      %v1384 = vadd.f32 %v1223, %v1383
      %v1385 = vpop.f32.mrf.mxu0
      %v1386 = vpop.f32.mrf.mxu0
      %v1387 = vadd.f32 %v1226, %v1386
      %v1388 = vpop.f32.mrf.mxu0
      %1389 = vmatprep.mubr.bf16.mxu0 0
      %1390 = vmatmul.mubr.bf16.gmra.mxu0 %v807
      %v1391 = vpop.f32.mrf.mxu0
      %v1392 = vadd.f32 %v1231, %v1391
      %v1393 = vpop.f32.mrf.mxu0
      %v1394 = vpop.f32.mrf.mxu0
      %v1395 = vadd.f32 %v1234, %v1394
      %v1396 = vpop.f32.mrf.mxu0
      %1397 = vmatprep.mubr.bf16.mxu0 0
      %1398 = vmatmul.mubr.bf16.gmra.mxu0 %v889
      %v1399 = vpop.f32.mrf.mxu0
      %v1400 = vadd.f32 %v1239, %v1399
      %v1401 = vpop.f32.mrf.mxu0
      %v1402 = vpop.f32.mrf.mxu0
      %v1403 = vadd.f32 %v1242, %v1402
      %v1404 = vpop.f32.mrf.mxu0
      %1405 = vdwg.mxu0
      %v1454 = vunpack.c.l.b16 %v824
      %v1455 = vunpack.c.l.b16 %v825
      %v1456 = vunpack.c.l.b16 %v826
      %v1457 = vunpack.c.l.b16 %v827
      %v1458 = vunpack.c.l.b16 %v828
      %v1459 = vunpack.c.l.b16 %v829
      %v1460 = vunpack.c.l.b16 %v830
      %v1461 = vunpack.c.l.b16 %v831
      %v1462 = vunpack.c.l.b16 %v832
      %v1463 = vunpack.c.l.b16 %v833
      %v1464 = vunpack.c.l.b16 %v834
      %v1465 = vunpack.c.l.b16 %v835
      %v1466 = vunpack.c.l.b16 %v836
      %v1467 = vunpack.c.l.b16 %v837
      %v1468 = vunpack.c.l.b16 %v838
      %v1469 = vunpack.c.l.b16 %v839
      %v1470 = vunpack.c.l.b16 %v840
      %v1471 = vunpack.c.l.b16 %v841
      %v1472 = vunpack.c.l.b16 %v842
      %v1473 = vunpack.c.l.b16 %v843
      %v1474 = vunpack.c.l.b16 %v844
      %v1475 = vunpack.c.l.b16 %v845
      %v1476 = vunpack.c.l.b16 %v846
      %v1477 = vunpack.c.l.b16 %v847
      %v1478 = vunpack.c.l.b16 %v848
      %v1479 = vunpack.c.l.b16 %v849
      %v1480 = vunpack.c.l.b16 %v850
      %v1481 = vunpack.c.l.b16 %v851
      %v1482 = vunpack.c.l.b16 %v852
      %v1483 = vunpack.c.l.b16 %v853
      %v1484 = vunpack.c.l.b16 %v854
      %v1485 = vunpack.c.l.b16 %v855
      %v1486 = vunpack.c.l.b16 %v856
      %v1487 = vunpack.c.l.b16 %v857
      %v1488 = vunpack.c.l.b16 %v858
      %v1489 = vunpack.c.l.b16 %v859
      %v1490 = vunpack.c.l.b16 %v860
      %v1491 = vunpack.c.l.b16 %v861
      %v1492 = vunpack.c.l.b16 %v862
      %v1493 = vunpack.c.l.b16 %v863
      %v1494 = vunpack.c.l.b16 %v864
      %v1495 = vunpack.c.l.b16 %v865
      %v1496 = vunpack.c.l.b16 %v866
      %v1497 = vunpack.c.l.b16 %v867
      %v1498 = vunpack.c.l.b16 %v868
      %v1499 = vunpack.c.l.b16 %v869
      %v1500 = vunpack.c.l.b16 %v870
      %v1501 = vunpack.c.l.b16 %v871
      %v1502 = vpack.c.b16 %v1455, %v1454
      %v1503 = vpack.c.b16 %v1457, %v1456
      %v1504 = vpack.c.b16 %v1459, %v1458
      %v1505 = vpack.c.b16 %v1461, %v1460
      %v1506 = vpack.c.b16 %v1463, %v1462
      %v1507 = vpack.c.b16 %v1465, %v1464
      %v1508 = vpack.c.b16 %v1467, %v1466
      %v1509 = vpack.c.b16 %v1469, %v1468
      %v1510 = vpack.c.b16 %v1471, %v1470
      %v1511 = vpack.c.b16 %v1473, %v1472
      %v1512 = vpack.c.b16 %v1475, %v1474
      %v1513 = vpack.c.b16 %v1477, %v1476
      %v1514 = vpack.c.b16 %v1479, %v1478
      %v1515 = vpack.c.b16 %v1481, %v1480
      %v1516 = vpack.c.b16 %v1483, %v1482
      %v1517 = vpack.c.b16 %v1485, %v1484
      %v1518 = vpack.c.b16 %v1487, %v1486
      %v1519 = vpack.c.b16 %v1489, %v1488
      %v1520 = vpack.c.b16 %v1491, %v1490
      %v1521 = vpack.c.b16 %v1493, %v1492
      %v1522 = vpack.c.b16 %v1495, %v1494
      %v1523 = vpack.c.b16 %v1497, %v1496
      %v1524 = vpack.c.b16 %v1499, %v1498
      %v1525 = vpack.c.b16 %v1501, %v1500
      %1550 = vmatprep.subr.bf16.mxu0 0
      %1551 = vmatpush1.bf16.msra.mxu0 %v1509
      %1552 = vmatprep.subr.bf16.mxu0 0
      %1553 = vmatpush1.bf16.msra.mxu0 %v1508
      %1554 = vmatprep.subr.bf16.mxu0 0
      %1555 = vmatpush1.bf16.msra.mxu0 %v1507
      %1556 = vmatprep.subr.bf16.mxu0 0
      %1557 = vmatpush1.bf16.msra.mxu0 %v1506
      %1558 = vmatprep.subr.bf16.mxu0 0
      %1559 = vmatpush1.bf16.msra.mxu0 %v1505
      %1560 = vmatprep.subr.bf16.mxu0 0
      %1561 = vmatpush1.bf16.msra.mxu0 %v1504
      %1562 = vmatprep.subr.bf16.mxu0 0
      %1563 = vmatpush1.bf16.msra.mxu0 %v1503
      %1564 = vmatprep.subr.bf16.mxu0 0
      %1565 = vmatpush1.bf16.msra.mxu0 %v1502
      %1566 = vmatprep.subr.bf16.mxu0 0
      %1567 = vmatpush2.bf16.msra.mxu0 %v1517
      %1568 = vmatprep.subr.bf16.mxu0 0
      %1569 = vmatpush2.bf16.msra.mxu0 %v1516
      %1570 = vmatprep.subr.bf16.mxu0 0
      %1571 = vmatpush2.bf16.msra.mxu0 %v1515
      %1572 = vmatprep.subr.bf16.mxu0 0
      %1573 = vmatpush2.bf16.msra.mxu0 %v1514
      %1574 = vmatprep.subr.bf16.mxu0 0
      %1575 = vmatpush2.bf16.msra.mxu0 %v1513
      %1576 = vmatprep.subr.bf16.mxu0 0
      %1577 = vmatpush2.bf16.msra.mxu0 %v1512
      %1578 = vmatprep.subr.bf16.mxu0 0
      %1579 = vmatpush2.bf16.msra.mxu0 %v1511
      %1580 = vmatprep.subr.bf16.mxu0 0
      %1581 = vmatpush2.bf16.msra.mxu0 %v1510
      %1582 = vmatprep.mubr.bf16.mxu0 %v530
      %1583 = vmatmul.mubr.bf16.gmra.mxu0 %v484
      %v1584 = vpop.f32.mrf.mxu0
      %v1585 = vadd.f32 %v1280, %v1584
      %v1586 = vpop.f32.mrf.mxu0
      %v1587 = vpop.f32.mrf.mxu0
      %v1588 = vadd.f32 %v1283, %v1587
      %v1589 = vpop.f32.mrf.mxu0
      %1590 = vmatprep.mubr.bf16.mxu0 %v542
      %1591 = vmatmul.mubr.bf16.gmra.mxu0 %v485
      %v1592 = vpop.f32.mrf.mxu0
      %v1593 = vadd.f32 %v1288, %v1592
      %v1594 = vpop.f32.mrf.mxu0
      %v1595 = vpop.f32.mrf.mxu0
      %v1596 = vadd.f32 %v1291, %v1595
      %v1597 = vpop.f32.mrf.mxu0
      %1598 = vmatprep.mubr.bf16.mxu0 %v554
      %1599 = vmatmul.mubr.bf16.gmra.mxu0 %v486
      %v1600 = vpop.f32.mrf.mxu0
      %v1601 = vadd.f32 %v1296, %v1600
      %v1602 = vpop.f32.mrf.mxu0
      %v1603 = vpop.f32.mrf.mxu0
      %v1604 = vadd.f32 %v1299, %v1603
      %v1605 = vpop.f32.mrf.mxu0
      %1606 = vmatprep.mubr.bf16.mxu0 %v566
      %1607 = vmatmul.mubr.bf16.gmra.mxu0 %v487
      %v1608 = vpop.f32.mrf.mxu0
      %v1609 = vadd.f32 %v1304, %v1608
      %v1610 = vpop.f32.mrf.mxu0
      %v1611 = vpop.f32.mrf.mxu0
      %v1612 = vadd.f32 %v1307, %v1611
      %v1613 = vpop.f32.mrf.mxu0
      %1614 = vmatprep.mubr.bf16.mxu0 %v578
      %1615 = vmatmul.mubr.bf16.gmra.mxu0 %v488
      %v1616 = vpop.f32.mrf.mxu0
      %v1617 = vadd.f32 %v1312, %v1616
      %v1618 = vpop.f32.mrf.mxu0
      %v1619 = vpop.f32.mrf.mxu0
      %v1620 = vadd.f32 %v1315, %v1619
      %v1621 = vpop.f32.mrf.mxu0
      %1622 = vmatprep.mubr.bf16.mxu0 %v590
      %1623 = vmatmul.mubr.bf16.gmra.mxu0 %v489
      %v1624 = vpop.f32.mrf.mxu0
      %v1625 = vadd.f32 %v1320, %v1624
      %v1626 = vpop.f32.mrf.mxu0
      %v1627 = vpop.f32.mrf.mxu0
      %v1628 = vadd.f32 %v1323, %v1627
      %v1629 = vpop.f32.mrf.mxu0
      %1630 = vmatprep.mubr.bf16.mxu0 %v602
      %1631 = vmatmul.mubr.bf16.gmra.mxu0 %v490
      %v1632 = vpop.f32.mrf.mxu0
      %v1633 = vadd.f32 %v1328, %v1632
      %v1634 = vpop.f32.mrf.mxu0
      %v1635 = vpop.f32.mrf.mxu0
      %v1636 = vadd.f32 %v1331, %v1635
      %v1637 = vpop.f32.mrf.mxu0
      %1638 = vmatprep.mubr.bf16.mxu0 %v614
      %1639 = vmatmul.mubr.bf16.gmra.mxu0 %v491
      %v1640 = vpop.f32.mrf.mxu0
      %v1641 = vadd.f32 %v1336, %v1640
      %v1642 = vpop.f32.mrf.mxu0
      %v1643 = vpop.f32.mrf.mxu0
      %v1644 = vadd.f32 %v1339, %v1643
      %v1645 = vpop.f32.mrf.mxu0
      %1646 = vmatprep.mubr.bf16.mxu0 %v626
      %1647 = vmatmul.mubr.bf16.gmra.mxu0 %v492
      %v1648 = vpop.f32.mrf.mxu0
      %v1649 = vadd.f32 %v1344, %v1648
      %v1650 = vpop.f32.mrf.mxu0
      %v1651 = vpop.f32.mrf.mxu0
      %v1652 = vadd.f32 %v1347, %v1651
      %v1653 = vpop.f32.mrf.mxu0
      %1654 = vmatprep.mubr.bf16.mxu0 %v638
      %1655 = vmatmul.mubr.bf16.gmra.mxu0 %v493
      %v1656 = vpop.f32.mrf.mxu0
      %v1657 = vadd.f32 %v1352, %v1656
      %v1658 = vpop.f32.mrf.mxu0
      %v1659 = vpop.f32.mrf.mxu0
      %v1660 = vadd.f32 %v1355, %v1659
      %v1661 = vpop.f32.mrf.mxu0
      %1662 = vmatprep.mubr.bf16.mxu0 %v650
      %1663 = vmatmul.mubr.bf16.gmra.mxu0 %v494
      %v1664 = vpop.f32.mrf.mxu0
      %v1665 = vadd.f32 %v1360, %v1664
      %v1666 = vpop.f32.mrf.mxu0
      %v1667 = vpop.f32.mrf.mxu0
      %v1668 = vadd.f32 %v1363, %v1667
      %v1669 = vpop.f32.mrf.mxu0
      %1670 = vmatprep.mubr.bf16.mxu0 %v662
      %1671 = vmatmul.mubr.bf16.gmra.mxu0 %v495
      %v1672 = vpop.f32.mrf.mxu0
      %v1673 = vadd.f32 %v1368, %v1672
      %v1674 = vpop.f32.mrf.mxu0
      %v1675 = vpop.f32.mrf.mxu0
      %v1676 = vadd.f32 %v1371, %v1675
      %v1677 = vpop.f32.mrf.mxu0
      %1678 = vmatprep.mubr.bf16.mxu0 %v674
      %1679 = vmatmul.mubr.bf16.gmra.mxu0 %v496
      %v1680 = vpop.f32.mrf.mxu0
      %v1681 = vadd.f32 %v1376, %v1680
      %v1682 = vpop.f32.mrf.mxu0
      %v1683 = vpop.f32.mrf.mxu0
      %v1684 = vadd.f32 %v1379, %v1683
      %v1685 = vpop.f32.mrf.mxu0
      %1686 = vmatprep.mubr.bf16.mxu0 %v686
      %1687 = vmatmul.mubr.bf16.gmra.mxu0 %v497
      %v1688 = vpop.f32.mrf.mxu0
      %v1689 = vadd.f32 %v1384, %v1688
      %v1690 = vpop.f32.mrf.mxu0
      %v1691 = vpop.f32.mrf.mxu0
      %v1692 = vadd.f32 %v1387, %v1691
      %v1693 = vpop.f32.mrf.mxu0
      %1694 = vmatprep.mubr.bf16.mxu0 %v698
      %1695 = vmatmul.mubr.bf16.gmra.mxu0 %v498
      %v1696 = vpop.f32.mrf.mxu0
      %v1697 = vadd.f32 %v1392, %v1696
      %v1698 = vpop.f32.mrf.mxu0
      %v1699 = vpop.f32.mrf.mxu0
      %v1700 = vadd.f32 %v1395, %v1699
      %v1701 = vpop.f32.mrf.mxu0
      %1702 = vmatprep.mubr.bf16.mxu0 %v710
      %1703 = vmatmul.mubr.bf16.gmra.mxu0 %v499
      %v1704 = vpop.f32.mrf.mxu0
      %v1705 = vadd.f32 %v1400, %v1704
      %v1706 = vpop.f32.mrf.mxu0
      %v1707 = vpop.f32.mrf.mxu0
      %v1708 = vadd.f32 %v1403, %v1707
      %v1709 = vpop.f32.mrf.mxu0
      %1710 = vdwg.mxu0
      %1711 = vmatprep.subr.bf16.mxu0 0
      %1712 = vmatpush1.bf16.msra.mxu0 %v1525
      %1713 = vmatprep.subr.bf16.mxu0 0
      %1714 = vmatpush1.bf16.msra.mxu0 %v1524
      %1715 = vmatprep.subr.bf16.mxu0 0
      %1716 = vmatpush1.bf16.msra.mxu0 %v1523
      %1717 = vmatprep.subr.bf16.mxu0 0
      %1718 = vmatpush1.bf16.msra.mxu0 %v1522
      %1719 = vmatprep.subr.bf16.mxu0 0
      %1720 = vmatpush1.bf16.msra.mxu0 %v1521
      %1721 = vmatprep.subr.bf16.mxu0 0
      %1722 = vmatpush1.bf16.msra.mxu0 %v1520
      %1723 = vmatprep.subr.bf16.mxu0 0
      %1724 = vmatpush1.bf16.msra.mxu0 %v1519
      %1725 = vmatprep.subr.bf16.mxu0 0
      %1726 = vmatpush1.bf16.msra.mxu0 %v1518
      %1727 = vmatprep.subr.bf16.mxu0 0
      %1728 = vmatpush2.bf16.msra.mxu0 0
      %1729 = vmatprep.subr.bf16.mxu0 0
      %1730 = vmatpush2.bf16.msra.mxu0 0
      %1731 = vmatprep.subr.bf16.mxu0 0
      %1732 = vmatpush2.bf16.msra.mxu0 0
      %1733 = vmatprep.subr.bf16.mxu0 0
      %1734 = vmatpush2.bf16.msra.mxu0 0
      %1735 = vmatprep.subr.bf16.mxu0 0
      %1736 = vmatpush2.bf16.msra.mxu0 0
      %1737 = vmatprep.subr.bf16.mxu0 0
      %1738 = vmatpush2.bf16.msra.mxu0 0
      %1739 = vmatprep.subr.bf16.mxu0 0
      %1740 = vmatpush2.bf16.msra.mxu0 0
      %1741 = vmatprep.subr.bf16.mxu0 0
      %1742 = vmatpush2.bf16.msra.mxu0 0
      %1743 = vmatprep.mubr.bf16.mxu0 0
      %1744 = vmatmul.mubr.bf16.gmra.mxu0 %v762
      %v1745 = vpop.f32.mrf.mxu0
      %v1746 = vadd.f32 %v1585, %v1745
      %v1747 = vpop.f32.mrf.mxu0
      %v1748 = vpop.f32.mrf.mxu0
      %v1749 = vadd.f32 %v1588, %v1748
      %v1750 = vpop.f32.mrf.mxu0
      %1751 = vmatprep.mubr.bf16.mxu0 0
      %1752 = vmatmul.mubr.bf16.gmra.mxu0 %v765
      %v1753 = vpop.f32.mrf.mxu0
      %v1754 = vadd.f32 %v1593, %v1753
      %v1755 = vpop.f32.mrf.mxu0
      %v1756 = vpop.f32.mrf.mxu0
      %v1757 = vadd.f32 %v1596, %v1756
      %v1758 = vpop.f32.mrf.mxu0
      %1759 = vmatprep.mubr.bf16.mxu0 0
      %1760 = vmatmul.mubr.bf16.gmra.mxu0 %v768
      %v1761 = vpop.f32.mrf.mxu0
      %v1762 = vadd.f32 %v1601, %v1761
      %v1763 = vpop.f32.mrf.mxu0
      %v1764 = vpop.f32.mrf.mxu0
      %v1765 = vadd.f32 %v1604, %v1764
      %v1766 = vpop.f32.mrf.mxu0
      %1767 = vmatprep.mubr.bf16.mxu0 0
      %1768 = vmatmul.mubr.bf16.gmra.mxu0 %v771
      %v1769 = vpop.f32.mrf.mxu0
      %v1770 = vadd.f32 %v1609, %v1769
      %v1771 = vpop.f32.mrf.mxu0
      %v1772 = vpop.f32.mrf.mxu0
      %v1773 = vadd.f32 %v1612, %v1772
      %v1774 = vpop.f32.mrf.mxu0
      %1775 = vmatprep.mubr.bf16.mxu0 0
      %1776 = vmatmul.mubr.bf16.gmra.mxu0 %v774
      %v1777 = vpop.f32.mrf.mxu0
      %v1778 = vadd.f32 %v1617, %v1777
      %v1779 = vpop.f32.mrf.mxu0
      %v1780 = vpop.f32.mrf.mxu0
      %v1781 = vadd.f32 %v1620, %v1780
      %v1782 = vpop.f32.mrf.mxu0
      %1783 = vmatprep.mubr.bf16.mxu0 0
      %1784 = vmatmul.mubr.bf16.gmra.mxu0 %v777
      %v1785 = vpop.f32.mrf.mxu0
      %v1786 = vadd.f32 %v1625, %v1785
      %v1787 = vpop.f32.mrf.mxu0
      %v1788 = vpop.f32.mrf.mxu0
      %v1789 = vadd.f32 %v1628, %v1788
      %v1790 = vpop.f32.mrf.mxu0
      %1791 = vmatprep.mubr.bf16.mxu0 0
      %1792 = vmatmul.mubr.bf16.gmra.mxu0 %v780
      %v1793 = vpop.f32.mrf.mxu0
      %v1794 = vadd.f32 %v1633, %v1793
      %v1795 = vpop.f32.mrf.mxu0
      %v1796 = vpop.f32.mrf.mxu0
      %v1797 = vadd.f32 %v1636, %v1796
      %v1798 = vpop.f32.mrf.mxu0
      %1799 = vmatprep.mubr.bf16.mxu0 0
      %1800 = vmatmul.mubr.bf16.gmra.mxu0 %v783
      %v1801 = vpop.f32.mrf.mxu0
      %v1802 = vadd.f32 %v1641, %v1801
      %v1803 = vpop.f32.mrf.mxu0
      %v1804 = vpop.f32.mrf.mxu0
      %v1805 = vadd.f32 %v1644, %v1804
      %v1806 = vpop.f32.mrf.mxu0
      %1807 = vmatprep.mubr.bf16.mxu0 0
      %1808 = vmatmul.mubr.bf16.gmra.mxu0 %v786
      %v1809 = vpop.f32.mrf.mxu0
      %v1810 = vadd.f32 %v1649, %v1809
      %v1811 = vpop.f32.mrf.mxu0
      %v1812 = vpop.f32.mrf.mxu0
      %v1813 = vadd.f32 %v1652, %v1812
      %v1814 = vpop.f32.mrf.mxu0
      %1815 = vmatprep.mubr.bf16.mxu0 0
      %1816 = vmatmul.mubr.bf16.gmra.mxu0 %v789
      %v1817 = vpop.f32.mrf.mxu0
      %v1818 = vadd.f32 %v1657, %v1817
      %v1819 = vpop.f32.mrf.mxu0
      %v1820 = vpop.f32.mrf.mxu0
      %v1821 = vadd.f32 %v1660, %v1820
      %v1822 = vpop.f32.mrf.mxu0
      %1823 = vmatprep.mubr.bf16.mxu0 0
      %1824 = vmatmul.mubr.bf16.gmra.mxu0 %v792
      %v1825 = vpop.f32.mrf.mxu0
      %v1826 = vadd.f32 %v1665, %v1825
      %v1827 = vpop.f32.mrf.mxu0
      %v1828 = vpop.f32.mrf.mxu0
      %v1829 = vadd.f32 %v1668, %v1828
      %v1830 = vpop.f32.mrf.mxu0
      %1831 = vmatprep.mubr.bf16.mxu0 0
      %1832 = vmatmul.mubr.bf16.gmra.mxu0 %v795
      %v1833 = vpop.f32.mrf.mxu0
      %v1834 = vadd.f32 %v1673, %v1833
      %v1835 = vpop.f32.mrf.mxu0
      %v1836 = vpop.f32.mrf.mxu0
      %v1837 = vadd.f32 %v1676, %v1836
      %v1838 = vpop.f32.mrf.mxu0
      %1839 = vmatprep.mubr.bf16.mxu0 0
      %1840 = vmatmul.mubr.bf16.gmra.mxu0 %v798
      %v1841 = vpop.f32.mrf.mxu0
      %v1842 = vadd.f32 %v1681, %v1841
      %v1843 = vpop.f32.mrf.mxu0
      %v1844 = vpop.f32.mrf.mxu0
      %v1845 = vadd.f32 %v1684, %v1844
      %v1846 = vpop.f32.mrf.mxu0
      %1847 = vmatprep.mubr.bf16.mxu0 0
      %1848 = vmatmul.mubr.bf16.gmra.mxu0 %v801
      %v1849 = vpop.f32.mrf.mxu0
      %v1850 = vadd.f32 %v1689, %v1849
      %v1851 = vpop.f32.mrf.mxu0
      %v1852 = vpop.f32.mrf.mxu0
      %v1853 = vadd.f32 %v1692, %v1852
      %v1854 = vpop.f32.mrf.mxu0
      %1855 = vmatprep.mubr.bf16.mxu0 0
      %1856 = vmatmul.mubr.bf16.gmra.mxu0 %v804
      %v1857 = vpop.f32.mrf.mxu0
      %v1858 = vadd.f32 %v1697, %v1857
      %v1859 = vpop.f32.mrf.mxu0
      %v1860 = vpop.f32.mrf.mxu0
      %v1861 = vadd.f32 %v1700, %v1860
      %v1862 = vpop.f32.mrf.mxu0
      %1863 = vmatprep.mubr.bf16.mxu0 0
      %1864 = vmatmul.mubr.bf16.gmra.mxu0 %v807
      %v1865 = vpop.f32.mrf.mxu0
      %v1866 = vadd.f32 %v1705, %v1865
      %v1867 = vpop.f32.mrf.mxu0
      %v1868 = vpop.f32.mrf.mxu0
      %v1869 = vadd.f32 %v1708, %v1868
      %v1870 = vpop.f32.mrf.mxu0
      %1871 = vdwg.mxu0
      %s1872 = scalar_lea.vmem %s1, 384
      %v1873 = vld [vmem:[%s1872] sm:$0xf]
      %v1874 = vld [vmem:[%s1872 + $0x4] sm:$0xf]
      %v1875 = vld [vmem:[%s1872 + $0x8] sm:$0xf]
      %v1876 = vld [vmem:[%s1872 + $0xc] sm:$0xf]
      %v1877 = vld [vmem:[%s1872 + $0x10] sm:$0xf]
      %v1878 = vld [vmem:[%s1872 + $0x14] sm:$0xf]
      %v1879 = vld [vmem:[%s1872 + $0x18] sm:$0xf]
      %v1880 = vld [vmem:[%s1872 + $0x1c] sm:$0xf]
      %v1881 = vld [vmem:[%s1872 + $0x20] sm:$0xf]
      %v1882 = vld [vmem:[%s1872 + $0x24] sm:$0xf]
      %v1883 = vld [vmem:[%s1872 + $0x28] sm:$0xf]
      %v1884 = vld [vmem:[%s1872 + $0x2c] sm:$0xf]
      %v1885 = vld [vmem:[%s1872 + $0x30] sm:$0xf]
      %v1886 = vld [vmem:[%s1872 + $0x34] sm:$0xf]
      %v1887 = vld [vmem:[%s1872 + $0x38] sm:$0xf]
      %v1888 = vld [vmem:[%s1872 + $0x3c] sm:$0xf]
      %v1889 = vld [vmem:[%s1872 + $0x40] sm:$0xf]
      %v1890 = vld [vmem:[%s1872 + $0x44] sm:$0xf]
      %v1891 = vld [vmem:[%s1872 + $0x48] sm:$0xf]
      %v1892 = vld [vmem:[%s1872 + $0x4c] sm:$0xf]
      %v1893 = vld [vmem:[%s1872 + $0x50] sm:$0xf]
      %v1894 = vld [vmem:[%s1872 + $0x54] sm:$0xf]
      %v1895 = vld [vmem:[%s1872 + $0x58] sm:$0xf]
      %v1896 = vld [vmem:[%s1872 + $0x5c] sm:$0xf]
      %v1897 = vld [vmem:[%s1872 + $0x60] sm:$0xf]
      %v1898 = vld [vmem:[%s1872 + $0x64] sm:$0xf]
      %v1899 = vld [vmem:[%s1872 + $0x68] sm:$0xf]
      %v1900 = vld [vmem:[%s1872 + $0x6c] sm:$0xf]
      %v1901 = vld [vmem:[%s1872 + $0x70] sm:$0xf]
      %v1902 = vld [vmem:[%s1872 + $0x74] sm:$0xf]
      %v1903 = vld [vmem:[%s1872 + $0x78] sm:$0xf]
      %v1904 = vld [vmem:[%s1872 + $0x7c] sm:$0xf]
      %v1905 = vld [vmem:[%s1872 + $0x80] sm:$0xf]
      %v1906 = vld [vmem:[%s1872 + $0x84] sm:$0xf]
      %v1907 = vld [vmem:[%s1872 + $0x88] sm:$0xf]
      %v1908 = vld [vmem:[%s1872 + $0x8c] sm:$0xf]
      %v1909 = vld [vmem:[%s1872 + $0x90] sm:$0xf]
      %v1910 = vld [vmem:[%s1872 + $0x94] sm:$0xf]
      %v1911 = vld [vmem:[%s1872 + $0x98] sm:$0xf]
      %v1912 = vld [vmem:[%s1872 + $0x9c] sm:$0xf]
      %v1913 = vld [vmem:[%s1872 + $0xa0] sm:$0xf]
      %v1914 = vld [vmem:[%s1872 + $0xa4] sm:$0xf]
      %v1915 = vld [vmem:[%s1872 + $0xa8] sm:$0xf]
      %v1916 = vld [vmem:[%s1872 + $0xac] sm:$0xf]
      %v1917 = vld [vmem:[%s1872 + $0xb0] sm:$0xf]
      %v1918 = vld [vmem:[%s1872 + $0xb4] sm:$0xf]
      %v1919 = vld [vmem:[%s1872 + $0xb8] sm:$0xf]
      %v1920 = vld [vmem:[%s1872 + $0xbc] sm:$0xf]
      %v1969 = vunpack.c.l.b16 %v1873
      %v1970 = vunpack.c.l.b16 %v1874
      %v1971 = vunpack.c.l.b16 %v1875
      %v1972 = vunpack.c.l.b16 %v1876
      %v1973 = vunpack.c.l.b16 %v1877
      %v1974 = vunpack.c.l.b16 %v1878
      %v1975 = vunpack.c.l.b16 %v1879
      %v1976 = vunpack.c.l.b16 %v1880
      %v1977 = vunpack.c.l.b16 %v1881
      %v1978 = vunpack.c.l.b16 %v1882
      %v1979 = vunpack.c.l.b16 %v1883
      %v1980 = vunpack.c.l.b16 %v1884
      %v1981 = vunpack.c.l.b16 %v1885
      %v1982 = vunpack.c.l.b16 %v1886
      %v1983 = vunpack.c.l.b16 %v1887
      %v1984 = vunpack.c.l.b16 %v1888
      %v1985 = vunpack.c.l.b16 %v1889
      %v1986 = vunpack.c.l.b16 %v1890
      %v1987 = vunpack.c.l.b16 %v1891
      %v1988 = vunpack.c.l.b16 %v1892
      %v1989 = vunpack.c.l.b16 %v1893
      %v1990 = vunpack.c.l.b16 %v1894
      %v1991 = vunpack.c.l.b16 %v1895
      %v1992 = vunpack.c.l.b16 %v1896
      %v1993 = vunpack.c.l.b16 %v1897
      %v1994 = vunpack.c.l.b16 %v1898
      %v1995 = vunpack.c.l.b16 %v1899
      %v1996 = vunpack.c.l.b16 %v1900
      %v1997 = vunpack.c.l.b16 %v1901
      %v1998 = vunpack.c.l.b16 %v1902
      %v1999 = vunpack.c.l.b16 %v1903
      %v2000 = vunpack.c.l.b16 %v1904
      %v2001 = vunpack.c.l.b16 %v1905
      %v2002 = vunpack.c.l.b16 %v1906
      %v2003 = vunpack.c.l.b16 %v1907
      %v2004 = vunpack.c.l.b16 %v1908
      %v2005 = vunpack.c.l.b16 %v1909
      %v2006 = vunpack.c.l.b16 %v1910
      %v2007 = vunpack.c.l.b16 %v1911
      %v2008 = vunpack.c.l.b16 %v1912
      %v2009 = vunpack.c.l.b16 %v1913
      %v2010 = vunpack.c.l.b16 %v1914
      %v2011 = vunpack.c.l.b16 %v1915
      %v2012 = vunpack.c.l.b16 %v1916
      %v2013 = vunpack.c.l.b16 %v1917
      %v2014 = vunpack.c.l.b16 %v1918
      %v2015 = vunpack.c.l.b16 %v1919
      %v2016 = vunpack.c.l.b16 %v1920
      %v2017 = vpack.c.b16 %v1970, %v1969
      %v2018 = vpack.c.b16 %v1972, %v1971
      %v2019 = vpack.c.b16 %v1974, %v1973
      %v2020 = vpack.c.b16 %v1976, %v1975
      %v2021 = vpack.c.b16 %v1978, %v1977
      %v2022 = vpack.c.b16 %v1980, %v1979
      %v2023 = vpack.c.b16 %v1982, %v1981
      %v2024 = vpack.c.b16 %v1984, %v1983
      %v2025 = vpack.c.b16 %v1986, %v1985
      %v2026 = vpack.c.b16 %v1988, %v1987
      %v2027 = vpack.c.b16 %v1990, %v1989
      %v2028 = vpack.c.b16 %v1992, %v1991
      %v2029 = vpack.c.b16 %v1994, %v1993
      %v2030 = vpack.c.b16 %v1996, %v1995
      %v2031 = vpack.c.b16 %v1998, %v1997
      %v2032 = vpack.c.b16 %v2000, %v1999
      %v2033 = vpack.c.b16 %v2002, %v2001
      %v2034 = vpack.c.b16 %v2004, %v2003
      %v2035 = vpack.c.b16 %v2006, %v2005
      %v2036 = vpack.c.b16 %v2008, %v2007
      %v2037 = vpack.c.b16 %v2010, %v2009
      %v2038 = vpack.c.b16 %v2012, %v2011
      %v2039 = vpack.c.b16 %v2014, %v2013
      %v2040 = vpack.c.b16 %v2016, %v2015
      %2065 = vmatprep.subr.bf16.mxu0 0
      %2066 = vmatpush1.bf16.msra.mxu0 %v2024
      %2067 = vmatprep.subr.bf16.mxu0 0
      %2068 = vmatpush1.bf16.msra.mxu0 %v2023
      %2069 = vmatprep.subr.bf16.mxu0 0
      %2070 = vmatpush1.bf16.msra.mxu0 %v2022
      %2071 = vmatprep.subr.bf16.mxu0 0
      %2072 = vmatpush1.bf16.msra.mxu0 %v2021
      %2073 = vmatprep.subr.bf16.mxu0 0
      %2074 = vmatpush1.bf16.msra.mxu0 %v2020
      %2075 = vmatprep.subr.bf16.mxu0 0
      %2076 = vmatpush1.bf16.msra.mxu0 %v2019
      %2077 = vmatprep.subr.bf16.mxu0 0
      %2078 = vmatpush1.bf16.msra.mxu0 %v2018
      %2079 = vmatprep.subr.bf16.mxu0 0
      %2080 = vmatpush1.bf16.msra.mxu0 %v2017
      %2081 = vmatprep.subr.bf16.mxu0 0
      %2082 = vmatpush2.bf16.msra.mxu0 %v2032
      %2083 = vmatprep.subr.bf16.mxu0 0
      %2084 = vmatpush2.bf16.msra.mxu0 %v2031
      %2085 = vmatprep.subr.bf16.mxu0 0
      %2086 = vmatpush2.bf16.msra.mxu0 %v2030
      %2087 = vmatprep.subr.bf16.mxu0 0
      %2088 = vmatpush2.bf16.msra.mxu0 %v2029
      %2089 = vmatprep.subr.bf16.mxu0 0
      %2090 = vmatpush2.bf16.msra.mxu0 %v2028
      %2091 = vmatprep.subr.bf16.mxu0 0
      %2092 = vmatpush2.bf16.msra.mxu0 %v2027
      %2093 = vmatprep.subr.bf16.mxu0 0
      %2094 = vmatpush2.bf16.msra.mxu0 %v2026
      %2095 = vmatprep.subr.bf16.mxu0 0
      %2096 = vmatpush2.bf16.msra.mxu0 %v2025
      %2097 = vmatprep.mubr.bf16.mxu0 %v554
      %2098 = vmatmul.mubr.bf16.gmra.mxu0 %v486
      %v2099 = vpop.f32.mrf.mxu0
      %v2100 = vadd.f32 0.0, %v2099
      %v2101 = vpop.f32.mrf.mxu0
      %v2102 = vpop.f32.mrf.mxu0
      %v2103 = vadd.f32 0.0, %v2102
      %v2104 = vpop.f32.mrf.mxu0
      %2105 = vmatprep.mubr.bf16.mxu0 %v566
      %2106 = vmatmul.mubr.bf16.gmra.mxu0 %v487
      %v2107 = vpop.f32.mrf.mxu0
      %v2108 = vadd.f32 0.0, %v2107
      %v2109 = vpop.f32.mrf.mxu0
      %v2110 = vpop.f32.mrf.mxu0
      %v2111 = vadd.f32 0.0, %v2110
      %v2112 = vpop.f32.mrf.mxu0
      %2113 = vmatprep.mubr.bf16.mxu0 %v578
      %2114 = vmatmul.mubr.bf16.gmra.mxu0 %v488
      %v2115 = vpop.f32.mrf.mxu0
      %v2116 = vadd.f32 0.0, %v2115
      %v2117 = vpop.f32.mrf.mxu0
      %v2118 = vpop.f32.mrf.mxu0
      %v2119 = vadd.f32 0.0, %v2118
      %v2120 = vpop.f32.mrf.mxu0
      %2121 = vmatprep.mubr.bf16.mxu0 %v590
      %2122 = vmatmul.mubr.bf16.gmra.mxu0 %v489
      %v2123 = vpop.f32.mrf.mxu0
      %v2124 = vadd.f32 0.0, %v2123
      %v2125 = vpop.f32.mrf.mxu0
      %v2126 = vpop.f32.mrf.mxu0
      %v2127 = vadd.f32 0.0, %v2126
      %v2128 = vpop.f32.mrf.mxu0
      %2129 = vmatprep.mubr.bf16.mxu0 %v602
      %2130 = vmatmul.mubr.bf16.gmra.mxu0 %v490
      %v2131 = vpop.f32.mrf.mxu0
      %v2132 = vadd.f32 0.0, %v2131
      %v2133 = vpop.f32.mrf.mxu0
      %v2134 = vpop.f32.mrf.mxu0
      %v2135 = vadd.f32 0.0, %v2134
      %v2136 = vpop.f32.mrf.mxu0
      %2137 = vmatprep.mubr.bf16.mxu0 %v614
      %2138 = vmatmul.mubr.bf16.gmra.mxu0 %v491
      %v2139 = vpop.f32.mrf.mxu0
      %v2140 = vadd.f32 0.0, %v2139
      %v2141 = vpop.f32.mrf.mxu0
      %v2142 = vpop.f32.mrf.mxu0
      %v2143 = vadd.f32 0.0, %v2142
      %v2144 = vpop.f32.mrf.mxu0
      %2145 = vmatprep.mubr.bf16.mxu0 %v626
      %2146 = vmatmul.mubr.bf16.gmra.mxu0 %v492
      %v2147 = vpop.f32.mrf.mxu0
      %v2148 = vadd.f32 0.0, %v2147
      %v2149 = vpop.f32.mrf.mxu0
      %v2150 = vpop.f32.mrf.mxu0
      %v2151 = vadd.f32 0.0, %v2150
      %v2152 = vpop.f32.mrf.mxu0
      %2153 = vmatprep.mubr.bf16.mxu0 %v638
      %2154 = vmatmul.mubr.bf16.gmra.mxu0 %v493
      %v2155 = vpop.f32.mrf.mxu0
      %v2156 = vadd.f32 0.0, %v2155
      %v2157 = vpop.f32.mrf.mxu0
      %v2158 = vpop.f32.mrf.mxu0
      %v2159 = vadd.f32 0.0, %v2158
      %v2160 = vpop.f32.mrf.mxu0
      %2161 = vmatprep.mubr.bf16.mxu0 %v650
      %2162 = vmatmul.mubr.bf16.gmra.mxu0 %v494
      %v2163 = vpop.f32.mrf.mxu0
      %v2164 = vadd.f32 0.0, %v2163
      %v2165 = vpop.f32.mrf.mxu0
      %v2166 = vpop.f32.mrf.mxu0
      %v2167 = vadd.f32 0.0, %v2166
      %v2168 = vpop.f32.mrf.mxu0
      %2169 = vmatprep.mubr.bf16.mxu0 %v662
      %2170 = vmatmul.mubr.bf16.gmra.mxu0 %v495
      %v2171 = vpop.f32.mrf.mxu0
      %v2172 = vadd.f32 0.0, %v2171
      %v2173 = vpop.f32.mrf.mxu0
      %v2174 = vpop.f32.mrf.mxu0
      %v2175 = vadd.f32 0.0, %v2174
      %v2176 = vpop.f32.mrf.mxu0
      %2177 = vmatprep.mubr.bf16.mxu0 %v674
      %2178 = vmatmul.mubr.bf16.gmra.mxu0 %v496
      %v2179 = vpop.f32.mrf.mxu0
      %v2180 = vadd.f32 0.0, %v2179
      %v2181 = vpop.f32.mrf.mxu0
      %v2182 = vpop.f32.mrf.mxu0
      %v2183 = vadd.f32 0.0, %v2182
      %v2184 = vpop.f32.mrf.mxu0
      %2185 = vmatprep.mubr.bf16.mxu0 %v686
      %2186 = vmatmul.mubr.bf16.gmra.mxu0 %v497
      %v2187 = vpop.f32.mrf.mxu0
      %v2188 = vadd.f32 0.0, %v2187
      %v2189 = vpop.f32.mrf.mxu0
      %v2190 = vpop.f32.mrf.mxu0
      %v2191 = vadd.f32 0.0, %v2190
      %v2192 = vpop.f32.mrf.mxu0
      %2193 = vmatprep.mubr.bf16.mxu0 %v698
      %2194 = vmatmul.mubr.bf16.gmra.mxu0 %v498
      %v2195 = vpop.f32.mrf.mxu0
      %v2196 = vadd.f32 0.0, %v2195
      %v2197 = vpop.f32.mrf.mxu0
      %v2198 = vpop.f32.mrf.mxu0
      %v2199 = vadd.f32 0.0, %v2198
      %v2200 = vpop.f32.mrf.mxu0
      %2201 = vmatprep.mubr.bf16.mxu0 %v710
      %2202 = vmatmul.mubr.bf16.gmra.mxu0 %v499
      %v2203 = vpop.f32.mrf.mxu0
      %v2204 = vadd.f32 0.0, %v2203
      %v2205 = vpop.f32.mrf.mxu0
      %v2206 = vpop.f32.mrf.mxu0
      %v2207 = vadd.f32 0.0, %v2206
      %v2208 = vpop.f32.mrf.mxu0
      %2209 = vmatprep.mubr.bf16.mxu0 %v883
      %2210 = vmatmul.mubr.bf16.gmra.mxu0 %v500
      %v2211 = vpop.f32.mrf.mxu0
      %v2212 = vadd.f32 0.0, %v2211
      %v2213 = vpop.f32.mrf.mxu0
      %v2214 = vpop.f32.mrf.mxu0
      %v2215 = vadd.f32 0.0, %v2214
      %v2216 = vpop.f32.mrf.mxu0
      %2217 = vmatprep.mubr.bf16.mxu0 %v530
      %2218 = vmatmul.mubr.bf16.gmra.mxu0 %v484
      %v2219 = vpop.f32.mrf.mxu0
      %v2220 = vadd.f32 0.0, %v2219
      %v2221 = vpop.f32.mrf.mxu0
      %v2222 = vpop.f32.mrf.mxu0
      %v2223 = vadd.f32 0.0, %v2222
      %v2224 = vpop.f32.mrf.mxu0
      %2225 = vdwg.mxu0
      %2226 = vmatprep.subr.bf16.mxu0 0
      %2227 = vmatpush1.bf16.msra.mxu0 %v2040
      %2228 = vmatprep.subr.bf16.mxu0 0
      %2229 = vmatpush1.bf16.msra.mxu0 %v2039
      %2230 = vmatprep.subr.bf16.mxu0 0
      %2231 = vmatpush1.bf16.msra.mxu0 %v2038
      %2232 = vmatprep.subr.bf16.mxu0 0
      %2233 = vmatpush1.bf16.msra.mxu0 %v2037
      %2234 = vmatprep.subr.bf16.mxu0 0
      %2235 = vmatpush1.bf16.msra.mxu0 %v2036
      %2236 = vmatprep.subr.bf16.mxu0 0
      %2237 = vmatpush1.bf16.msra.mxu0 %v2035
      %2238 = vmatprep.subr.bf16.mxu0 0
      %2239 = vmatpush1.bf16.msra.mxu0 %v2034
      %2240 = vmatprep.subr.bf16.mxu0 0
      %2241 = vmatpush1.bf16.msra.mxu0 %v2033
      %2242 = vmatprep.subr.bf16.mxu0 0
      %2243 = vmatpush2.bf16.msra.mxu0 0
      %2244 = vmatprep.subr.bf16.mxu0 0
      %2245 = vmatpush2.bf16.msra.mxu0 0
      %2246 = vmatprep.subr.bf16.mxu0 0
      %2247 = vmatpush2.bf16.msra.mxu0 0
      %2248 = vmatprep.subr.bf16.mxu0 0
      %2249 = vmatpush2.bf16.msra.mxu0 0
      %2250 = vmatprep.subr.bf16.mxu0 0
      %2251 = vmatpush2.bf16.msra.mxu0 0
      %2252 = vmatprep.subr.bf16.mxu0 0
      %2253 = vmatpush2.bf16.msra.mxu0 0
      %2254 = vmatprep.subr.bf16.mxu0 0
      %2255 = vmatpush2.bf16.msra.mxu0 0
      %2256 = vmatprep.subr.bf16.mxu0 0
      %2257 = vmatpush2.bf16.msra.mxu0 0
      %2258 = vmatprep.mubr.bf16.mxu0 0
      %2259 = vmatmul.mubr.bf16.gmra.mxu0 %v768
      %v2260 = vpop.f32.mrf.mxu0
      %v2261 = vadd.f32 %v2100, %v2260
      %v2262 = vpop.f32.mrf.mxu0
      %v2263 = vpop.f32.mrf.mxu0
      %v2264 = vadd.f32 %v2103, %v2263
      %v2265 = vpop.f32.mrf.mxu0
      %2266 = vmatprep.mubr.bf16.mxu0 0
      %2267 = vmatmul.mubr.bf16.gmra.mxu0 %v771
      %v2268 = vpop.f32.mrf.mxu0
      %v2269 = vadd.f32 %v2108, %v2268
      %v2270 = vpop.f32.mrf.mxu0
      %v2271 = vpop.f32.mrf.mxu0
      %v2272 = vadd.f32 %v2111, %v2271
      %v2273 = vpop.f32.mrf.mxu0
      %2274 = vmatprep.mubr.bf16.mxu0 0
      %2275 = vmatmul.mubr.bf16.gmra.mxu0 %v774
      %v2276 = vpop.f32.mrf.mxu0
      %v2277 = vadd.f32 %v2116, %v2276
      %v2278 = vpop.f32.mrf.mxu0
      %v2279 = vpop.f32.mrf.mxu0
      %v2280 = vadd.f32 %v2119, %v2279
      %v2281 = vpop.f32.mrf.mxu0
      %2282 = vmatprep.mubr.bf16.mxu0 0
      %2283 = vmatmul.mubr.bf16.gmra.mxu0 %v777
      %v2284 = vpop.f32.mrf.mxu0
      %v2285 = vadd.f32 %v2124, %v2284
      %v2286 = vpop.f32.mrf.mxu0
      %v2287 = vpop.f32.mrf.mxu0
      %v2288 = vadd.f32 %v2127, %v2287
      %v2289 = vpop.f32.mrf.mxu0
      %2290 = vmatprep.mubr.bf16.mxu0 0
      %2291 = vmatmul.mubr.bf16.gmra.mxu0 %v780
      %v2292 = vpop.f32.mrf.mxu0
      %v2293 = vadd.f32 %v2132, %v2292
      %v2294 = vpop.f32.mrf.mxu0
      %v2295 = vpop.f32.mrf.mxu0
      %v2296 = vadd.f32 %v2135, %v2295
      %v2297 = vpop.f32.mrf.mxu0
      %2298 = vmatprep.mubr.bf16.mxu0 0
      %2299 = vmatmul.mubr.bf16.gmra.mxu0 %v783
      %v2300 = vpop.f32.mrf.mxu0
      %v2301 = vadd.f32 %v2140, %v2300
      %v2302 = vpop.f32.mrf.mxu0
      %v2303 = vpop.f32.mrf.mxu0
      %v2304 = vadd.f32 %v2143, %v2303
      %v2305 = vpop.f32.mrf.mxu0
      %2306 = vmatprep.mubr.bf16.mxu0 0
      %2307 = vmatmul.mubr.bf16.gmra.mxu0 %v786
      %v2308 = vpop.f32.mrf.mxu0
      %v2309 = vadd.f32 %v2148, %v2308
      %v2310 = vpop.f32.mrf.mxu0
      %v2311 = vpop.f32.mrf.mxu0
      %v2312 = vadd.f32 %v2151, %v2311
      %v2313 = vpop.f32.mrf.mxu0
      %2314 = vmatprep.mubr.bf16.mxu0 0
      %2315 = vmatmul.mubr.bf16.gmra.mxu0 %v789
      %v2316 = vpop.f32.mrf.mxu0
      %v2317 = vadd.f32 %v2156, %v2316
      %v2318 = vpop.f32.mrf.mxu0
      %v2319 = vpop.f32.mrf.mxu0
      %v2320 = vadd.f32 %v2159, %v2319
      %v2321 = vpop.f32.mrf.mxu0
      %2322 = vmatprep.mubr.bf16.mxu0 0
      %2323 = vmatmul.mubr.bf16.gmra.mxu0 %v792
      %v2324 = vpop.f32.mrf.mxu0
      %v2325 = vadd.f32 %v2164, %v2324
      %v2326 = vpop.f32.mrf.mxu0
      %v2327 = vpop.f32.mrf.mxu0
      %v2328 = vadd.f32 %v2167, %v2327
      %v2329 = vpop.f32.mrf.mxu0
      %2330 = vmatprep.mubr.bf16.mxu0 0
      %2331 = vmatmul.mubr.bf16.gmra.mxu0 %v795
      %v2332 = vpop.f32.mrf.mxu0
      %v2333 = vadd.f32 %v2172, %v2332
      %v2334 = vpop.f32.mrf.mxu0
      %v2335 = vpop.f32.mrf.mxu0
      %v2336 = vadd.f32 %v2175, %v2335
      %v2337 = vpop.f32.mrf.mxu0
      %2338 = vmatprep.mubr.bf16.mxu0 0
      %2339 = vmatmul.mubr.bf16.gmra.mxu0 %v798
      %v2340 = vpop.f32.mrf.mxu0
      %v2341 = vadd.f32 %v2180, %v2340
      %v2342 = vpop.f32.mrf.mxu0
      %v2343 = vpop.f32.mrf.mxu0
      %v2344 = vadd.f32 %v2183, %v2343
      %v2345 = vpop.f32.mrf.mxu0
      %2346 = vmatprep.mubr.bf16.mxu0 0
      %2347 = vmatmul.mubr.bf16.gmra.mxu0 %v801
      %v2348 = vpop.f32.mrf.mxu0
      %v2349 = vadd.f32 %v2188, %v2348
      %v2350 = vpop.f32.mrf.mxu0
      %v2351 = vpop.f32.mrf.mxu0
      %v2352 = vadd.f32 %v2191, %v2351
      %v2353 = vpop.f32.mrf.mxu0
      %2354 = vmatprep.mubr.bf16.mxu0 0
      %2355 = vmatmul.mubr.bf16.gmra.mxu0 %v804
      %v2356 = vpop.f32.mrf.mxu0
      %v2357 = vadd.f32 %v2196, %v2356
      %v2358 = vpop.f32.mrf.mxu0
      %v2359 = vpop.f32.mrf.mxu0
      %v2360 = vadd.f32 %v2199, %v2359
      %v2361 = vpop.f32.mrf.mxu0
      %2362 = vmatprep.mubr.bf16.mxu0 0
      %2363 = vmatmul.mubr.bf16.gmra.mxu0 %v807
      %v2364 = vpop.f32.mrf.mxu0
      %v2365 = vadd.f32 %v2204, %v2364
      %v2366 = vpop.f32.mrf.mxu0
      %v2367 = vpop.f32.mrf.mxu0
      %v2368 = vadd.f32 %v2207, %v2367
      %v2369 = vpop.f32.mrf.mxu0
      %2370 = vmatprep.mubr.bf16.mxu0 0
      %2371 = vmatmul.mubr.bf16.gmra.mxu0 %v889
      %v2372 = vpop.f32.mrf.mxu0
      %v2373 = vadd.f32 %v2212, %v2372
      %v2374 = vpop.f32.mrf.mxu0
      %v2375 = vpop.f32.mrf.mxu0
      %v2376 = vadd.f32 %v2215, %v2375
      %v2377 = vpop.f32.mrf.mxu0
      %2378 = vmatprep.mubr.bf16.mxu0 0
      %2379 = vmatmul.mubr.bf16.gmra.mxu0 %v762
      %v2380 = vpop.f32.mrf.mxu0
      %v2381 = vadd.f32 %v2220, %v2380
      %v2382 = vpop.f32.mrf.mxu0
      %v2383 = vpop.f32.mrf.mxu0
      %v2384 = vadd.f32 %v2223, %v2383
      %v2385 = vpop.f32.mrf.mxu0
      %2386 = vdwg.mxu0
      %v2387 = vadd.f32 %v1746, %v2261
      %v2388 = vadd.f32 %v1749, %v2264
      %v2389 = vadd.f32 %v1754, %v2269
      %v2390 = vadd.f32 %v1757, %v2272
      %v2391 = vadd.f32 %v1762, %v2277
      %v2392 = vadd.f32 %v1765, %v2280
      %v2393 = vadd.f32 %v1770, %v2285
      %v2394 = vadd.f32 %v1773, %v2288
      %v2395 = vadd.f32 %v1778, %v2293
      %v2396 = vadd.f32 %v1781, %v2296
      %v2397 = vadd.f32 %v1786, %v2301
      %v2398 = vadd.f32 %v1789, %v2304
      %v2399 = vadd.f32 %v1794, %v2309
      %v2400 = vadd.f32 %v1797, %v2312
      %v2401 = vadd.f32 %v1802, %v2317
      %v2402 = vadd.f32 %v1805, %v2320
      %v2403 = vadd.f32 %v1810, %v2325
      %v2404 = vadd.f32 %v1813, %v2328
      %v2405 = vadd.f32 %v1818, %v2333
      %v2406 = vadd.f32 %v1821, %v2336
      %v2407 = vadd.f32 %v1826, %v2341
      %v2408 = vadd.f32 %v1829, %v2344
      %v2409 = vadd.f32 %v1834, %v2349
      %v2410 = vadd.f32 %v1837, %v2352
      %v2411 = vadd.f32 %v1842, %v2357
      %v2412 = vadd.f32 %v1845, %v2360
      %v2413 = vadd.f32 %v1850, %v2365
      %v2414 = vadd.f32 %v1853, %v2368
      %v2415 = vadd.f32 %v1858, %v2373
      %v2416 = vadd.f32 %v1861, %v2376
      %v2417 = vadd.f32 %v1866, %v2381
      %v2418 = vadd.f32 %v1869, %v2384
      %v2419 = vld [vmem:[%s2] sm:$0x1]
      %v2421 = vlaneseq
      %v2422 = vshrl.u32 %v2421, 7
      %v2423 = vsub.s32 0, %v2422
      %v2424 = vrot.slane %v2419, %v2423
      %v2426 = vmul.f32 %v2387, %v2424
      %v2427 = vmul.f32 %v2388, %v2424
      %v2428 = vmul.f32 %v2389, %v2424
      %v2429 = vmul.f32 %v2390, %v2424
      %v2430 = vmul.f32 %v2391, %v2424
      %v2431 = vmul.f32 %v2392, %v2424
      %v2432 = vmul.f32 %v2393, %v2424
      %v2433 = vmul.f32 %v2394, %v2424
      %v2434 = vmul.f32 %v2395, %v2424
      %v2435 = vmul.f32 %v2396, %v2424
      %v2436 = vmul.f32 %v2397, %v2424
      %v2437 = vmul.f32 %v2398, %v2424
      %v2438 = vmul.f32 %v2399, %v2424
      %v2439 = vmul.f32 %v2400, %v2424
      %v2440 = vmul.f32 %v2401, %v2424
      %v2441 = vmul.f32 %v2402, %v2424
      %v2442 = vmul.f32 %v2403, %v2424
      %v2443 = vmul.f32 %v2404, %v2424
      %v2444 = vmul.f32 %v2405, %v2424
      %v2445 = vmul.f32 %v2406, %v2424
      %v2446 = vmul.f32 %v2407, %v2424
      %v2447 = vmul.f32 %v2408, %v2424
      %v2448 = vmul.f32 %v2409, %v2424
      %v2449 = vmul.f32 %v2410, %v2424
      %v2450 = vmul.f32 %v2411, %v2424
      %v2451 = vmul.f32 %v2412, %v2424
      %v2452 = vmul.f32 %v2413, %v2424
      %v2453 = vmul.f32 %v2414, %v2424
      %v2454 = vmul.f32 %v2415, %v2424
      %v2455 = vmul.f32 %v2416, %v2424
      %v2456 = vmul.f32 %v2417, %v2424
      %v2457 = vmul.f32 %v2418, %v2424
      %v2458 = vld [vmem:[%s3] sm:$0x1]
      %v2460 = vlaneseq
      %v2461 = vshrl.u32 %v2460, 7
      %v2462 = vsub.s32 0, %v2461
      %v2463 = vrot.slane %v2458, %v2462
      %v2465 = vadd.f32 %v2426, %v2463
      %v2466 = vadd.f32 %v2427, %v2463
      %v2467 = vadd.f32 %v2428, %v2463
      %v2468 = vadd.f32 %v2429, %v2463
      %v2469 = vadd.f32 %v2430, %v2463
      %v2470 = vadd.f32 %v2431, %v2463
      %v2471 = vadd.f32 %v2432, %v2463
      %v2472 = vadd.f32 %v2433, %v2463
      %v2473 = vadd.f32 %v2434, %v2463
      %v2474 = vadd.f32 %v2435, %v2463
      %v2475 = vadd.f32 %v2436, %v2463
      %v2476 = vadd.f32 %v2437, %v2463
      %v2477 = vadd.f32 %v2438, %v2463
      %v2478 = vadd.f32 %v2439, %v2463
      %v2479 = vadd.f32 %v2440, %v2463
      %v2480 = vadd.f32 %v2441, %v2463
      %v2481 = vadd.f32 %v2442, %v2463
      %v2482 = vadd.f32 %v2443, %v2463
      %v2483 = vadd.f32 %v2444, %v2463
      %v2484 = vadd.f32 %v2445, %v2463
      %v2485 = vadd.f32 %v2446, %v2463
      %v2486 = vadd.f32 %v2447, %v2463
      %v2487 = vadd.f32 %v2448, %v2463
      %v2488 = vadd.f32 %v2449, %v2463
      %v2489 = vadd.f32 %v2450, %v2463
      %v2490 = vadd.f32 %v2451, %v2463
      %v2491 = vadd.f32 %v2452, %v2463
      %v2492 = vadd.f32 %v2453, %v2463
      %v2493 = vadd.f32 %v2454, %v2463
      %v2494 = vadd.f32 %v2455, %v2463
      %v2495 = vadd.f32 %v2456, %v2463
      %v2496 = vadd.f32 %v2457, %v2463
      %v2497 = vmax.f32 %v2465, 0.0
      %v2498 = vmax.f32 %v2466, 0.0
      %v2499 = vmax.f32 %v2467, 0.0
      %v2500 = vmax.f32 %v2468, 0.0
      %v2501 = vmax.f32 %v2469, 0.0
      %v2502 = vmax.f32 %v2470, 0.0
      %v2503 = vmax.f32 %v2471, 0.0
      %v2504 = vmax.f32 %v2472, 0.0
      %v2505 = vmax.f32 %v2473, 0.0
      %v2506 = vmax.f32 %v2474, 0.0
      %v2507 = vmax.f32 %v2475, 0.0
      %v2508 = vmax.f32 %v2476, 0.0
      %v2509 = vmax.f32 %v2477, 0.0
      %v2510 = vmax.f32 %v2478, 0.0
      %v2511 = vmax.f32 %v2479, 0.0
      %v2512 = vmax.f32 %v2480, 0.0
      %v2513 = vmax.f32 %v2481, 0.0
      %v2514 = vmax.f32 %v2482, 0.0
      %v2515 = vmax.f32 %v2483, 0.0
      %v2516 = vmax.f32 %v2484, 0.0
      %v2517 = vmax.f32 %v2485, 0.0
      %v2518 = vmax.f32 %v2486, 0.0
      %v2519 = vmax.f32 %v2487, 0.0
      %v2520 = vmax.f32 %v2488, 0.0
      %v2521 = vmax.f32 %v2489, 0.0
      %v2522 = vmax.f32 %v2490, 0.0
      %v2523 = vmax.f32 %v2491, 0.0
      %v2524 = vmax.f32 %v2492, 0.0
      %v2525 = vmax.f32 %v2493, 0.0
      %v2526 = vmax.f32 %v2494, 0.0
      %v2527 = vmax.f32 %v2495, 0.0
      %v2528 = vmax.f32 %v2496, 0.0
      %v2529 = vpack.c.bf16 %v2498, %v2497
      %v2530 = vpack.c.bf16 %v2500, %v2499
      %v2531 = vpack.c.bf16 %v2502, %v2501
      %v2532 = vpack.c.bf16 %v2504, %v2503
      %v2533 = vpack.c.bf16 %v2506, %v2505
      %v2534 = vpack.c.bf16 %v2508, %v2507
      %v2535 = vpack.c.bf16 %v2510, %v2509
      %v2536 = vpack.c.bf16 %v2512, %v2511
      %v2537 = vpack.c.bf16 %v2514, %v2513
      %v2538 = vpack.c.bf16 %v2516, %v2515
      %v2539 = vpack.c.bf16 %v2518, %v2517
      %v2540 = vpack.c.bf16 %v2520, %v2519
      %v2541 = vpack.c.bf16 %v2522, %v2521
      %v2542 = vpack.c.bf16 %v2524, %v2523
      %v2543 = vpack.c.bf16 %v2526, %v2525
      %v2544 = vpack.c.bf16 %v2528, %v2527
      %v2546 = vshrl.u32 %v2529, 16
      %v2548 = vrot.slane %v2546, 7
      %v2549 = vshll.u32 %v2529, 16
      %v2551 = vor.u32 %v2548, %v2549
      %v2553 = vshrl.u32 %v2530, 16
      %v2555 = vrot.slane %v2553, 7
      %v2556 = vshll.u32 %v2530, 16
      %v2558 = vor.u32 %v2555, %v2556
      %v2560 = vshrl.u32 %v2531, 16
      %v2562 = vrot.slane %v2560, 7
      %v2563 = vshll.u32 %v2531, 16
      %v2565 = vor.u32 %v2562, %v2563
      %v2567 = vshrl.u32 %v2532, 16
      %v2569 = vrot.slane %v2567, 7
      %v2570 = vshll.u32 %v2532, 16
      %v2572 = vor.u32 %v2569, %v2570
      %v2574 = vshrl.u32 %v2533, 16
      %v2576 = vrot.slane %v2574, 7
      %v2577 = vshll.u32 %v2533, 16
      %v2579 = vor.u32 %v2576, %v2577
      %v2581 = vshrl.u32 %v2534, 16
      %v2583 = vrot.slane %v2581, 7
      %v2584 = vshll.u32 %v2534, 16
      %v2586 = vor.u32 %v2583, %v2584
      %v2588 = vshrl.u32 %v2535, 16
      %v2590 = vrot.slane %v2588, 7
      %v2591 = vshll.u32 %v2535, 16
      %v2593 = vor.u32 %v2590, %v2591
      %v2595 = vshrl.u32 %v2536, 16
      %v2597 = vrot.slane %v2595, 7
      %v2598 = vshll.u32 %v2536, 16
      %v2600 = vor.u32 %v2597, %v2598
      %v2602 = vshrl.u32 %v2537, 16
      %v2604 = vrot.slane %v2602, 7
      %v2605 = vshll.u32 %v2537, 16
      %v2607 = vor.u32 %v2604, %v2605
      %v2609 = vshrl.u32 %v2538, 16
      %v2611 = vrot.slane %v2609, 7
      %v2612 = vshll.u32 %v2538, 16
      %v2614 = vor.u32 %v2611, %v2612
      %v2616 = vshrl.u32 %v2539, 16
      %v2618 = vrot.slane %v2616, 7
      %v2619 = vshll.u32 %v2539, 16
      %v2621 = vor.u32 %v2618, %v2619
      %v2623 = vshrl.u32 %v2540, 16
      %v2625 = vrot.slane %v2623, 7
      %v2626 = vshll.u32 %v2540, 16
      %v2628 = vor.u32 %v2625, %v2626
      %v2630 = vshrl.u32 %v2541, 16
      %v2632 = vrot.slane %v2630, 7
      %v2633 = vshll.u32 %v2541, 16
      %v2635 = vor.u32 %v2632, %v2633
      %v2637 = vshrl.u32 %v2542, 16
      %v2639 = vrot.slane %v2637, 7
      %v2640 = vshll.u32 %v2542, 16
      %v2642 = vor.u32 %v2639, %v2640
      %v2644 = vshrl.u32 %v2543, 16
      %v2646 = vrot.slane %v2644, 7
      %v2647 = vshll.u32 %v2543, 16
      %v2649 = vor.u32 %v2646, %v2647
      %v2651 = vshrl.u32 %v2544, 16
      %v2653 = vrot.slane %v2651, 7
      %v2654 = vshll.u32 %v2544, 16
      %v2656 = vor.u32 %v2653, %v2654
      %v2689 = vsel %vm483, 0, %v2551
      %v2690 = vsel %vm483, 0, %v2558
      %v2691 = vsel %vm483, 0, %v2565
      %v2692 = vsel %vm483, 0, %v2572
      %v2693 = vsel %vm483, 0, %v2579
      %v2694 = vsel %vm483, 0, %v2586
      %v2695 = vsel %vm483, 0, %v2593
      %v2696 = vsel %vm483, 0, %v2600
      %v2697 = vsel %vm483, 0, %v2607
      %v2698 = vsel %vm483, 0, %v2614
      %v2699 = vsel %vm483, 0, %v2621
      %v2700 = vsel %vm483, 0, %v2628
      %v2701 = vsel %vm483, 0, %v2635
      %v2702 = vsel %vm483, 0, %v2642
      %v2703 = vsel %vm483, 0, %v2649
      %v2704 = vsel %vm483, 0, %v2656
      %v2705 = vsel %vm483, %v2548, 0
      %v2706 = vsel %vm483, %v2555, 0
      %v2707 = vsel %vm483, %v2562, 0
      %v2708 = vsel %vm483, %v2569, 0
      %v2709 = vsel %vm483, %v2576, 0
      %v2710 = vsel %vm483, %v2583, 0
      %v2711 = vsel %vm483, %v2590, 0
      %v2712 = vsel %vm483, %v2597, 0
      %v2713 = vsel %vm483, %v2604, 0
      %v2714 = vsel %vm483, %v2611, 0
      %v2715 = vsel %vm483, %v2618, 0
      %v2716 = vsel %vm483, %v2625, 0
      %v2717 = vsel %vm483, %v2632, 0
      %v2718 = vsel %vm483, %v2639, 0
      %v2719 = vsel %vm483, %v2646, 0
      %v2720 = vsel %vm483, %v2653, 0
      %v2722 = vshrl.u32 %v2689, 16
      %v2724 = vshll.u32 %v2689, 16
      %v2726 = vrot.slane %v2724, 1
      %v2727 = vor.u32 %v2722, %v2726
      %v2729 = vshll.u32 %v2705, 16
      %v2731 = vrot.slane %v2729, 1
      %v2732 = vsel %vm518, %v2727, %v2731
      %v2734 = vshrl.u32 %v2690, 16
      %v2736 = vshll.u32 %v2690, 16
      %v2738 = vrot.slane %v2736, 1
      %v2739 = vor.u32 %v2734, %v2738
      %v2741 = vshll.u32 %v2706, 16
      %v2743 = vrot.slane %v2741, 1
      %v2744 = vsel %vm518, %v2739, %v2743
      %v2746 = vshrl.u32 %v2691, 16
      %v2748 = vshll.u32 %v2691, 16
      %v2750 = vrot.slane %v2748, 1
      %v2751 = vor.u32 %v2746, %v2750
      %v2753 = vshll.u32 %v2707, 16
      %v2755 = vrot.slane %v2753, 1
      %v2756 = vsel %vm518, %v2751, %v2755
      %v2758 = vshrl.u32 %v2692, 16
      %v2760 = vshll.u32 %v2692, 16
      %v2762 = vrot.slane %v2760, 1
      %v2763 = vor.u32 %v2758, %v2762
      %v2765 = vshll.u32 %v2708, 16
      %v2767 = vrot.slane %v2765, 1
      %v2768 = vsel %vm518, %v2763, %v2767
      %v2770 = vshrl.u32 %v2693, 16
      %v2772 = vshll.u32 %v2693, 16
      %v2774 = vrot.slane %v2772, 1
      %v2775 = vor.u32 %v2770, %v2774
      %v2777 = vshll.u32 %v2709, 16
      %v2779 = vrot.slane %v2777, 1
      %v2780 = vsel %vm518, %v2775, %v2779
      %v2782 = vshrl.u32 %v2694, 16
      %v2784 = vshll.u32 %v2694, 16
      %v2786 = vrot.slane %v2784, 1
      %v2787 = vor.u32 %v2782, %v2786
      %v2789 = vshll.u32 %v2710, 16
      %v2791 = vrot.slane %v2789, 1
      %v2792 = vsel %vm518, %v2787, %v2791
      %v2794 = vshrl.u32 %v2695, 16
      %v2796 = vshll.u32 %v2695, 16
      %v2798 = vrot.slane %v2796, 1
      %v2799 = vor.u32 %v2794, %v2798
      %v2801 = vshll.u32 %v2711, 16
      %v2803 = vrot.slane %v2801, 1
      %v2804 = vsel %vm518, %v2799, %v2803
      %v2806 = vshrl.u32 %v2696, 16
      %v2808 = vshll.u32 %v2696, 16
      %v2810 = vrot.slane %v2808, 1
      %v2811 = vor.u32 %v2806, %v2810
      %v2813 = vshll.u32 %v2712, 16
      %v2815 = vrot.slane %v2813, 1
      %v2816 = vsel %vm518, %v2811, %v2815
      %v2818 = vshrl.u32 %v2697, 16
      %v2820 = vshll.u32 %v2697, 16
      %v2822 = vrot.slane %v2820, 1
      %v2823 = vor.u32 %v2818, %v2822
      %v2825 = vshll.u32 %v2713, 16
      %v2827 = vrot.slane %v2825, 1
      %v2828 = vsel %vm518, %v2823, %v2827
      %v2830 = vshrl.u32 %v2698, 16
      %v2832 = vshll.u32 %v2698, 16
      %v2834 = vrot.slane %v2832, 1
      %v2835 = vor.u32 %v2830, %v2834
      %v2837 = vshll.u32 %v2714, 16
      %v2839 = vrot.slane %v2837, 1
      %v2840 = vsel %vm518, %v2835, %v2839
      %v2842 = vshrl.u32 %v2699, 16
      %v2844 = vshll.u32 %v2699, 16
      %v2846 = vrot.slane %v2844, 1
      %v2847 = vor.u32 %v2842, %v2846
      %v2849 = vshll.u32 %v2715, 16
      %v2851 = vrot.slane %v2849, 1
      %v2852 = vsel %vm518, %v2847, %v2851
      %v2854 = vshrl.u32 %v2700, 16
      %v2856 = vshll.u32 %v2700, 16
      %v2858 = vrot.slane %v2856, 1
      %v2859 = vor.u32 %v2854, %v2858
      %v2861 = vshll.u32 %v2716, 16
      %v2863 = vrot.slane %v2861, 1
      %v2864 = vsel %vm518, %v2859, %v2863
      %v2866 = vshrl.u32 %v2701, 16
      %v2868 = vshll.u32 %v2701, 16
      %v2870 = vrot.slane %v2868, 1
      %v2871 = vor.u32 %v2866, %v2870
      %v2873 = vshll.u32 %v2717, 16
      %v2875 = vrot.slane %v2873, 1
      %v2876 = vsel %vm518, %v2871, %v2875
      %v2878 = vshrl.u32 %v2702, 16
      %v2880 = vshll.u32 %v2702, 16
      %v2882 = vrot.slane %v2880, 1
      %v2883 = vor.u32 %v2878, %v2882
      %v2885 = vshll.u32 %v2718, 16
      %v2887 = vrot.slane %v2885, 1
      %v2888 = vsel %vm518, %v2883, %v2887
      %v2890 = vshrl.u32 %v2703, 16
      %v2892 = vshll.u32 %v2703, 16
      %v2894 = vrot.slane %v2892, 1
      %v2895 = vor.u32 %v2890, %v2894
      %v2897 = vshll.u32 %v2719, 16
      %v2899 = vrot.slane %v2897, 1
      %v2900 = vsel %vm518, %v2895, %v2899
      %v2946 = vrot.slane %v2689, 1
      %v2947 = vrot.slane %v2705, 1
      %v2948 = vsel %vm759, %v2946, %v2947
      %v2949 = vrot.slane %v2690, 1
      %v2950 = vrot.slane %v2706, 1
      %v2951 = vsel %vm759, %v2949, %v2950
      %v2952 = vrot.slane %v2691, 1
      %v2953 = vrot.slane %v2707, 1
      %v2954 = vsel %vm759, %v2952, %v2953
      %v2955 = vrot.slane %v2692, 1
      %v2956 = vrot.slane %v2708, 1
      %v2957 = vsel %vm759, %v2955, %v2956
      %v2958 = vrot.slane %v2693, 1
      %v2959 = vrot.slane %v2709, 1
      %v2960 = vsel %vm759, %v2958, %v2959
      %v2961 = vrot.slane %v2694, 1
      %v2962 = vrot.slane %v2710, 1
      %v2963 = vsel %vm759, %v2961, %v2962
      %v2964 = vrot.slane %v2695, 1
      %v2965 = vrot.slane %v2711, 1
      %v2966 = vsel %vm759, %v2964, %v2965
      %v2967 = vrot.slane %v2696, 1
      %v2968 = vrot.slane %v2712, 1
      %v2969 = vsel %vm759, %v2967, %v2968
      %v2970 = vrot.slane %v2697, 1
      %v2971 = vrot.slane %v2713, 1
      %v2972 = vsel %vm759, %v2970, %v2971
      %v2973 = vrot.slane %v2698, 1
      %v2974 = vrot.slane %v2714, 1
      %v2975 = vsel %vm759, %v2973, %v2974
      %v2976 = vrot.slane %v2699, 1
      %v2977 = vrot.slane %v2715, 1
      %v2978 = vsel %vm759, %v2976, %v2977
      %v2979 = vrot.slane %v2700, 1
      %v2980 = vrot.slane %v2716, 1
      %v2981 = vsel %vm759, %v2979, %v2980
      %v2982 = vrot.slane %v2701, 1
      %v2983 = vrot.slane %v2717, 1
      %v2984 = vsel %vm759, %v2982, %v2983
      %v2985 = vrot.slane %v2702, 1
      %v2986 = vrot.slane %v2718, 1
      %v2987 = vsel %vm759, %v2985, %v2986
      %v2988 = vrot.slane %v2703, 1
      %v2989 = vrot.slane %v2719, 1
      %v2990 = vsel %vm759, %v2988, %v2989
      %v3006 = vld [vmem:[%s4] sm:$0xf]
      %v3007 = vld [vmem:[%s4 + $0x4] sm:$0xf]
      %v3008 = vld [vmem:[%s4 + $0x8] sm:$0xf]
      %v3009 = vld [vmem:[%s4 + $0xc] sm:$0xf]
      %v3010 = vld [vmem:[%s4 + $0x10] sm:$0xf]
      %v3011 = vld [vmem:[%s4 + $0x14] sm:$0xf]
      %v3012 = vld [vmem:[%s4 + $0x18] sm:$0xf]
      %v3013 = vld [vmem:[%s4 + $0x1c] sm:$0xf]
      %v3014 = vld [vmem:[%s4 + $0x20] sm:$0xf]
      %v3015 = vld [vmem:[%s4 + $0x24] sm:$0xf]
      %v3016 = vld [vmem:[%s4 + $0x28] sm:$0xf]
      %v3017 = vld [vmem:[%s4 + $0x2c] sm:$0xf]
      %v3018 = vld [vmem:[%s4 + $0x30] sm:$0xf]
      %v3019 = vld [vmem:[%s4 + $0x34] sm:$0xf]
      %v3020 = vld [vmem:[%s4 + $0x38] sm:$0xf]
      %v3021 = vld [vmem:[%s4 + $0x3c] sm:$0xf]
      %v3022 = vld [vmem:[%s4 + $0x40] sm:$0xf]
      %v3023 = vld [vmem:[%s4 + $0x44] sm:$0xf]
      %v3024 = vld [vmem:[%s4 + $0x48] sm:$0xf]
      %v3025 = vld [vmem:[%s4 + $0x4c] sm:$0xf]
      %v3026 = vld [vmem:[%s4 + $0x50] sm:$0xf]
      %v3027 = vld [vmem:[%s4 + $0x54] sm:$0xf]
      %v3028 = vld [vmem:[%s4 + $0x58] sm:$0xf]
      %v3029 = vld [vmem:[%s4 + $0x5c] sm:$0xf]
      %v3030 = vld [vmem:[%s4 + $0x60] sm:$0xf]
      %v3031 = vld [vmem:[%s4 + $0x64] sm:$0xf]
      %v3032 = vld [vmem:[%s4 + $0x68] sm:$0xf]
      %v3033 = vld [vmem:[%s4 + $0x6c] sm:$0xf]
      %v3034 = vld [vmem:[%s4 + $0x70] sm:$0xf]
      %v3035 = vld [vmem:[%s4 + $0x74] sm:$0xf]
      %v3036 = vld [vmem:[%s4 + $0x78] sm:$0xf]
      %v3037 = vld [vmem:[%s4 + $0x7c] sm:$0xf]
      %v3038 = vld [vmem:[%s4 + $0x80] sm:$0xf]
      %v3039 = vld [vmem:[%s4 + $0x84] sm:$0xf]
      %v3040 = vld [vmem:[%s4 + $0x88] sm:$0xf]
      %v3041 = vld [vmem:[%s4 + $0x8c] sm:$0xf]
      %v3042 = vld [vmem:[%s4 + $0x90] sm:$0xf]
      %v3043 = vld [vmem:[%s4 + $0x94] sm:$0xf]
      %v3044 = vld [vmem:[%s4 + $0x98] sm:$0xf]
      %v3045 = vld [vmem:[%s4 + $0x9c] sm:$0xf]
      %v3046 = vld [vmem:[%s4 + $0xa0] sm:$0xf]
      %v3047 = vld [vmem:[%s4 + $0xa4] sm:$0xf]
      %v3048 = vld [vmem:[%s4 + $0xa8] sm:$0xf]
      %v3049 = vld [vmem:[%s4 + $0xac] sm:$0xf]
      %v3050 = vld [vmem:[%s4 + $0xb0] sm:$0xf]
      %v3051 = vld [vmem:[%s4 + $0xb4] sm:$0xf]
      %v3052 = vld [vmem:[%s4 + $0xb8] sm:$0xf]
      %v3053 = vld [vmem:[%s4 + $0xbc] sm:$0xf]
      %v3055 = vshrl.u32 %v2704, 16
      %v3057 = vshll.u32 %v2704, 16
      %v3059 = vrot.slane %v3057, 1
      %v3060 = vor.u32 %v3055, %v3059
      %v3062 = vshll.u32 %v2720, 16
      %v3064 = vrot.slane %v3062, 1
      %v3065 = vsel %vm518, %v3060, %v3064
      %v3069 = vrot.slane %v2704, 1
      %v3070 = vrot.slane %v2720, 1
      %v3071 = vsel %vm759, %v3069, %v3070
      %s3073 = scalar_lea.vmem %s4, 192
      %v3074 = vld [vmem:[%s3073] sm:$0xf]
      %v3075 = vld [vmem:[%s3073 + $0x4] sm:$0xf]
      %v3076 = vld [vmem:[%s3073 + $0x8] sm:$0xf]
      %v3077 = vld [vmem:[%s3073 + $0xc] sm:$0xf]
      %v3078 = vld [vmem:[%s3073 + $0x10] sm:$0xf]
      %v3079 = vld [vmem:[%s3073 + $0x14] sm:$0xf]
      %v3080 = vld [vmem:[%s3073 + $0x18] sm:$0xf]
      %v3081 = vld [vmem:[%s3073 + $0x1c] sm:$0xf]
      %v3082 = vld [vmem:[%s3073 + $0x20] sm:$0xf]
      %v3083 = vld [vmem:[%s3073 + $0x24] sm:$0xf]
      %v3084 = vld [vmem:[%s3073 + $0x28] sm:$0xf]
      %v3085 = vld [vmem:[%s3073 + $0x2c] sm:$0xf]
      %v3086 = vld [vmem:[%s3073 + $0x30] sm:$0xf]
      %v3087 = vld [vmem:[%s3073 + $0x34] sm:$0xf]
      %v3088 = vld [vmem:[%s3073 + $0x38] sm:$0xf]
      %v3089 = vld [vmem:[%s3073 + $0x3c] sm:$0xf]
      %v3090 = vld [vmem:[%s3073 + $0x40] sm:$0xf]
      %v3091 = vld [vmem:[%s3073 + $0x44] sm:$0xf]
      %v3092 = vld [vmem:[%s3073 + $0x48] sm:$0xf]
      %v3093 = vld [vmem:[%s3073 + $0x4c] sm:$0xf]
      %v3094 = vld [vmem:[%s3073 + $0x50] sm:$0xf]
      %v3095 = vld [vmem:[%s3073 + $0x54] sm:$0xf]
      %v3096 = vld [vmem:[%s3073 + $0x58] sm:$0xf]
      %v3097 = vld [vmem:[%s3073 + $0x5c] sm:$0xf]
      %v3098 = vld [vmem:[%s3073 + $0x60] sm:$0xf]
      %v3099 = vld [vmem:[%s3073 + $0x64] sm:$0xf]
      %v3100 = vld [vmem:[%s3073 + $0x68] sm:$0xf]
      %v3101 = vld [vmem:[%s3073 + $0x6c] sm:$0xf]
      %v3102 = vld [vmem:[%s3073 + $0x70] sm:$0xf]
      %v3103 = vld [vmem:[%s3073 + $0x74] sm:$0xf]
      %v3104 = vld [vmem:[%s3073 + $0x78] sm:$0xf]
      %v3105 = vld [vmem:[%s3073 + $0x7c] sm:$0xf]
      %v3106 = vld [vmem:[%s3073 + $0x80] sm:$0xf]
      %v3107 = vld [vmem:[%s3073 + $0x84] sm:$0xf]
      %v3108 = vld [vmem:[%s3073 + $0x88] sm:$0xf]
      %v3109 = vld [vmem:[%s3073 + $0x8c] sm:$0xf]
      %v3110 = vld [vmem:[%s3073 + $0x90] sm:$0xf]
      %v3111 = vld [vmem:[%s3073 + $0x94] sm:$0xf]
      %v3112 = vld [vmem:[%s3073 + $0x98] sm:$0xf]
      %v3113 = vld [vmem:[%s3073 + $0x9c] sm:$0xf]
      %v3114 = vld [vmem:[%s3073 + $0xa0] sm:$0xf]
      %v3115 = vld [vmem:[%s3073 + $0xa4] sm:$0xf]
      %v3116 = vld [vmem:[%s3073 + $0xa8] sm:$0xf]
      %v3117 = vld [vmem:[%s3073 + $0xac] sm:$0xf]
      %v3118 = vld [vmem:[%s3073 + $0xb0] sm:$0xf]
      %v3119 = vld [vmem:[%s3073 + $0xb4] sm:$0xf]
      %v3120 = vld [vmem:[%s3073 + $0xb8] sm:$0xf]
      %v3121 = vld [vmem:[%s3073 + $0xbc] sm:$0xf]
      %v3170 = vunpack.c.l.b16 %v3074
      %v3171 = vunpack.c.l.b16 %v3075
      %v3172 = vunpack.c.l.b16 %v3076
      %v3173 = vunpack.c.l.b16 %v3077
      %v3174 = vunpack.c.l.b16 %v3078
      %v3175 = vunpack.c.l.b16 %v3079
      %v3176 = vunpack.c.l.b16 %v3080
      %v3177 = vunpack.c.l.b16 %v3081
      %v3178 = vunpack.c.l.b16 %v3082
      %v3179 = vunpack.c.l.b16 %v3083
      %v3180 = vunpack.c.l.b16 %v3084
      %v3181 = vunpack.c.l.b16 %v3085
      %v3182 = vunpack.c.l.b16 %v3086
      %v3183 = vunpack.c.l.b16 %v3087
      %v3184 = vunpack.c.l.b16 %v3088
      %v3185 = vunpack.c.l.b16 %v3089
      %v3186 = vunpack.c.l.b16 %v3090
      %v3187 = vunpack.c.l.b16 %v3091
      %v3188 = vunpack.c.l.b16 %v3092
      %v3189 = vunpack.c.l.b16 %v3093
      %v3190 = vunpack.c.l.b16 %v3094
      %v3191 = vunpack.c.l.b16 %v3095
      %v3192 = vunpack.c.l.b16 %v3096
      %v3193 = vunpack.c.l.b16 %v3097
      %v3194 = vunpack.c.l.b16 %v3098
      %v3195 = vunpack.c.l.b16 %v3099
      %v3196 = vunpack.c.l.b16 %v3100
      %v3197 = vunpack.c.l.b16 %v3101
      %v3198 = vunpack.c.l.b16 %v3102
      %v3199 = vunpack.c.l.b16 %v3103
      %v3200 = vunpack.c.l.b16 %v3104
      %v3201 = vunpack.c.l.b16 %v3105
      %v3202 = vunpack.c.l.b16 %v3106
      %v3203 = vunpack.c.l.b16 %v3107
      %v3204 = vunpack.c.l.b16 %v3108
      %v3205 = vunpack.c.l.b16 %v3109
      %v3206 = vunpack.c.l.b16 %v3110
      %v3207 = vunpack.c.l.b16 %v3111
      %v3208 = vunpack.c.l.b16 %v3112
      %v3209 = vunpack.c.l.b16 %v3113
      %v3210 = vunpack.c.l.b16 %v3114
      %v3211 = vunpack.c.l.b16 %v3115
      %v3212 = vunpack.c.l.b16 %v3116
      %v3213 = vunpack.c.l.b16 %v3117
      %v3214 = vunpack.c.l.b16 %v3118
      %v3215 = vunpack.c.l.b16 %v3119
      %v3216 = vunpack.c.l.b16 %v3120
      %v3217 = vunpack.c.l.b16 %v3121
      %v3218 = vpack.c.b16 %v3171, %v3170
      %v3219 = vpack.c.b16 %v3173, %v3172
      %v3220 = vpack.c.b16 %v3175, %v3174
      %v3221 = vpack.c.b16 %v3177, %v3176
      %v3222 = vpack.c.b16 %v3179, %v3178
      %v3223 = vpack.c.b16 %v3181, %v3180
      %v3224 = vpack.c.b16 %v3183, %v3182
      %v3225 = vpack.c.b16 %v3185, %v3184
      %v3226 = vpack.c.b16 %v3187, %v3186
      %v3227 = vpack.c.b16 %v3189, %v3188
      %v3228 = vpack.c.b16 %v3191, %v3190
      %v3229 = vpack.c.b16 %v3193, %v3192
      %v3230 = vpack.c.b16 %v3195, %v3194
      %v3231 = vpack.c.b16 %v3197, %v3196
      %v3232 = vpack.c.b16 %v3199, %v3198
      %v3233 = vpack.c.b16 %v3201, %v3200
      %v3234 = vpack.c.b16 %v3203, %v3202
      %v3235 = vpack.c.b16 %v3205, %v3204
      %v3236 = vpack.c.b16 %v3207, %v3206
      %v3237 = vpack.c.b16 %v3209, %v3208
      %v3238 = vpack.c.b16 %v3211, %v3210
      %v3239 = vpack.c.b16 %v3213, %v3212
      %v3240 = vpack.c.b16 %v3215, %v3214
      %v3241 = vpack.c.b16 %v3217, %v3216
      %3266 = vmatprep.subr.bf16.mxu0 0
      %3267 = vmatpush1.bf16.msra.mxu0 %v3225
      %3268 = vmatprep.subr.bf16.mxu0 0
      %3269 = vmatpush1.bf16.msra.mxu0 %v3224
      %3270 = vmatprep.subr.bf16.mxu0 0
      %3271 = vmatpush1.bf16.msra.mxu0 %v3223
      %3272 = vmatprep.subr.bf16.mxu0 0
      %3273 = vmatpush1.bf16.msra.mxu0 %v3222
      %3274 = vmatprep.subr.bf16.mxu0 0
      %3275 = vmatpush1.bf16.msra.mxu0 %v3221
      %3276 = vmatprep.subr.bf16.mxu0 0
      %3277 = vmatpush1.bf16.msra.mxu0 %v3220
      %3278 = vmatprep.subr.bf16.mxu0 0
      %3279 = vmatpush1.bf16.msra.mxu0 %v3219
      %3280 = vmatprep.subr.bf16.mxu0 0
      %3281 = vmatpush1.bf16.msra.mxu0 %v3218
      %3282 = vmatprep.subr.bf16.mxu0 0
      %3283 = vmatpush2.bf16.msra.mxu0 %v3233
      %3284 = vmatprep.subr.bf16.mxu0 0
      %3285 = vmatpush2.bf16.msra.mxu0 %v3232
      %3286 = vmatprep.subr.bf16.mxu0 0
      %3287 = vmatpush2.bf16.msra.mxu0 %v3231
      %3288 = vmatprep.subr.bf16.mxu0 0
      %3289 = vmatpush2.bf16.msra.mxu0 %v3230
      %3290 = vmatprep.subr.bf16.mxu0 0
      %3291 = vmatpush2.bf16.msra.mxu0 %v3229
      %3292 = vmatprep.subr.bf16.mxu0 0
      %3293 = vmatpush2.bf16.msra.mxu0 %v3228
      %3294 = vmatprep.subr.bf16.mxu0 0
      %3295 = vmatpush2.bf16.msra.mxu0 %v3227
      %3296 = vmatprep.subr.bf16.mxu0 0
      %3297 = vmatpush2.bf16.msra.mxu0 %v3226
      %3298 = vmatprep.mubr.bf16.mxu0 %v2732
      %3299 = vmatmul.mubr.bf16.gmra.mxu0 %v2689
      %v3300 = vpop.f32.mrf.mxu0
      %v3301 = vadd.f32 0.0, %v3300
      %v3302 = vpop.f32.mrf.mxu0
      %v3303 = vpop.f32.mrf.mxu0
      %v3304 = vadd.f32 0.0, %v3303
      %v3305 = vpop.f32.mrf.mxu0
      %3306 = vmatprep.mubr.bf16.mxu0 %v2744
      %3307 = vmatmul.mubr.bf16.gmra.mxu0 %v2690
      %v3308 = vpop.f32.mrf.mxu0
      %v3309 = vadd.f32 0.0, %v3308
      %v3310 = vpop.f32.mrf.mxu0
      %v3311 = vpop.f32.mrf.mxu0
      %v3312 = vadd.f32 0.0, %v3311
      %v3313 = vpop.f32.mrf.mxu0
      %3314 = vmatprep.mubr.bf16.mxu0 %v2756
      %3315 = vmatmul.mubr.bf16.gmra.mxu0 %v2691
      %v3316 = vpop.f32.mrf.mxu0
      %v3317 = vadd.f32 0.0, %v3316
      %v3318 = vpop.f32.mrf.mxu0
      %v3319 = vpop.f32.mrf.mxu0
      %v3320 = vadd.f32 0.0, %v3319
      %v3321 = vpop.f32.mrf.mxu0
      %3322 = vmatprep.mubr.bf16.mxu0 %v2768
      %3323 = vmatmul.mubr.bf16.gmra.mxu0 %v2692
      %v3324 = vpop.f32.mrf.mxu0
      %v3325 = vadd.f32 0.0, %v3324
      %v3326 = vpop.f32.mrf.mxu0
      %v3327 = vpop.f32.mrf.mxu0
      %v3328 = vadd.f32 0.0, %v3327
      %v3329 = vpop.f32.mrf.mxu0
      %3330 = vmatprep.mubr.bf16.mxu0 %v2780
      %3331 = vmatmul.mubr.bf16.gmra.mxu0 %v2693
      %v3332 = vpop.f32.mrf.mxu0
      %v3333 = vadd.f32 0.0, %v3332
      %v3334 = vpop.f32.mrf.mxu0
      %v3335 = vpop.f32.mrf.mxu0
      %v3336 = vadd.f32 0.0, %v3335
      %v3337 = vpop.f32.mrf.mxu0
      %3338 = vmatprep.mubr.bf16.mxu0 %v2792
      %3339 = vmatmul.mubr.bf16.gmra.mxu0 %v2694
      %v3340 = vpop.f32.mrf.mxu0
      %v3341 = vadd.f32 0.0, %v3340
      %v3342 = vpop.f32.mrf.mxu0
      %v3343 = vpop.f32.mrf.mxu0
      %v3344 = vadd.f32 0.0, %v3343
      %v3345 = vpop.f32.mrf.mxu0
      %3346 = vmatprep.mubr.bf16.mxu0 %v2804
      %3347 = vmatmul.mubr.bf16.gmra.mxu0 %v2695
      %v3348 = vpop.f32.mrf.mxu0
      %v3349 = vadd.f32 0.0, %v3348
      %v3350 = vpop.f32.mrf.mxu0
      %v3351 = vpop.f32.mrf.mxu0
      %v3352 = vadd.f32 0.0, %v3351
      %v3353 = vpop.f32.mrf.mxu0
      %3354 = vmatprep.mubr.bf16.mxu0 %v2816
      %3355 = vmatmul.mubr.bf16.gmra.mxu0 %v2696
      %v3356 = vpop.f32.mrf.mxu0
      %v3357 = vadd.f32 0.0, %v3356
      %v3358 = vpop.f32.mrf.mxu0
      %v3359 = vpop.f32.mrf.mxu0
      %v3360 = vadd.f32 0.0, %v3359
      %v3361 = vpop.f32.mrf.mxu0
      %3362 = vmatprep.mubr.bf16.mxu0 %v2828
      %3363 = vmatmul.mubr.bf16.gmra.mxu0 %v2697
      %v3364 = vpop.f32.mrf.mxu0
      %v3365 = vadd.f32 0.0, %v3364
      %v3366 = vpop.f32.mrf.mxu0
      %v3367 = vpop.f32.mrf.mxu0
      %v3368 = vadd.f32 0.0, %v3367
      %v3369 = vpop.f32.mrf.mxu0
      %3370 = vmatprep.mubr.bf16.mxu0 %v2840
      %3371 = vmatmul.mubr.bf16.gmra.mxu0 %v2698
      %v3372 = vpop.f32.mrf.mxu0
      %v3373 = vadd.f32 0.0, %v3372
      %v3374 = vpop.f32.mrf.mxu0
      %v3375 = vpop.f32.mrf.mxu0
      %v3376 = vadd.f32 0.0, %v3375
      %v3377 = vpop.f32.mrf.mxu0
      %3378 = vmatprep.mubr.bf16.mxu0 %v2852
      %3379 = vmatmul.mubr.bf16.gmra.mxu0 %v2699
      %v3380 = vpop.f32.mrf.mxu0
      %v3381 = vadd.f32 0.0, %v3380
      %v3382 = vpop.f32.mrf.mxu0
      %v3383 = vpop.f32.mrf.mxu0
      %v3384 = vadd.f32 0.0, %v3383
      %v3385 = vpop.f32.mrf.mxu0
      %3386 = vmatprep.mubr.bf16.mxu0 %v2864
      %3387 = vmatmul.mubr.bf16.gmra.mxu0 %v2700
      %v3388 = vpop.f32.mrf.mxu0
      %v3389 = vadd.f32 0.0, %v3388
      %v3390 = vpop.f32.mrf.mxu0
      %v3391 = vpop.f32.mrf.mxu0
      %v3392 = vadd.f32 0.0, %v3391
      %v3393 = vpop.f32.mrf.mxu0
      %3394 = vmatprep.mubr.bf16.mxu0 %v2876
      %3395 = vmatmul.mubr.bf16.gmra.mxu0 %v2701
      %v3396 = vpop.f32.mrf.mxu0
      %v3397 = vadd.f32 0.0, %v3396
      %v3398 = vpop.f32.mrf.mxu0
      %v3399 = vpop.f32.mrf.mxu0
      %v3400 = vadd.f32 0.0, %v3399
      %v3401 = vpop.f32.mrf.mxu0
      %3402 = vmatprep.mubr.bf16.mxu0 %v2888
      %3403 = vmatmul.mubr.bf16.gmra.mxu0 %v2702
      %v3404 = vpop.f32.mrf.mxu0
      %v3405 = vadd.f32 0.0, %v3404
      %v3406 = vpop.f32.mrf.mxu0
      %v3407 = vpop.f32.mrf.mxu0
      %v3408 = vadd.f32 0.0, %v3407
      %v3409 = vpop.f32.mrf.mxu0
      %3410 = vmatprep.mubr.bf16.mxu0 %v2900
      %3411 = vmatmul.mubr.bf16.gmra.mxu0 %v2703
      %v3412 = vpop.f32.mrf.mxu0
      %v3413 = vadd.f32 0.0, %v3412
      %v3414 = vpop.f32.mrf.mxu0
      %v3415 = vpop.f32.mrf.mxu0
      %v3416 = vadd.f32 0.0, %v3415
      %v3417 = vpop.f32.mrf.mxu0
      %3418 = vmatprep.mubr.bf16.mxu0 %v3065
      %3419 = vmatmul.mubr.bf16.gmra.mxu0 %v2704
      %v3420 = vpop.f32.mrf.mxu0
      %v3421 = vadd.f32 0.0, %v3420
      %v3422 = vpop.f32.mrf.mxu0
      %v3423 = vpop.f32.mrf.mxu0
      %v3424 = vadd.f32 0.0, %v3423
      %v3425 = vpop.f32.mrf.mxu0
      %3426 = vdwg.mxu0
      %3427 = vmatprep.subr.bf16.mxu0 0
      %3428 = vmatpush1.bf16.msra.mxu0 %v3241
      %3429 = vmatprep.subr.bf16.mxu0 0
      %3430 = vmatpush1.bf16.msra.mxu0 %v3240
      %3431 = vmatprep.subr.bf16.mxu0 0
      %3432 = vmatpush1.bf16.msra.mxu0 %v3239
      %3433 = vmatprep.subr.bf16.mxu0 0
      %3434 = vmatpush1.bf16.msra.mxu0 %v3238
      %3435 = vmatprep.subr.bf16.mxu0 0
      %3436 = vmatpush1.bf16.msra.mxu0 %v3237
      %3437 = vmatprep.subr.bf16.mxu0 0
      %3438 = vmatpush1.bf16.msra.mxu0 %v3236
      %3439 = vmatprep.subr.bf16.mxu0 0
      %3440 = vmatpush1.bf16.msra.mxu0 %v3235
      %3441 = vmatprep.subr.bf16.mxu0 0
      %3442 = vmatpush1.bf16.msra.mxu0 %v3234
      %3443 = vmatprep.subr.bf16.mxu0 0
      %3444 = vmatpush2.bf16.msra.mxu0 0
      %3445 = vmatprep.subr.bf16.mxu0 0
      %3446 = vmatpush2.bf16.msra.mxu0 0
      %3447 = vmatprep.subr.bf16.mxu0 0
      %3448 = vmatpush2.bf16.msra.mxu0 0
      %3449 = vmatprep.subr.bf16.mxu0 0
      %3450 = vmatpush2.bf16.msra.mxu0 0
      %3451 = vmatprep.subr.bf16.mxu0 0
      %3452 = vmatpush2.bf16.msra.mxu0 0
      %3453 = vmatprep.subr.bf16.mxu0 0
      %3454 = vmatpush2.bf16.msra.mxu0 0
      %3455 = vmatprep.subr.bf16.mxu0 0
      %3456 = vmatpush2.bf16.msra.mxu0 0
      %3457 = vmatprep.subr.bf16.mxu0 0
      %3458 = vmatpush2.bf16.msra.mxu0 0
      %3459 = vmatprep.mubr.bf16.mxu0 0
      %3460 = vmatmul.mubr.bf16.gmra.mxu0 %v2948
      %v3461 = vpop.f32.mrf.mxu0
      %v3462 = vadd.f32 %v3301, %v3461
      %v3463 = vpop.f32.mrf.mxu0
      %v3464 = vpop.f32.mrf.mxu0
      %v3465 = vadd.f32 %v3304, %v3464
      %v3466 = vpop.f32.mrf.mxu0
      %3467 = vmatprep.mubr.bf16.mxu0 0
      %3468 = vmatmul.mubr.bf16.gmra.mxu0 %v2951
      %v3469 = vpop.f32.mrf.mxu0
      %v3470 = vadd.f32 %v3309, %v3469
      %v3471 = vpop.f32.mrf.mxu0
      %v3472 = vpop.f32.mrf.mxu0
      %v3473 = vadd.f32 %v3312, %v3472
      %v3474 = vpop.f32.mrf.mxu0
      %3475 = vmatprep.mubr.bf16.mxu0 0
      %3476 = vmatmul.mubr.bf16.gmra.mxu0 %v2954
      %v3477 = vpop.f32.mrf.mxu0
      %v3478 = vadd.f32 %v3317, %v3477
      %v3479 = vpop.f32.mrf.mxu0
      %v3480 = vpop.f32.mrf.mxu0
      %v3481 = vadd.f32 %v3320, %v3480
      %v3482 = vpop.f32.mrf.mxu0
      %3483 = vmatprep.mubr.bf16.mxu0 0
      %3484 = vmatmul.mubr.bf16.gmra.mxu0 %v2957
      %v3485 = vpop.f32.mrf.mxu0
      %v3486 = vadd.f32 %v3325, %v3485
      %v3487 = vpop.f32.mrf.mxu0
      %v3488 = vpop.f32.mrf.mxu0
      %v3489 = vadd.f32 %v3328, %v3488
      %v3490 = vpop.f32.mrf.mxu0
      %3491 = vmatprep.mubr.bf16.mxu0 0
      %3492 = vmatmul.mubr.bf16.gmra.mxu0 %v2960
      %v3493 = vpop.f32.mrf.mxu0
      %v3494 = vadd.f32 %v3333, %v3493
      %v3495 = vpop.f32.mrf.mxu0
      %v3496 = vpop.f32.mrf.mxu0
      %v3497 = vadd.f32 %v3336, %v3496
      %v3498 = vpop.f32.mrf.mxu0
      %3499 = vmatprep.mubr.bf16.mxu0 0
      %3500 = vmatmul.mubr.bf16.gmra.mxu0 %v2963
      %v3501 = vpop.f32.mrf.mxu0
      %v3502 = vadd.f32 %v3341, %v3501
      %v3503 = vpop.f32.mrf.mxu0
      %v3504 = vpop.f32.mrf.mxu0
      %v3505 = vadd.f32 %v3344, %v3504
      %v3506 = vpop.f32.mrf.mxu0
      %3507 = vmatprep.mubr.bf16.mxu0 0
      %3508 = vmatmul.mubr.bf16.gmra.mxu0 %v2966
      %v3509 = vpop.f32.mrf.mxu0
      %v3510 = vadd.f32 %v3349, %v3509
      %v3511 = vpop.f32.mrf.mxu0
      %v3512 = vpop.f32.mrf.mxu0
      %v3513 = vadd.f32 %v3352, %v3512
      %v3514 = vpop.f32.mrf.mxu0
      %3515 = vmatprep.mubr.bf16.mxu0 0
      %3516 = vmatmul.mubr.bf16.gmra.mxu0 %v2969
      %v3517 = vpop.f32.mrf.mxu0
      %v3518 = vadd.f32 %v3357, %v3517
      %v3519 = vpop.f32.mrf.mxu0
      %v3520 = vpop.f32.mrf.mxu0
      %v3521 = vadd.f32 %v3360, %v3520
      %v3522 = vpop.f32.mrf.mxu0
      %3523 = vmatprep.mubr.bf16.mxu0 0
      %3524 = vmatmul.mubr.bf16.gmra.mxu0 %v2972
      %v3525 = vpop.f32.mrf.mxu0
      %v3526 = vadd.f32 %v3365, %v3525
      %v3527 = vpop.f32.mrf.mxu0
      %v3528 = vpop.f32.mrf.mxu0
      %v3529 = vadd.f32 %v3368, %v3528
      %v3530 = vpop.f32.mrf.mxu0
      %3531 = vmatprep.mubr.bf16.mxu0 0
      %3532 = vmatmul.mubr.bf16.gmra.mxu0 %v2975
      %v3533 = vpop.f32.mrf.mxu0
      %v3534 = vadd.f32 %v3373, %v3533
      %v3535 = vpop.f32.mrf.mxu0
      %v3536 = vpop.f32.mrf.mxu0
      %v3537 = vadd.f32 %v3376, %v3536
      %v3538 = vpop.f32.mrf.mxu0
      %3539 = vmatprep.mubr.bf16.mxu0 0
      %3540 = vmatmul.mubr.bf16.gmra.mxu0 %v2978
      %v3541 = vpop.f32.mrf.mxu0
      %v3542 = vadd.f32 %v3381, %v3541
      %v3543 = vpop.f32.mrf.mxu0
      %v3544 = vpop.f32.mrf.mxu0
      %v3545 = vadd.f32 %v3384, %v3544
      %v3546 = vpop.f32.mrf.mxu0
      %3547 = vmatprep.mubr.bf16.mxu0 0
      %3548 = vmatmul.mubr.bf16.gmra.mxu0 %v2981
      %v3549 = vpop.f32.mrf.mxu0
      %v3550 = vadd.f32 %v3389, %v3549
      %v3551 = vpop.f32.mrf.mxu0
      %v3552 = vpop.f32.mrf.mxu0
      %v3553 = vadd.f32 %v3392, %v3552
      %v3554 = vpop.f32.mrf.mxu0
      %3555 = vmatprep.mubr.bf16.mxu0 0
      %3556 = vmatmul.mubr.bf16.gmra.mxu0 %v2984
      %v3557 = vpop.f32.mrf.mxu0
      %v3558 = vadd.f32 %v3397, %v3557
      %v3559 = vpop.f32.mrf.mxu0
      %v3560 = vpop.f32.mrf.mxu0
      %v3561 = vadd.f32 %v3400, %v3560
      %v3562 = vpop.f32.mrf.mxu0
      %3563 = vmatprep.mubr.bf16.mxu0 0
      %3564 = vmatmul.mubr.bf16.gmra.mxu0 %v2987
      %v3565 = vpop.f32.mrf.mxu0
      %v3566 = vadd.f32 %v3405, %v3565
      %v3567 = vpop.f32.mrf.mxu0
      %v3568 = vpop.f32.mrf.mxu0
      %v3569 = vadd.f32 %v3408, %v3568
      %v3570 = vpop.f32.mrf.mxu0
      %3571 = vmatprep.mubr.bf16.mxu0 0
      %3572 = vmatmul.mubr.bf16.gmra.mxu0 %v2990
      %v3573 = vpop.f32.mrf.mxu0
      %v3574 = vadd.f32 %v3413, %v3573
      %v3575 = vpop.f32.mrf.mxu0
      %v3576 = vpop.f32.mrf.mxu0
      %v3577 = vadd.f32 %v3416, %v3576
      %v3578 = vpop.f32.mrf.mxu0
      %3579 = vmatprep.mubr.bf16.mxu0 0
      %3580 = vmatmul.mubr.bf16.gmra.mxu0 %v3071
      %v3581 = vpop.f32.mrf.mxu0
      %v3582 = vadd.f32 %v3421, %v3581
      %v3583 = vpop.f32.mrf.mxu0
      %v3584 = vpop.f32.mrf.mxu0
      %v3585 = vadd.f32 %v3424, %v3584
      %v3586 = vpop.f32.mrf.mxu0
      %3587 = vdwg.mxu0
      %v3636 = vunpack.c.l.b16 %v3006
      %v3637 = vunpack.c.l.b16 %v3007
      %v3638 = vunpack.c.l.b16 %v3008
      %v3639 = vunpack.c.l.b16 %v3009
      %v3640 = vunpack.c.l.b16 %v3010
      %v3641 = vunpack.c.l.b16 %v3011
      %v3642 = vunpack.c.l.b16 %v3012
      %v3643 = vunpack.c.l.b16 %v3013
      %v3644 = vunpack.c.l.b16 %v3014
      %v3645 = vunpack.c.l.b16 %v3015
      %v3646 = vunpack.c.l.b16 %v3016
      %v3647 = vunpack.c.l.b16 %v3017
      %v3648 = vunpack.c.l.b16 %v3018
      %v3649 = vunpack.c.l.b16 %v3019
      %v3650 = vunpack.c.l.b16 %v3020
      %v3651 = vunpack.c.l.b16 %v3021
      %v3652 = vunpack.c.l.b16 %v3022
      %v3653 = vunpack.c.l.b16 %v3023
      %v3654 = vunpack.c.l.b16 %v3024
      %v3655 = vunpack.c.l.b16 %v3025
      %v3656 = vunpack.c.l.b16 %v3026
      %v3657 = vunpack.c.l.b16 %v3027
      %v3658 = vunpack.c.l.b16 %v3028
      %v3659 = vunpack.c.l.b16 %v3029
      %v3660 = vunpack.c.l.b16 %v3030
      %v3661 = vunpack.c.l.b16 %v3031
      %v3662 = vunpack.c.l.b16 %v3032
      %v3663 = vunpack.c.l.b16 %v3033
      %v3664 = vunpack.c.l.b16 %v3034
      %v3665 = vunpack.c.l.b16 %v3035
      %v3666 = vunpack.c.l.b16 %v3036
      %v3667 = vunpack.c.l.b16 %v3037
      %v3668 = vunpack.c.l.b16 %v3038
      %v3669 = vunpack.c.l.b16 %v3039
      %v3670 = vunpack.c.l.b16 %v3040
      %v3671 = vunpack.c.l.b16 %v3041
      %v3672 = vunpack.c.l.b16 %v3042
      %v3673 = vunpack.c.l.b16 %v3043
      %v3674 = vunpack.c.l.b16 %v3044
      %v3675 = vunpack.c.l.b16 %v3045
      %v3676 = vunpack.c.l.b16 %v3046
      %v3677 = vunpack.c.l.b16 %v3047
      %v3678 = vunpack.c.l.b16 %v3048
      %v3679 = vunpack.c.l.b16 %v3049
      %v3680 = vunpack.c.l.b16 %v3050
      %v3681 = vunpack.c.l.b16 %v3051
      %v3682 = vunpack.c.l.b16 %v3052
      %v3683 = vunpack.c.l.b16 %v3053
      %v3684 = vpack.c.b16 %v3637, %v3636
      %v3685 = vpack.c.b16 %v3639, %v3638
      %v3686 = vpack.c.b16 %v3641, %v3640
      %v3687 = vpack.c.b16 %v3643, %v3642
      %v3688 = vpack.c.b16 %v3645, %v3644
      %v3689 = vpack.c.b16 %v3647, %v3646
      %v3690 = vpack.c.b16 %v3649, %v3648
      %v3691 = vpack.c.b16 %v3651, %v3650
      %v3692 = vpack.c.b16 %v3653, %v3652
      %v3693 = vpack.c.b16 %v3655, %v3654
      %v3694 = vpack.c.b16 %v3657, %v3656
      %v3695 = vpack.c.b16 %v3659, %v3658
      %v3696 = vpack.c.b16 %v3661, %v3660
      %v3697 = vpack.c.b16 %v3663, %v3662
      %v3698 = vpack.c.b16 %v3665, %v3664
      %v3699 = vpack.c.b16 %v3667, %v3666
      %v3700 = vpack.c.b16 %v3669, %v3668
      %v3701 = vpack.c.b16 %v3671, %v3670
      %v3702 = vpack.c.b16 %v3673, %v3672
      %v3703 = vpack.c.b16 %v3675, %v3674
      %v3704 = vpack.c.b16 %v3677, %v3676
      %v3705 = vpack.c.b16 %v3679, %v3678
      %v3706 = vpack.c.b16 %v3681, %v3680
      %v3707 = vpack.c.b16 %v3683, %v3682
      %3732 = vmatprep.subr.bf16.mxu0 0
      %3733 = vmatpush1.bf16.msra.mxu0 %v3691
      %3734 = vmatprep.subr.bf16.mxu0 0
      %3735 = vmatpush1.bf16.msra.mxu0 %v3690
      %3736 = vmatprep.subr.bf16.mxu0 0
      %3737 = vmatpush1.bf16.msra.mxu0 %v3689
      %3738 = vmatprep.subr.bf16.mxu0 0
      %3739 = vmatpush1.bf16.msra.mxu0 %v3688
      %3740 = vmatprep.subr.bf16.mxu0 0
      %3741 = vmatpush1.bf16.msra.mxu0 %v3687
      %3742 = vmatprep.subr.bf16.mxu0 0
      %3743 = vmatpush1.bf16.msra.mxu0 %v3686
      %3744 = vmatprep.subr.bf16.mxu0 0
      %3745 = vmatpush1.bf16.msra.mxu0 %v3685
      %3746 = vmatprep.subr.bf16.mxu0 0
      %3747 = vmatpush1.bf16.msra.mxu0 %v3684
      %3748 = vmatprep.subr.bf16.mxu0 0
      %3749 = vmatpush2.bf16.msra.mxu0 %v3699
      %3750 = vmatprep.subr.bf16.mxu0 0
      %3751 = vmatpush2.bf16.msra.mxu0 %v3698
      %3752 = vmatprep.subr.bf16.mxu0 0
      %3753 = vmatpush2.bf16.msra.mxu0 %v3697
      %3754 = vmatprep.subr.bf16.mxu0 0
      %3755 = vmatpush2.bf16.msra.mxu0 %v3696
      %3756 = vmatprep.subr.bf16.mxu0 0
      %3757 = vmatpush2.bf16.msra.mxu0 %v3695
      %3758 = vmatprep.subr.bf16.mxu0 0
      %3759 = vmatpush2.bf16.msra.mxu0 %v3694
      %3760 = vmatprep.subr.bf16.mxu0 0
      %3761 = vmatpush2.bf16.msra.mxu0 %v3693
      %3762 = vmatprep.subr.bf16.mxu0 0
      %3763 = vmatpush2.bf16.msra.mxu0 %v3692
      %3764 = vmatprep.mubr.bf16.mxu0 %v530
      %3765 = vmatmul.mubr.bf16.gmra.mxu0 %v484
      %v3766 = vpop.f32.mrf.mxu0
      %v3767 = vadd.f32 %v3462, %v3766
      %v3768 = vpop.f32.mrf.mxu0
      %v3769 = vpop.f32.mrf.mxu0
      %v3770 = vadd.f32 %v3465, %v3769
      %v3771 = vpop.f32.mrf.mxu0
      %3772 = vmatprep.mubr.bf16.mxu0 %v2732
      %3773 = vmatmul.mubr.bf16.gmra.mxu0 %v2689
      %v3774 = vpop.f32.mrf.mxu0
      %v3775 = vadd.f32 %v3470, %v3774
      %v3776 = vpop.f32.mrf.mxu0
      %v3777 = vpop.f32.mrf.mxu0
      %v3778 = vadd.f32 %v3473, %v3777
      %v3779 = vpop.f32.mrf.mxu0
      %3780 = vmatprep.mubr.bf16.mxu0 %v2744
      %3781 = vmatmul.mubr.bf16.gmra.mxu0 %v2690
      %v3782 = vpop.f32.mrf.mxu0
      %v3783 = vadd.f32 %v3478, %v3782
      %v3784 = vpop.f32.mrf.mxu0
      %v3785 = vpop.f32.mrf.mxu0
      %v3786 = vadd.f32 %v3481, %v3785
      %v3787 = vpop.f32.mrf.mxu0
      %3788 = vmatprep.mubr.bf16.mxu0 %v2756
      %3789 = vmatmul.mubr.bf16.gmra.mxu0 %v2691
      %v3790 = vpop.f32.mrf.mxu0
      %v3791 = vadd.f32 %v3486, %v3790
      %v3792 = vpop.f32.mrf.mxu0
      %v3793 = vpop.f32.mrf.mxu0
      %v3794 = vadd.f32 %v3489, %v3793
      %v3795 = vpop.f32.mrf.mxu0
      %3796 = vmatprep.mubr.bf16.mxu0 %v2768
      %3797 = vmatmul.mubr.bf16.gmra.mxu0 %v2692
      %v3798 = vpop.f32.mrf.mxu0
      %v3799 = vadd.f32 %v3494, %v3798
      %v3800 = vpop.f32.mrf.mxu0
      %v3801 = vpop.f32.mrf.mxu0
      %v3802 = vadd.f32 %v3497, %v3801
      %v3803 = vpop.f32.mrf.mxu0
      %3804 = vmatprep.mubr.bf16.mxu0 %v2780
      %3805 = vmatmul.mubr.bf16.gmra.mxu0 %v2693
      %v3806 = vpop.f32.mrf.mxu0
      %v3807 = vadd.f32 %v3502, %v3806
      %v3808 = vpop.f32.mrf.mxu0
      %v3809 = vpop.f32.mrf.mxu0
      %v3810 = vadd.f32 %v3505, %v3809
      %v3811 = vpop.f32.mrf.mxu0
      %3812 = vmatprep.mubr.bf16.mxu0 %v2792
      %3813 = vmatmul.mubr.bf16.gmra.mxu0 %v2694
      %v3814 = vpop.f32.mrf.mxu0
      %v3815 = vadd.f32 %v3510, %v3814
      %v3816 = vpop.f32.mrf.mxu0
      %v3817 = vpop.f32.mrf.mxu0
      %v3818 = vadd.f32 %v3513, %v3817
      %v3819 = vpop.f32.mrf.mxu0
      %3820 = vmatprep.mubr.bf16.mxu0 %v2804
      %3821 = vmatmul.mubr.bf16.gmra.mxu0 %v2695
      %v3822 = vpop.f32.mrf.mxu0
      %v3823 = vadd.f32 %v3518, %v3822
      %v3824 = vpop.f32.mrf.mxu0
      %v3825 = vpop.f32.mrf.mxu0
      %v3826 = vadd.f32 %v3521, %v3825
      %v3827 = vpop.f32.mrf.mxu0
      %3828 = vmatprep.mubr.bf16.mxu0 %v2816
      %3829 = vmatmul.mubr.bf16.gmra.mxu0 %v2696
      %v3830 = vpop.f32.mrf.mxu0
      %v3831 = vadd.f32 %v3526, %v3830
      %v3832 = vpop.f32.mrf.mxu0
      %v3833 = vpop.f32.mrf.mxu0
      %v3834 = vadd.f32 %v3529, %v3833
      %v3835 = vpop.f32.mrf.mxu0
      %3836 = vmatprep.mubr.bf16.mxu0 %v2828
      %3837 = vmatmul.mubr.bf16.gmra.mxu0 %v2697
      %v3838 = vpop.f32.mrf.mxu0
      %v3839 = vadd.f32 %v3534, %v3838
      %v3840 = vpop.f32.mrf.mxu0
      %v3841 = vpop.f32.mrf.mxu0
      %v3842 = vadd.f32 %v3537, %v3841
      %v3843 = vpop.f32.mrf.mxu0
      %3844 = vmatprep.mubr.bf16.mxu0 %v2840
      %3845 = vmatmul.mubr.bf16.gmra.mxu0 %v2698
      %v3846 = vpop.f32.mrf.mxu0
      %v3847 = vadd.f32 %v3542, %v3846
      %v3848 = vpop.f32.mrf.mxu0
      %v3849 = vpop.f32.mrf.mxu0
      %v3850 = vadd.f32 %v3545, %v3849
      %v3851 = vpop.f32.mrf.mxu0
      %3852 = vmatprep.mubr.bf16.mxu0 %v2852
      %3853 = vmatmul.mubr.bf16.gmra.mxu0 %v2699
      %v3854 = vpop.f32.mrf.mxu0
      %v3855 = vadd.f32 %v3550, %v3854
      %v3856 = vpop.f32.mrf.mxu0
      %v3857 = vpop.f32.mrf.mxu0
      %v3858 = vadd.f32 %v3553, %v3857
      %v3859 = vpop.f32.mrf.mxu0
      %3860 = vmatprep.mubr.bf16.mxu0 %v2864
      %3861 = vmatmul.mubr.bf16.gmra.mxu0 %v2700
      %v3862 = vpop.f32.mrf.mxu0
      %v3863 = vadd.f32 %v3558, %v3862
      %v3864 = vpop.f32.mrf.mxu0
      %v3865 = vpop.f32.mrf.mxu0
      %v3866 = vadd.f32 %v3561, %v3865
      %v3867 = vpop.f32.mrf.mxu0
      %3868 = vmatprep.mubr.bf16.mxu0 %v2876
      %3869 = vmatmul.mubr.bf16.gmra.mxu0 %v2701
      %v3870 = vpop.f32.mrf.mxu0
      %v3871 = vadd.f32 %v3566, %v3870
      %v3872 = vpop.f32.mrf.mxu0
      %v3873 = vpop.f32.mrf.mxu0
      %v3874 = vadd.f32 %v3569, %v3873
      %v3875 = vpop.f32.mrf.mxu0
      %3876 = vmatprep.mubr.bf16.mxu0 %v2888
      %3877 = vmatmul.mubr.bf16.gmra.mxu0 %v2702
      %v3878 = vpop.f32.mrf.mxu0
      %v3879 = vadd.f32 %v3574, %v3878
      %v3880 = vpop.f32.mrf.mxu0
      %v3881 = vpop.f32.mrf.mxu0
      %v3882 = vadd.f32 %v3577, %v3881
      %v3883 = vpop.f32.mrf.mxu0
      %3884 = vmatprep.mubr.bf16.mxu0 %v2900
      %3885 = vmatmul.mubr.bf16.gmra.mxu0 %v2703
      %v3886 = vpop.f32.mrf.mxu0
      %v3887 = vadd.f32 %v3582, %v3886
      %v3888 = vpop.f32.mrf.mxu0
      %v3889 = vpop.f32.mrf.mxu0
      %v3890 = vadd.f32 %v3585, %v3889
      %v3891 = vpop.f32.mrf.mxu0
      %3892 = vdwg.mxu0
      %3893 = vmatprep.subr.bf16.mxu0 0
      %3894 = vmatpush1.bf16.msra.mxu0 %v3707
      %3895 = vmatprep.subr.bf16.mxu0 0
      %3896 = vmatpush1.bf16.msra.mxu0 %v3706
      %3897 = vmatprep.subr.bf16.mxu0 0
      %3898 = vmatpush1.bf16.msra.mxu0 %v3705
      %3899 = vmatprep.subr.bf16.mxu0 0
      %3900 = vmatpush1.bf16.msra.mxu0 %v3704
      %3901 = vmatprep.subr.bf16.mxu0 0
      %3902 = vmatpush1.bf16.msra.mxu0 %v3703
      %3903 = vmatprep.subr.bf16.mxu0 0
      %3904 = vmatpush1.bf16.msra.mxu0 %v3702
      %3905 = vmatprep.subr.bf16.mxu0 0
      %3906 = vmatpush1.bf16.msra.mxu0 %v3701
      %3907 = vmatprep.subr.bf16.mxu0 0
      %3908 = vmatpush1.bf16.msra.mxu0 %v3700
      %3909 = vmatprep.subr.bf16.mxu0 0
      %3910 = vmatpush2.bf16.msra.mxu0 0
      %3911 = vmatprep.subr.bf16.mxu0 0
      %3912 = vmatpush2.bf16.msra.mxu0 0
      %3913 = vmatprep.subr.bf16.mxu0 0
      %3914 = vmatpush2.bf16.msra.mxu0 0
      %3915 = vmatprep.subr.bf16.mxu0 0
      %3916 = vmatpush2.bf16.msra.mxu0 0
      %3917 = vmatprep.subr.bf16.mxu0 0
      %3918 = vmatpush2.bf16.msra.mxu0 0
      %3919 = vmatprep.subr.bf16.mxu0 0
      %3920 = vmatpush2.bf16.msra.mxu0 0
      %3921 = vmatprep.subr.bf16.mxu0 0
      %3922 = vmatpush2.bf16.msra.mxu0 0
      %3923 = vmatprep.subr.bf16.mxu0 0
      %3924 = vmatpush2.bf16.msra.mxu0 0
      %3925 = vmatprep.mubr.bf16.mxu0 0
      %3926 = vmatmul.mubr.bf16.gmra.mxu0 %v762
      %v3927 = vpop.f32.mrf.mxu0
      %v3928 = vadd.f32 %v3767, %v3927
      %v3929 = vpop.f32.mrf.mxu0
      %v3930 = vpop.f32.mrf.mxu0
      %v3931 = vadd.f32 %v3770, %v3930
      %v3932 = vpop.f32.mrf.mxu0
      %3933 = vmatprep.mubr.bf16.mxu0 0
      %3934 = vmatmul.mubr.bf16.gmra.mxu0 %v2948
      %v3935 = vpop.f32.mrf.mxu0
      %v3936 = vadd.f32 %v3775, %v3935
      %v3937 = vpop.f32.mrf.mxu0
      %v3938 = vpop.f32.mrf.mxu0
      %v3939 = vadd.f32 %v3778, %v3938
      %v3940 = vpop.f32.mrf.mxu0
      %3941 = vmatprep.mubr.bf16.mxu0 0
      %3942 = vmatmul.mubr.bf16.gmra.mxu0 %v2951
      %v3943 = vpop.f32.mrf.mxu0
      %v3944 = vadd.f32 %v3783, %v3943
      %v3945 = vpop.f32.mrf.mxu0
      %v3946 = vpop.f32.mrf.mxu0
      %v3947 = vadd.f32 %v3786, %v3946
      %v3948 = vpop.f32.mrf.mxu0
      %3949 = vmatprep.mubr.bf16.mxu0 0
      %3950 = vmatmul.mubr.bf16.gmra.mxu0 %v2954
      %v3951 = vpop.f32.mrf.mxu0
      %v3952 = vadd.f32 %v3791, %v3951
      %v3953 = vpop.f32.mrf.mxu0
      %v3954 = vpop.f32.mrf.mxu0
      %v3955 = vadd.f32 %v3794, %v3954
      %v3956 = vpop.f32.mrf.mxu0
      %3957 = vmatprep.mubr.bf16.mxu0 0
      %3958 = vmatmul.mubr.bf16.gmra.mxu0 %v2957
      %v3959 = vpop.f32.mrf.mxu0
      %v3960 = vadd.f32 %v3799, %v3959
      %v3961 = vpop.f32.mrf.mxu0
      %v3962 = vpop.f32.mrf.mxu0
      %v3963 = vadd.f32 %v3802, %v3962
      %v3964 = vpop.f32.mrf.mxu0
      %3965 = vmatprep.mubr.bf16.mxu0 0
      %3966 = vmatmul.mubr.bf16.gmra.mxu0 %v2960
      %v3967 = vpop.f32.mrf.mxu0
      %v3968 = vadd.f32 %v3807, %v3967
      %v3969 = vpop.f32.mrf.mxu0
      %v3970 = vpop.f32.mrf.mxu0
      %v3971 = vadd.f32 %v3810, %v3970
      %v3972 = vpop.f32.mrf.mxu0
      %3973 = vmatprep.mubr.bf16.mxu0 0
      %3974 = vmatmul.mubr.bf16.gmra.mxu0 %v2963
      %v3975 = vpop.f32.mrf.mxu0
      %v3976 = vadd.f32 %v3815, %v3975
      %v3977 = vpop.f32.mrf.mxu0
      %v3978 = vpop.f32.mrf.mxu0
      %v3979 = vadd.f32 %v3818, %v3978
      %v3980 = vpop.f32.mrf.mxu0
      %3981 = vmatprep.mubr.bf16.mxu0 0
      %3982 = vmatmul.mubr.bf16.gmra.mxu0 %v2966
      %v3983 = vpop.f32.mrf.mxu0
      %v3984 = vadd.f32 %v3823, %v3983
      %v3985 = vpop.f32.mrf.mxu0
      %v3986 = vpop.f32.mrf.mxu0
      %v3987 = vadd.f32 %v3826, %v3986
      %v3988 = vpop.f32.mrf.mxu0
      %3989 = vmatprep.mubr.bf16.mxu0 0
      %3990 = vmatmul.mubr.bf16.gmra.mxu0 %v2969
      %v3991 = vpop.f32.mrf.mxu0
      %v3992 = vadd.f32 %v3831, %v3991
      %v3993 = vpop.f32.mrf.mxu0
      %v3994 = vpop.f32.mrf.mxu0
      %v3995 = vadd.f32 %v3834, %v3994
      %v3996 = vpop.f32.mrf.mxu0
      %3997 = vmatprep.mubr.bf16.mxu0 0
      %3998 = vmatmul.mubr.bf16.gmra.mxu0 %v2972
      %v3999 = vpop.f32.mrf.mxu0
      %v4000 = vadd.f32 %v3839, %v3999
      %v4001 = vpop.f32.mrf.mxu0
      %v4002 = vpop.f32.mrf.mxu0
      %v4003 = vadd.f32 %v3842, %v4002
      %v4004 = vpop.f32.mrf.mxu0
      %4005 = vmatprep.mubr.bf16.mxu0 0
      %4006 = vmatmul.mubr.bf16.gmra.mxu0 %v2975
      %v4007 = vpop.f32.mrf.mxu0
      %v4008 = vadd.f32 %v3847, %v4007
      %v4009 = vpop.f32.mrf.mxu0
      %v4010 = vpop.f32.mrf.mxu0
      %v4011 = vadd.f32 %v3850, %v4010
      %v4012 = vpop.f32.mrf.mxu0
      %4013 = vmatprep.mubr.bf16.mxu0 0
      %4014 = vmatmul.mubr.bf16.gmra.mxu0 %v2978
      %v4015 = vpop.f32.mrf.mxu0
      %v4016 = vadd.f32 %v3855, %v4015
      %v4017 = vpop.f32.mrf.mxu0
      %v4018 = vpop.f32.mrf.mxu0
      %v4019 = vadd.f32 %v3858, %v4018
      %v4020 = vpop.f32.mrf.mxu0
      %4021 = vmatprep.mubr.bf16.mxu0 0
      %4022 = vmatmul.mubr.bf16.gmra.mxu0 %v2981
      %v4023 = vpop.f32.mrf.mxu0
      %v4024 = vadd.f32 %v3863, %v4023
      %v4025 = vpop.f32.mrf.mxu0
      %v4026 = vpop.f32.mrf.mxu0
      %v4027 = vadd.f32 %v3866, %v4026
      %v4028 = vpop.f32.mrf.mxu0
      %4029 = vmatprep.mubr.bf16.mxu0 0
      %4030 = vmatmul.mubr.bf16.gmra.mxu0 %v2984
      %v4031 = vpop.f32.mrf.mxu0
      %v4032 = vadd.f32 %v3871, %v4031
      %v4033 = vpop.f32.mrf.mxu0
      %v4034 = vpop.f32.mrf.mxu0
      %v4035 = vadd.f32 %v3874, %v4034
      %v4036 = vpop.f32.mrf.mxu0
      %4037 = vmatprep.mubr.bf16.mxu0 0
      %4038 = vmatmul.mubr.bf16.gmra.mxu0 %v2987
      %v4039 = vpop.f32.mrf.mxu0
      %v4040 = vadd.f32 %v3879, %v4039
      %v4041 = vpop.f32.mrf.mxu0
      %v4042 = vpop.f32.mrf.mxu0
      %v4043 = vadd.f32 %v3882, %v4042
      %v4044 = vpop.f32.mrf.mxu0
      %4045 = vmatprep.mubr.bf16.mxu0 0
      %4046 = vmatmul.mubr.bf16.gmra.mxu0 %v2990
      %v4047 = vpop.f32.mrf.mxu0
      %v4048 = vadd.f32 %v3887, %v4047
      %v4049 = vpop.f32.mrf.mxu0
      %v4050 = vpop.f32.mrf.mxu0
      %v4051 = vadd.f32 %v3890, %v4050
      %v4052 = vpop.f32.mrf.mxu0
      %4053 = vdwg.mxu0
      %s4054 = scalar_lea.vmem %s4, 384
      %v4055 = vld [vmem:[%s4054] sm:$0xf]
      %v4056 = vld [vmem:[%s4054 + $0x4] sm:$0xf]
      %v4057 = vld [vmem:[%s4054 + $0x8] sm:$0xf]
      %v4058 = vld [vmem:[%s4054 + $0xc] sm:$0xf]
      %v4059 = vld [vmem:[%s4054 + $0x10] sm:$0xf]
      %v4060 = vld [vmem:[%s4054 + $0x14] sm:$0xf]
      %v4061 = vld [vmem:[%s4054 + $0x18] sm:$0xf]
      %v4062 = vld [vmem:[%s4054 + $0x1c] sm:$0xf]
      %v4063 = vld [vmem:[%s4054 + $0x20] sm:$0xf]
      %v4064 = vld [vmem:[%s4054 + $0x24] sm:$0xf]
      %v4065 = vld [vmem:[%s4054 + $0x28] sm:$0xf]
      %v4066 = vld [vmem:[%s4054 + $0x2c] sm:$0xf]
      %v4067 = vld [vmem:[%s4054 + $0x30] sm:$0xf]
      %v4068 = vld [vmem:[%s4054 + $0x34] sm:$0xf]
      %v4069 = vld [vmem:[%s4054 + $0x38] sm:$0xf]
      %v4070 = vld [vmem:[%s4054 + $0x3c] sm:$0xf]
      %v4071 = vld [vmem:[%s4054 + $0x40] sm:$0xf]
      %v4072 = vld [vmem:[%s4054 + $0x44] sm:$0xf]
      %v4073 = vld [vmem:[%s4054 + $0x48] sm:$0xf]
      %v4074 = vld [vmem:[%s4054 + $0x4c] sm:$0xf]
      %v4075 = vld [vmem:[%s4054 + $0x50] sm:$0xf]
      %v4076 = vld [vmem:[%s4054 + $0x54] sm:$0xf]
      %v4077 = vld [vmem:[%s4054 + $0x58] sm:$0xf]
      %v4078 = vld [vmem:[%s4054 + $0x5c] sm:$0xf]
      %v4079 = vld [vmem:[%s4054 + $0x60] sm:$0xf]
      %v4080 = vld [vmem:[%s4054 + $0x64] sm:$0xf]
      %v4081 = vld [vmem:[%s4054 + $0x68] sm:$0xf]
      %v4082 = vld [vmem:[%s4054 + $0x6c] sm:$0xf]
      %v4083 = vld [vmem:[%s4054 + $0x70] sm:$0xf]
      %v4084 = vld [vmem:[%s4054 + $0x74] sm:$0xf]
      %v4085 = vld [vmem:[%s4054 + $0x78] sm:$0xf]
      %v4086 = vld [vmem:[%s4054 + $0x7c] sm:$0xf]
      %v4087 = vld [vmem:[%s4054 + $0x80] sm:$0xf]
      %v4088 = vld [vmem:[%s4054 + $0x84] sm:$0xf]
      %v4089 = vld [vmem:[%s4054 + $0x88] sm:$0xf]
      %v4090 = vld [vmem:[%s4054 + $0x8c] sm:$0xf]
      %v4091 = vld [vmem:[%s4054 + $0x90] sm:$0xf]
      %v4092 = vld [vmem:[%s4054 + $0x94] sm:$0xf]
      %v4093 = vld [vmem:[%s4054 + $0x98] sm:$0xf]
      %v4094 = vld [vmem:[%s4054 + $0x9c] sm:$0xf]
      %v4095 = vld [vmem:[%s4054 + $0xa0] sm:$0xf]
      %v4096 = vld [vmem:[%s4054 + $0xa4] sm:$0xf]
      %v4097 = vld [vmem:[%s4054 + $0xa8] sm:$0xf]
      %v4098 = vld [vmem:[%s4054 + $0xac] sm:$0xf]
      %v4099 = vld [vmem:[%s4054 + $0xb0] sm:$0xf]
      %v4100 = vld [vmem:[%s4054 + $0xb4] sm:$0xf]
      %v4101 = vld [vmem:[%s4054 + $0xb8] sm:$0xf]
      %v4102 = vld [vmem:[%s4054 + $0xbc] sm:$0xf]
      %v4151 = vunpack.c.l.b16 %v4055
      %v4152 = vunpack.c.l.b16 %v4056
      %v4153 = vunpack.c.l.b16 %v4057
      %v4154 = vunpack.c.l.b16 %v4058
      %v4155 = vunpack.c.l.b16 %v4059
      %v4156 = vunpack.c.l.b16 %v4060
      %v4157 = vunpack.c.l.b16 %v4061
      %v4158 = vunpack.c.l.b16 %v4062
      %v4159 = vunpack.c.l.b16 %v4063
      %v4160 = vunpack.c.l.b16 %v4064
      %v4161 = vunpack.c.l.b16 %v4065
      %v4162 = vunpack.c.l.b16 %v4066
      %v4163 = vunpack.c.l.b16 %v4067
      %v4164 = vunpack.c.l.b16 %v4068
      %v4165 = vunpack.c.l.b16 %v4069
      %v4166 = vunpack.c.l.b16 %v4070
      %v4167 = vunpack.c.l.b16 %v4071
      %v4168 = vunpack.c.l.b16 %v4072
      %v4169 = vunpack.c.l.b16 %v4073
      %v4170 = vunpack.c.l.b16 %v4074
      %v4171 = vunpack.c.l.b16 %v4075
      %v4172 = vunpack.c.l.b16 %v4076
      %v4173 = vunpack.c.l.b16 %v4077
      %v4174 = vunpack.c.l.b16 %v4078
      %v4175 = vunpack.c.l.b16 %v4079
      %v4176 = vunpack.c.l.b16 %v4080
      %v4177 = vunpack.c.l.b16 %v4081
      %v4178 = vunpack.c.l.b16 %v4082
      %v4179 = vunpack.c.l.b16 %v4083
      %v4180 = vunpack.c.l.b16 %v4084
      %v4181 = vunpack.c.l.b16 %v4085
      %v4182 = vunpack.c.l.b16 %v4086
      %v4183 = vunpack.c.l.b16 %v4087
      %v4184 = vunpack.c.l.b16 %v4088
      %v4185 = vunpack.c.l.b16 %v4089
      %v4186 = vunpack.c.l.b16 %v4090
      %v4187 = vunpack.c.l.b16 %v4091
      %v4188 = vunpack.c.l.b16 %v4092
      %v4189 = vunpack.c.l.b16 %v4093
      %v4190 = vunpack.c.l.b16 %v4094
      %v4191 = vunpack.c.l.b16 %v4095
      %v4192 = vunpack.c.l.b16 %v4096
      %v4193 = vunpack.c.l.b16 %v4097
      %v4194 = vunpack.c.l.b16 %v4098
      %v4195 = vunpack.c.l.b16 %v4099
      %v4196 = vunpack.c.l.b16 %v4100
      %v4197 = vunpack.c.l.b16 %v4101
      %v4198 = vunpack.c.l.b16 %v4102
      %v4199 = vpack.c.b16 %v4152, %v4151
      %v4200 = vpack.c.b16 %v4154, %v4153
      %v4201 = vpack.c.b16 %v4156, %v4155
      %v4202 = vpack.c.b16 %v4158, %v4157
      %v4203 = vpack.c.b16 %v4160, %v4159
      %v4204 = vpack.c.b16 %v4162, %v4161
      %v4205 = vpack.c.b16 %v4164, %v4163
      %v4206 = vpack.c.b16 %v4166, %v4165
      %v4207 = vpack.c.b16 %v4168, %v4167
      %v4208 = vpack.c.b16 %v4170, %v4169
      %v4209 = vpack.c.b16 %v4172, %v4171
      %v4210 = vpack.c.b16 %v4174, %v4173
      %v4211 = vpack.c.b16 %v4176, %v4175
      %v4212 = vpack.c.b16 %v4178, %v4177
      %v4213 = vpack.c.b16 %v4180, %v4179
      %v4214 = vpack.c.b16 %v4182, %v4181
      %v4215 = vpack.c.b16 %v4184, %v4183
      %v4216 = vpack.c.b16 %v4186, %v4185
      %v4217 = vpack.c.b16 %v4188, %v4187
      %v4218 = vpack.c.b16 %v4190, %v4189
      %v4219 = vpack.c.b16 %v4192, %v4191
      %v4220 = vpack.c.b16 %v4194, %v4193
      %v4221 = vpack.c.b16 %v4196, %v4195
      %v4222 = vpack.c.b16 %v4198, %v4197
      %4247 = vmatprep.subr.bf16.mxu0 0
      %4248 = vmatpush1.bf16.msra.mxu0 %v4206
      %4249 = vmatprep.subr.bf16.mxu0 0
      %4250 = vmatpush1.bf16.msra.mxu0 %v4205
      %4251 = vmatprep.subr.bf16.mxu0 0
      %4252 = vmatpush1.bf16.msra.mxu0 %v4204
      %4253 = vmatprep.subr.bf16.mxu0 0
      %4254 = vmatpush1.bf16.msra.mxu0 %v4203
      %4255 = vmatprep.subr.bf16.mxu0 0
      %4256 = vmatpush1.bf16.msra.mxu0 %v4202
      %4257 = vmatprep.subr.bf16.mxu0 0
      %4258 = vmatpush1.bf16.msra.mxu0 %v4201
      %4259 = vmatprep.subr.bf16.mxu0 0
      %4260 = vmatpush1.bf16.msra.mxu0 %v4200
      %4261 = vmatprep.subr.bf16.mxu0 0
      %4262 = vmatpush1.bf16.msra.mxu0 %v4199
      %4263 = vmatprep.subr.bf16.mxu0 0
      %4264 = vmatpush2.bf16.msra.mxu0 %v4214
      %4265 = vmatprep.subr.bf16.mxu0 0
      %4266 = vmatpush2.bf16.msra.mxu0 %v4213
      %4267 = vmatprep.subr.bf16.mxu0 0
      %4268 = vmatpush2.bf16.msra.mxu0 %v4212
      %4269 = vmatprep.subr.bf16.mxu0 0
      %4270 = vmatpush2.bf16.msra.mxu0 %v4211
      %4271 = vmatprep.subr.bf16.mxu0 0
      %4272 = vmatpush2.bf16.msra.mxu0 %v4210
      %4273 = vmatprep.subr.bf16.mxu0 0
      %4274 = vmatpush2.bf16.msra.mxu0 %v4209
      %4275 = vmatprep.subr.bf16.mxu0 0
      %4276 = vmatpush2.bf16.msra.mxu0 %v4208
      %4277 = vmatprep.subr.bf16.mxu0 0
      %4278 = vmatpush2.bf16.msra.mxu0 %v4207
      %4279 = vmatprep.mubr.bf16.mxu0 %v2744
      %4280 = vmatmul.mubr.bf16.gmra.mxu0 %v2690
      %v4281 = vpop.f32.mrf.mxu0
      %v4282 = vadd.f32 0.0, %v4281
      %v4283 = vpop.f32.mrf.mxu0
      %v4284 = vpop.f32.mrf.mxu0
      %v4285 = vadd.f32 0.0, %v4284
      %v4286 = vpop.f32.mrf.mxu0
      %4287 = vmatprep.mubr.bf16.mxu0 %v2756
      %4288 = vmatmul.mubr.bf16.gmra.mxu0 %v2691
      %v4289 = vpop.f32.mrf.mxu0
      %v4290 = vadd.f32 0.0, %v4289
      %v4291 = vpop.f32.mrf.mxu0
      %v4292 = vpop.f32.mrf.mxu0
      %v4293 = vadd.f32 0.0, %v4292
      %v4294 = vpop.f32.mrf.mxu0
      %4295 = vmatprep.mubr.bf16.mxu0 %v2768
      %4296 = vmatmul.mubr.bf16.gmra.mxu0 %v2692
      %v4297 = vpop.f32.mrf.mxu0
      %v4298 = vadd.f32 0.0, %v4297
      %v4299 = vpop.f32.mrf.mxu0
      %v4300 = vpop.f32.mrf.mxu0
      %v4301 = vadd.f32 0.0, %v4300
      %v4302 = vpop.f32.mrf.mxu0
      %4303 = vmatprep.mubr.bf16.mxu0 %v2780
      %4304 = vmatmul.mubr.bf16.gmra.mxu0 %v2693
      %v4305 = vpop.f32.mrf.mxu0
      %v4306 = vadd.f32 0.0, %v4305
      %v4307 = vpop.f32.mrf.mxu0
      %v4308 = vpop.f32.mrf.mxu0
      %v4309 = vadd.f32 0.0, %v4308
      %v4310 = vpop.f32.mrf.mxu0
      %4311 = vmatprep.mubr.bf16.mxu0 %v2792
      %4312 = vmatmul.mubr.bf16.gmra.mxu0 %v2694
      %v4313 = vpop.f32.mrf.mxu0
      %v4314 = vadd.f32 0.0, %v4313
      %v4315 = vpop.f32.mrf.mxu0
      %v4316 = vpop.f32.mrf.mxu0
      %v4317 = vadd.f32 0.0, %v4316
      %v4318 = vpop.f32.mrf.mxu0
      %4319 = vmatprep.mubr.bf16.mxu0 %v2804
      %4320 = vmatmul.mubr.bf16.gmra.mxu0 %v2695
      %v4321 = vpop.f32.mrf.mxu0
      %v4322 = vadd.f32 0.0, %v4321
      %v4323 = vpop.f32.mrf.mxu0
      %v4324 = vpop.f32.mrf.mxu0
      %v4325 = vadd.f32 0.0, %v4324
      %v4326 = vpop.f32.mrf.mxu0
      %4327 = vmatprep.mubr.bf16.mxu0 %v2816
      %4328 = vmatmul.mubr.bf16.gmra.mxu0 %v2696
      %v4329 = vpop.f32.mrf.mxu0
      %v4330 = vadd.f32 0.0, %v4329
      %v4331 = vpop.f32.mrf.mxu0
      %v4332 = vpop.f32.mrf.mxu0
      %v4333 = vadd.f32 0.0, %v4332
      %v4334 = vpop.f32.mrf.mxu0
      %4335 = vmatprep.mubr.bf16.mxu0 %v2828
      %4336 = vmatmul.mubr.bf16.gmra.mxu0 %v2697
      %v4337 = vpop.f32.mrf.mxu0
      %v4338 = vadd.f32 0.0, %v4337
      %v4339 = vpop.f32.mrf.mxu0
      %v4340 = vpop.f32.mrf.mxu0
      %v4341 = vadd.f32 0.0, %v4340
      %v4342 = vpop.f32.mrf.mxu0
      %4343 = vmatprep.mubr.bf16.mxu0 %v2840
      %4344 = vmatmul.mubr.bf16.gmra.mxu0 %v2698
      %v4345 = vpop.f32.mrf.mxu0
      %v4346 = vadd.f32 0.0, %v4345
      %v4347 = vpop.f32.mrf.mxu0
      %v4348 = vpop.f32.mrf.mxu0
      %v4349 = vadd.f32 0.0, %v4348
      %v4350 = vpop.f32.mrf.mxu0
      %4351 = vmatprep.mubr.bf16.mxu0 %v2852
      %4352 = vmatmul.mubr.bf16.gmra.mxu0 %v2699
      %v4353 = vpop.f32.mrf.mxu0
      %v4354 = vadd.f32 0.0, %v4353
      %v4355 = vpop.f32.mrf.mxu0
      %v4356 = vpop.f32.mrf.mxu0
      %v4357 = vadd.f32 0.0, %v4356
      %v4358 = vpop.f32.mrf.mxu0
      %4359 = vmatprep.mubr.bf16.mxu0 %v2864
      %4360 = vmatmul.mubr.bf16.gmra.mxu0 %v2700
      %v4361 = vpop.f32.mrf.mxu0
      %v4362 = vadd.f32 0.0, %v4361
      %v4363 = vpop.f32.mrf.mxu0
      %v4364 = vpop.f32.mrf.mxu0
      %v4365 = vadd.f32 0.0, %v4364
      %v4366 = vpop.f32.mrf.mxu0
      %4367 = vmatprep.mubr.bf16.mxu0 %v2876
      %4368 = vmatmul.mubr.bf16.gmra.mxu0 %v2701
      %v4369 = vpop.f32.mrf.mxu0
      %v4370 = vadd.f32 0.0, %v4369
      %v4371 = vpop.f32.mrf.mxu0
      %v4372 = vpop.f32.mrf.mxu0
      %v4373 = vadd.f32 0.0, %v4372
      %v4374 = vpop.f32.mrf.mxu0
      %4375 = vmatprep.mubr.bf16.mxu0 %v2888
      %4376 = vmatmul.mubr.bf16.gmra.mxu0 %v2702
      %v4377 = vpop.f32.mrf.mxu0
      %v4378 = vadd.f32 0.0, %v4377
      %v4379 = vpop.f32.mrf.mxu0
      %v4380 = vpop.f32.mrf.mxu0
      %v4381 = vadd.f32 0.0, %v4380
      %v4382 = vpop.f32.mrf.mxu0
      %4383 = vmatprep.mubr.bf16.mxu0 %v2900
      %4384 = vmatmul.mubr.bf16.gmra.mxu0 %v2703
      %v4385 = vpop.f32.mrf.mxu0
      %v4386 = vadd.f32 0.0, %v4385
      %v4387 = vpop.f32.mrf.mxu0
      %v4388 = vpop.f32.mrf.mxu0
      %v4389 = vadd.f32 0.0, %v4388
      %v4390 = vpop.f32.mrf.mxu0
      %4391 = vmatprep.mubr.bf16.mxu0 %v3065
      %4392 = vmatmul.mubr.bf16.gmra.mxu0 %v2704
      %v4393 = vpop.f32.mrf.mxu0
      %v4394 = vadd.f32 0.0, %v4393
      %v4395 = vpop.f32.mrf.mxu0
      %v4396 = vpop.f32.mrf.mxu0
      %v4397 = vadd.f32 0.0, %v4396
      %v4398 = vpop.f32.mrf.mxu0
      %4399 = vmatprep.mubr.bf16.mxu0 %v530
      %4400 = vmatmul.mubr.bf16.gmra.mxu0 %v484
      %v4401 = vpop.f32.mrf.mxu0
      %v4402 = vadd.f32 0.0, %v4401
      %v4403 = vpop.f32.mrf.mxu0
      %v4404 = vpop.f32.mrf.mxu0
      %v4405 = vadd.f32 0.0, %v4404
      %v4406 = vpop.f32.mrf.mxu0
      %4407 = vdwg.mxu0
      %4408 = vmatprep.subr.bf16.mxu0 0
      %4409 = vmatpush1.bf16.msra.mxu0 %v4222
      %4410 = vmatprep.subr.bf16.mxu0 0
      %4411 = vmatpush1.bf16.msra.mxu0 %v4221
      %4412 = vmatprep.subr.bf16.mxu0 0
      %4413 = vmatpush1.bf16.msra.mxu0 %v4220
      %4414 = vmatprep.subr.bf16.mxu0 0
      %4415 = vmatpush1.bf16.msra.mxu0 %v4219
      %4416 = vmatprep.subr.bf16.mxu0 0
      %4417 = vmatpush1.bf16.msra.mxu0 %v4218
      %4418 = vmatprep.subr.bf16.mxu0 0
      %4419 = vmatpush1.bf16.msra.mxu0 %v4217
      %4420 = vmatprep.subr.bf16.mxu0 0
      %4421 = vmatpush1.bf16.msra.mxu0 %v4216
      %4422 = vmatprep.subr.bf16.mxu0 0
      %4423 = vmatpush1.bf16.msra.mxu0 %v4215
      %4424 = vmatprep.subr.bf16.mxu0 0
      %4425 = vmatpush2.bf16.msra.mxu0 0
      %4426 = vmatprep.subr.bf16.mxu0 0
      %4427 = vmatpush2.bf16.msra.mxu0 0
      %4428 = vmatprep.subr.bf16.mxu0 0
      %4429 = vmatpush2.bf16.msra.mxu0 0
      %4430 = vmatprep.subr.bf16.mxu0 0
      %4431 = vmatpush2.bf16.msra.mxu0 0
      %4432 = vmatprep.subr.bf16.mxu0 0
      %4433 = vmatpush2.bf16.msra.mxu0 0
      %4434 = vmatprep.subr.bf16.mxu0 0
      %4435 = vmatpush2.bf16.msra.mxu0 0
      %4436 = vmatprep.subr.bf16.mxu0 0
      %4437 = vmatpush2.bf16.msra.mxu0 0
      %4438 = vmatprep.subr.bf16.mxu0 0
      %4439 = vmatpush2.bf16.msra.mxu0 0
      %4440 = vmatprep.mubr.bf16.mxu0 0
      %4441 = vmatmul.mubr.bf16.gmra.mxu0 %v2951
      %v4442 = vpop.f32.mrf.mxu0
      %v4443 = vadd.f32 %v4282, %v4442
      %v4444 = vpop.f32.mrf.mxu0
      %v4445 = vpop.f32.mrf.mxu0
      %v4446 = vadd.f32 %v4285, %v4445
      %v4447 = vpop.f32.mrf.mxu0
      %4448 = vmatprep.mubr.bf16.mxu0 0
      %4449 = vmatmul.mubr.bf16.gmra.mxu0 %v2954
      %v4450 = vpop.f32.mrf.mxu0
      %v4451 = vadd.f32 %v4290, %v4450
      %v4452 = vpop.f32.mrf.mxu0
      %v4453 = vpop.f32.mrf.mxu0
      %v4454 = vadd.f32 %v4293, %v4453
      %v4455 = vpop.f32.mrf.mxu0
      %4456 = vmatprep.mubr.bf16.mxu0 0
      %4457 = vmatmul.mubr.bf16.gmra.mxu0 %v2957
      %v4458 = vpop.f32.mrf.mxu0
      %v4459 = vadd.f32 %v4298, %v4458
      %v4460 = vpop.f32.mrf.mxu0
      %v4461 = vpop.f32.mrf.mxu0
      %v4462 = vadd.f32 %v4301, %v4461
      %v4463 = vpop.f32.mrf.mxu0
      %4464 = vmatprep.mubr.bf16.mxu0 0
      %4465 = vmatmul.mubr.bf16.gmra.mxu0 %v2960
      %v4466 = vpop.f32.mrf.mxu0
      %v4467 = vadd.f32 %v4306, %v4466
      %v4468 = vpop.f32.mrf.mxu0
      %v4469 = vpop.f32.mrf.mxu0
      %v4470 = vadd.f32 %v4309, %v4469
      %v4471 = vpop.f32.mrf.mxu0
      %4472 = vmatprep.mubr.bf16.mxu0 0
      %4473 = vmatmul.mubr.bf16.gmra.mxu0 %v2963
      %v4474 = vpop.f32.mrf.mxu0
      %v4475 = vadd.f32 %v4314, %v4474
      %v4476 = vpop.f32.mrf.mxu0
      %v4477 = vpop.f32.mrf.mxu0
      %v4478 = vadd.f32 %v4317, %v4477
      %v4479 = vpop.f32.mrf.mxu0
      %4480 = vmatprep.mubr.bf16.mxu0 0
      %4481 = vmatmul.mubr.bf16.gmra.mxu0 %v2966
      %v4482 = vpop.f32.mrf.mxu0
      %v4483 = vadd.f32 %v4322, %v4482
      %v4484 = vpop.f32.mrf.mxu0
      %v4485 = vpop.f32.mrf.mxu0
      %v4486 = vadd.f32 %v4325, %v4485
      %v4487 = vpop.f32.mrf.mxu0
      %4488 = vmatprep.mubr.bf16.mxu0 0
      %4489 = vmatmul.mubr.bf16.gmra.mxu0 %v2969
      %v4490 = vpop.f32.mrf.mxu0
      %v4491 = vadd.f32 %v4330, %v4490
      %v4492 = vpop.f32.mrf.mxu0
      %v4493 = vpop.f32.mrf.mxu0
      %v4494 = vadd.f32 %v4333, %v4493
      %v4495 = vpop.f32.mrf.mxu0
      %4496 = vmatprep.mubr.bf16.mxu0 0
      %4497 = vmatmul.mubr.bf16.gmra.mxu0 %v2972
      %v4498 = vpop.f32.mrf.mxu0
      %v4499 = vadd.f32 %v4338, %v4498
      %v4500 = vpop.f32.mrf.mxu0
      %v4501 = vpop.f32.mrf.mxu0
      %v4502 = vadd.f32 %v4341, %v4501
      %v4503 = vpop.f32.mrf.mxu0
      %4504 = vmatprep.mubr.bf16.mxu0 0
      %4505 = vmatmul.mubr.bf16.gmra.mxu0 %v2975
      %v4506 = vpop.f32.mrf.mxu0
      %v4507 = vadd.f32 %v4346, %v4506
      %v4508 = vpop.f32.mrf.mxu0
      %v4509 = vpop.f32.mrf.mxu0
      %v4510 = vadd.f32 %v4349, %v4509
      %v4511 = vpop.f32.mrf.mxu0
      %4512 = vmatprep.mubr.bf16.mxu0 0
      %4513 = vmatmul.mubr.bf16.gmra.mxu0 %v2978
      %v4514 = vpop.f32.mrf.mxu0
      %v4515 = vadd.f32 %v4354, %v4514
      %v4516 = vpop.f32.mrf.mxu0
      %v4517 = vpop.f32.mrf.mxu0
      %v4518 = vadd.f32 %v4357, %v4517
      %v4519 = vpop.f32.mrf.mxu0
      %4520 = vmatprep.mubr.bf16.mxu0 0
      %4521 = vmatmul.mubr.bf16.gmra.mxu0 %v2981
      %v4522 = vpop.f32.mrf.mxu0
      %v4523 = vadd.f32 %v4362, %v4522
      %v4524 = vpop.f32.mrf.mxu0
      %v4525 = vpop.f32.mrf.mxu0
      %v4526 = vadd.f32 %v4365, %v4525
      %v4527 = vpop.f32.mrf.mxu0
      %4528 = vmatprep.mubr.bf16.mxu0 0
      %4529 = vmatmul.mubr.bf16.gmra.mxu0 %v2984
      %v4530 = vpop.f32.mrf.mxu0
      %v4531 = vadd.f32 %v4370, %v4530
      %v4532 = vpop.f32.mrf.mxu0
      %v4533 = vpop.f32.mrf.mxu0
      %v4534 = vadd.f32 %v4373, %v4533
      %v4535 = vpop.f32.mrf.mxu0
      %4536 = vmatprep.mubr.bf16.mxu0 0
      %4537 = vmatmul.mubr.bf16.gmra.mxu0 %v2987
      %v4538 = vpop.f32.mrf.mxu0
      %v4539 = vadd.f32 %v4378, %v4538
      %v4540 = vpop.f32.mrf.mxu0
      %v4541 = vpop.f32.mrf.mxu0
      %v4542 = vadd.f32 %v4381, %v4541
      %v4543 = vpop.f32.mrf.mxu0
      %4544 = vmatprep.mubr.bf16.mxu0 0
      %4545 = vmatmul.mubr.bf16.gmra.mxu0 %v2990
      %v4546 = vpop.f32.mrf.mxu0
      %v4547 = vadd.f32 %v4386, %v4546
      %v4548 = vpop.f32.mrf.mxu0
      %v4549 = vpop.f32.mrf.mxu0
      %v4550 = vadd.f32 %v4389, %v4549
      %v4551 = vpop.f32.mrf.mxu0
      %4552 = vmatprep.mubr.bf16.mxu0 0
      %4553 = vmatmul.mubr.bf16.gmra.mxu0 %v3071
      %v4554 = vpop.f32.mrf.mxu0
      %v4555 = vadd.f32 %v4394, %v4554
      %v4556 = vpop.f32.mrf.mxu0
      %v4557 = vpop.f32.mrf.mxu0
      %v4558 = vadd.f32 %v4397, %v4557
      %v4559 = vpop.f32.mrf.mxu0
      %4560 = vmatprep.mubr.bf16.mxu0 0
      %4561 = vmatmul.mubr.bf16.gmra.mxu0 %v762
      %v4562 = vpop.f32.mrf.mxu0
      %v4563 = vadd.f32 %v4402, %v4562
      %v4564 = vpop.f32.mrf.mxu0
      %v4565 = vpop.f32.mrf.mxu0
      %v4566 = vadd.f32 %v4405, %v4565
      %v4567 = vpop.f32.mrf.mxu0
      %4568 = vdwg.mxu0
      %v4569 = vadd.f32 %v3928, %v4443
      %v4570 = vadd.f32 %v3931, %v4446
      %v4571 = vadd.f32 %v3936, %v4451
      %v4572 = vadd.f32 %v3939, %v4454
      %v4573 = vadd.f32 %v3944, %v4459
      %v4574 = vadd.f32 %v3947, %v4462
      %v4575 = vadd.f32 %v3952, %v4467
      %v4576 = vadd.f32 %v3955, %v4470
      %v4577 = vadd.f32 %v3960, %v4475
      %v4578 = vadd.f32 %v3963, %v4478
      %v4579 = vadd.f32 %v3968, %v4483
      %v4580 = vadd.f32 %v3971, %v4486
      %v4581 = vadd.f32 %v3976, %v4491
      %v4582 = vadd.f32 %v3979, %v4494
      %v4583 = vadd.f32 %v3984, %v4499
      %v4584 = vadd.f32 %v3987, %v4502
      %v4585 = vadd.f32 %v3992, %v4507
      %v4586 = vadd.f32 %v3995, %v4510
      %v4587 = vadd.f32 %v4000, %v4515
      %v4588 = vadd.f32 %v4003, %v4518
      %v4589 = vadd.f32 %v4008, %v4523
      %v4590 = vadd.f32 %v4011, %v4526
      %v4591 = vadd.f32 %v4016, %v4531
      %v4592 = vadd.f32 %v4019, %v4534
      %v4593 = vadd.f32 %v4024, %v4539
      %v4594 = vadd.f32 %v4027, %v4542
      %v4595 = vadd.f32 %v4032, %v4547
      %v4596 = vadd.f32 %v4035, %v4550
      %v4597 = vadd.f32 %v4040, %v4555
      %v4598 = vadd.f32 %v4043, %v4558
      %v4599 = vadd.f32 %v4048, %v4563
      %v4600 = vadd.f32 %v4051, %v4566
      %v4601 = vld [vmem:[%s5] sm:$0x1]
      %v4603 = vlaneseq
      %v4604 = vshrl.u32 %v4603, 7
      %v4605 = vsub.s32 0, %v4604
      %v4606 = vrot.slane %v4601, %v4605
      %v4608 = vmul.f32 %v4569, %v4606
      %v4609 = vmul.f32 %v4570, %v4606
      %v4610 = vmul.f32 %v4571, %v4606
      %v4611 = vmul.f32 %v4572, %v4606
      %v4612 = vmul.f32 %v4573, %v4606
      %v4613 = vmul.f32 %v4574, %v4606
      %v4614 = vmul.f32 %v4575, %v4606
      %v4615 = vmul.f32 %v4576, %v4606
      %v4616 = vmul.f32 %v4577, %v4606
      %v4617 = vmul.f32 %v4578, %v4606
      %v4618 = vmul.f32 %v4579, %v4606
      %v4619 = vmul.f32 %v4580, %v4606
      %v4620 = vmul.f32 %v4581, %v4606
      %v4621 = vmul.f32 %v4582, %v4606
      %v4622 = vmul.f32 %v4583, %v4606
      %v4623 = vmul.f32 %v4584, %v4606
      %v4624 = vmul.f32 %v4585, %v4606
      %v4625 = vmul.f32 %v4586, %v4606
      %v4626 = vmul.f32 %v4587, %v4606
      %v4627 = vmul.f32 %v4588, %v4606
      %v4628 = vmul.f32 %v4589, %v4606
      %v4629 = vmul.f32 %v4590, %v4606
      %v4630 = vmul.f32 %v4591, %v4606
      %v4631 = vmul.f32 %v4592, %v4606
      %v4632 = vmul.f32 %v4593, %v4606
      %v4633 = vmul.f32 %v4594, %v4606
      %v4634 = vmul.f32 %v4595, %v4606
      %v4635 = vmul.f32 %v4596, %v4606
      %v4636 = vmul.f32 %v4597, %v4606
      %v4637 = vmul.f32 %v4598, %v4606
      %v4638 = vmul.f32 %v4599, %v4606
      %v4639 = vmul.f32 %v4600, %v4606
      %v4640 = vld [vmem:[%s6] sm:$0x1]
      %v4642 = vlaneseq
      %v4643 = vshrl.u32 %v4642, 7
      %v4644 = vsub.s32 0, %v4643
      %v4645 = vrot.slane %v4640, %v4644
      %v4647 = vadd.f32 %v4608, %v4645
      %v4648 = vadd.f32 %v4609, %v4645
      %v4649 = vadd.f32 %v4610, %v4645
      %v4650 = vadd.f32 %v4611, %v4645
      %v4651 = vadd.f32 %v4612, %v4645
      %v4652 = vadd.f32 %v4613, %v4645
      %v4653 = vadd.f32 %v4614, %v4645
      %v4654 = vadd.f32 %v4615, %v4645
      %v4655 = vadd.f32 %v4616, %v4645
      %v4656 = vadd.f32 %v4617, %v4645
      %v4657 = vadd.f32 %v4618, %v4645
      %v4658 = vadd.f32 %v4619, %v4645
      %v4659 = vadd.f32 %v4620, %v4645
      %v4660 = vadd.f32 %v4621, %v4645
      %v4661 = vadd.f32 %v4622, %v4645
      %v4662 = vadd.f32 %v4623, %v4645
      %v4663 = vadd.f32 %v4624, %v4645
      %v4664 = vadd.f32 %v4625, %v4645
      %v4665 = vadd.f32 %v4626, %v4645
      %v4666 = vadd.f32 %v4627, %v4645
      %v4667 = vadd.f32 %v4628, %v4645
      %v4668 = vadd.f32 %v4629, %v4645
      %v4669 = vadd.f32 %v4630, %v4645
      %v4670 = vadd.f32 %v4631, %v4645
      %v4671 = vadd.f32 %v4632, %v4645
      %v4672 = vadd.f32 %v4633, %v4645
      %v4673 = vadd.f32 %v4634, %v4645
      %v4674 = vadd.f32 %v4635, %v4645
      %v4675 = vadd.f32 %v4636, %v4645
      %v4676 = vadd.f32 %v4637, %v4645
      %v4677 = vadd.f32 %v4638, %v4645
      %v4678 = vadd.f32 %v4639, %v4645
      %v4679 = vadd.f32 %v4647, %v280
      %v4680 = vadd.f32 %v4648, %v281
      %v4681 = vadd.f32 %v4649, %v282
      %v4682 = vadd.f32 %v4650, %v283
      %v4683 = vadd.f32 %v4651, %v284
      %v4684 = vadd.f32 %v4652, %v285
      %v4685 = vadd.f32 %v4653, %v286
      %v4686 = vadd.f32 %v4654, %v287
      %v4687 = vadd.f32 %v4655, %v288
      %v4688 = vadd.f32 %v4656, %v289
      %v4689 = vadd.f32 %v4657, %v290
      %v4690 = vadd.f32 %v4658, %v291
      %v4691 = vadd.f32 %v4659, %v292
      %v4692 = vadd.f32 %v4660, %v293
      %v4693 = vadd.f32 %v4661, %v294
      %v4694 = vadd.f32 %v4662, %v295
      %v4695 = vadd.f32 %v4663, %v296
      %v4696 = vadd.f32 %v4664, %v297
      %v4697 = vadd.f32 %v4665, %v298
      %v4698 = vadd.f32 %v4666, %v299
      %v4699 = vadd.f32 %v4667, %v300
      %v4700 = vadd.f32 %v4668, %v301
      %v4701 = vadd.f32 %v4669, %v302
      %v4702 = vadd.f32 %v4670, %v303
      %v4703 = vadd.f32 %v4671, %v304
      %v4704 = vadd.f32 %v4672, %v305
      %v4705 = vadd.f32 %v4673, %v306
      %v4706 = vadd.f32 %v4674, %v307
      %v4707 = vadd.f32 %v4675, %v308
      %v4708 = vadd.f32 %v4676, %v309
      %v4709 = vadd.f32 %v4677, %v310
      %v4710 = vadd.f32 %v4678, %v311
      %v4711 = vmax.f32 %v4679, 0.0
      %v4712 = vmax.f32 %v4680, 0.0
      %v4713 = vmax.f32 %v4681, 0.0
      %v4714 = vmax.f32 %v4682, 0.0
      %v4715 = vmax.f32 %v4683, 0.0
      %v4716 = vmax.f32 %v4684, 0.0
      %v4717 = vmax.f32 %v4685, 0.0
      %v4718 = vmax.f32 %v4686, 0.0
      %v4719 = vmax.f32 %v4687, 0.0
      %v4720 = vmax.f32 %v4688, 0.0
      %v4721 = vmax.f32 %v4689, 0.0
      %v4722 = vmax.f32 %v4690, 0.0
      %v4723 = vmax.f32 %v4691, 0.0
      %v4724 = vmax.f32 %v4692, 0.0
      %v4725 = vmax.f32 %v4693, 0.0
      %v4726 = vmax.f32 %v4694, 0.0
      %v4727 = vmax.f32 %v4695, 0.0
      %v4728 = vmax.f32 %v4696, 0.0
      %v4729 = vmax.f32 %v4697, 0.0
      %v4730 = vmax.f32 %v4698, 0.0
      %v4731 = vmax.f32 %v4699, 0.0
      %v4732 = vmax.f32 %v4700, 0.0
      %v4733 = vmax.f32 %v4701, 0.0
      %v4734 = vmax.f32 %v4702, 0.0
      %v4735 = vmax.f32 %v4703, 0.0
      %v4736 = vmax.f32 %v4704, 0.0
      %v4737 = vmax.f32 %v4705, 0.0
      %v4738 = vmax.f32 %v4706, 0.0
      %v4739 = vmax.f32 %v4707, 0.0
      %v4740 = vmax.f32 %v4708, 0.0
      %v4741 = vmax.f32 %v4709, 0.0
      %v4742 = vmax.f32 %v4710, 0.0
      %4743 = vst [vmem:[%s278] sm:$0xff] %v4711
      %4744 = vst [vmem:[%s278 + $0x8] sm:$0xff] %v4712
      %4745 = vst [vmem:[%s278 + $0x10] sm:$0xff] %v4713
      %4746 = vst [vmem:[%s278 + $0x18] sm:$0xff] %v4714
      %4747 = vst [vmem:[%s278 + $0x20] sm:$0xff] %v4715
      %4748 = vst [vmem:[%s278 + $0x28] sm:$0xff] %v4716
      %4749 = vst [vmem:[%s278 + $0x30] sm:$0xff] %v4717
      %4750 = vst [vmem:[%s278 + $0x38] sm:$0xff] %v4718
      %4751 = vst [vmem:[%s278 + $0x40] sm:$0xff] %v4719
      %4752 = vst [vmem:[%s278 + $0x48] sm:$0xff] %v4720
      %4753 = vst [vmem:[%s278 + $0x50] sm:$0xff] %v4721
      %4754 = vst [vmem:[%s278 + $0x58] sm:$0xff] %v4722
      %4755 = vst [vmem:[%s278 + $0x60] sm:$0xff] %v4723
      %4756 = vst [vmem:[%s278 + $0x68] sm:$0xff] %v4724
      %4757 = vst [vmem:[%s278 + $0x70] sm:$0xff] %v4725
      %4758 = vst [vmem:[%s278 + $0x78] sm:$0xff] %v4726
      %4759 = vst [vmem:[%s278 + $0x80] sm:$0xff] %v4727
      %4760 = vst [vmem:[%s278 + $0x88] sm:$0xff] %v4728
      %4761 = vst [vmem:[%s278 + $0x90] sm:$0xff] %v4729
      %4762 = vst [vmem:[%s278 + $0x98] sm:$0xff] %v4730
      %4763 = vst [vmem:[%s278 + $0xa0] sm:$0xff] %v4731
      %4764 = vst [vmem:[%s278 + $0xa8] sm:$0xff] %v4732
      %4765 = vst [vmem:[%s278 + $0xb0] sm:$0xff] %v4733
      %4766 = vst [vmem:[%s278 + $0xb8] sm:$0xff] %v4734
      %4767 = vst [vmem:[%s278 + $0xc0] sm:$0xff] %v4735
      %4768 = vst [vmem:[%s278 + $0xc8] sm:$0xff] %v4736
      %4769 = vst [vmem:[%s278 + $0xd0] sm:$0xff] %v4737
      %4770 = vst [vmem:[%s278 + $0xd8] sm:$0xff] %v4738
      %4771 = vst [vmem:[%s278 + $0xe0] sm:$0xff] %v4739
      %4772 = vst [vmem:[%s278 + $0xe8] sm:$0xff] %v4740
      %4773 = vst [vmem:[%s278 + $0xf0] sm:$0xff] %v4741
      %4774 = vst [vmem:[%s278 + $0xf8] sm:$0xff] %v4742
      %p4775 = scmp.lt.s32.totalorder %s18, 1
      %s4776 = scalar_select %p4775, %s18, 1
      %s4777 = smul.addr %s4776, 32
      %s4778 = smul.addr %s4777, 8
      %s4779 = scalar_lea.vmem %s7, %s4778
      // Predicated region
      $region49: #{basic_block_forward.1} parent=47 // pred_check
        %p4780 = pneg %p188
      $region50: #{basic_block_forward.1} parent=47 // pred_check_branch
        %4782 = sbr.rel (%p4780) target = $region52
      $region51: #{basic_block_forward.1} parent=47 // pred_region
        _
      $region52: #{basic_block_forward.1} parent=47 // pred_fallthru
        _
    $region48: #{basic_block_forward.1} parent=5 // pred_fallthru
      _
    %p4783 = scmp.le.s32.totalorder 2, %s13
    // Predicated region
    $region53: #{basic_block_forward.1} parent=5 // pred_check
      %p4784 = pneg %p4783
    $region54: #{basic_block_forward.1} parent=5 // pred_check_branch
      %4786 = sbr.rel (%p4784) target = $region56
    $region55: #{basic_block_forward.1} parent=5 // pred_region
      %s4787 = ssub.s32 %s13, 2
      // Predicated region
      $region57: #{basic_block_forward.1} parent=55 // pred_check
        %p4788 = pneg %p194
      $region58: #{basic_block_forward.1} parent=55 // pred_check_branch
        %4790 = sbr.rel (%p4788) target = $region60
      $region59: #{basic_block_forward.1} parent=55 // pred_region
        %p4791 = scmp.lt.s32.totalorder %s19, 1
        %s4792 = scalar_select %p4791, %s19, 1
        %s4793 = smul.addr %s4792, 32
        %s4794 = smul.addr %s4793, 8
        %s4795 = scalar_lea.vmem %s7, %s4794
      $region60: #{basic_block_forward.1} parent=55 // pred_fallthru
        _
    $region56: #{basic_block_forward.1} parent=5 // pred_fallthru
      _
  $region6: #{basic_block_forward.1} parent=0 // loop_footer
    %s17 = sadd.s32 1, %s13
  $region7: #{basic_block_forward.1} parent=0 // loop_footer_branch
    %12 = sbr.rel target = $region3
  $region8: #{basic_block_forward.1} parent=0 // loop_exit
    _

</llo_original>
